<compile_context>
chip_gen: v6e
topology: v6e:2x2x1
jax: 0.10.0
libtpu: 0.0.40
codegen_flags: <defaults>
</compile_context>

<pallas_src>
import functools

import jax
import jax.numpy as jnp
import numpy as np
from jax.experimental import pallas as pl
from jax.experimental.pallas import tpu as pltpu

DILATIONS = (1, 2, 4, 8)
MAXPAD = 8          # largest dilation/padding among the four branches
BN_EPS = 1e-5


def _dpcb_pass1_kernel(x_up_ref, x_c_ref, x_dn_ref, wdt_ref, wdw_ref, wft_ref,
                       pre_ref, stats_ref, ypad_ref, *, use_roll):
    """Per-(image, row-tile): 1x1 down-proj, 4 dilated depthwise 3x3 branches,
    grouped 1x1 fuse (accumulated straight into pre_ref), BN partial stats.

    x_up_ref  : [1, Cin, MAXPAD, W]   rows just above the tile (unused at i==0)
    x_c_ref   : [1, Cin, TH, W]       tile rows
    x_dn_ref  : [1, Cin, MAXPAD, W]   rows just below the tile (unused at last)
    wdt_ref   : SMEM [Cp*Cin]         conv1x1_down weights, [c*Cin + ci]
    wdw_ref   : SMEM [4*9*Cp]         depthwise weights, [(b*9+ky*3+kx)*Cp + c]
    wft_ref   : SMEM [Cout*Cp]        grouped fuse weights, [oc*Cp + c]
    pre_ref   : [1, Cout, TH, W]      pre-BN output tile
    stats_ref : [1, 1, 2, Cout]       per-tile (sum, sum-of-squares) per channel
    ypad_ref  : VMEM [Cp, TH+16, W(+16)] down-projected activations + row halo
    """
    i = pl.program_id(1)
    n_ht = pl.num_programs(1)

    Cin = x_c_ref.shape[1]
    TH = x_c_ref.shape[2]
    W = x_c_ref.shape[3]
    Cp = ypad_ref.shape[0]
    Cout = pre_ref.shape[1]
    pad_w = 0 if use_roll else MAXPAD
    f32 = jnp.float32

    if not use_roll:
        # "Same"-padding halo columns for the slice-fallback path; rows are
        # fully rewritten every step, so only these two strips are memset.
        zcols = jnp.zeros((Cp, TH + 2 * MAXPAD, MAXPAD), f32)
        ypad_ref[:, :, 0:MAXPAD] = zcols
        ypad_ref[:, :, MAXPAD + W:] = zcols

    # ---- conv1x1_down as VPU broadcast-MACs (Cin, Cp are small) ------------
    # TODO(synk): for Cin/Cp >= ~16 an MXU matmul over a [TH*W, C] view would
    # be preferable to scalar broadcast-MACs.
    for c in range(Cp):
        acc = jnp.zeros((TH, W), f32)
        for ci in range(Cin):
            acc = acc + wdt_ref[c * Cin + ci] * x_c_ref[0, ci, :, :]
        ypad_ref[c, MAXPAD:MAXPAD + TH, pad_w:pad_w + W] = acc

    # ---- halo rows: project only where they exist, zero elsewhere ----------
    zrows = jnp.zeros((Cp, MAXPAD, W), f32)

    @pl.when(i == 0)
    def _():
        ypad_ref[:, 0:MAXPAD, pad_w:pad_w + W] = zrows

    @pl.when(i > 0)
    def _():
        for c in range(Cp):
            acc = jnp.zeros((MAXPAD, W), f32)
            for ci in range(Cin):
                acc = acc + wdt_ref[c * Cin + ci] * x_up_ref[0, ci, :, :]
            ypad_ref[c, 0:MAXPAD, pad_w:pad_w + W] = acc

    @pl.when(i == n_ht - 1)
    def _():
        ypad_ref[:, MAXPAD + TH:, pad_w:pad_w + W] = zrows

    @pl.when(i < n_ht - 1)
    def _():
        for c in range(Cp):
            acc = jnp.zeros((MAXPAD, W), f32)
            for ci in range(Cin):
                acc = acc + wdt_ref[c * Cin + ci] * x_dn_ref[0, ci, :, :]
            ypad_ref[c, MAXPAD + TH:, pad_w:pad_w + W] = acc

    # ---- 4 dilated depthwise branches, fused straight into pre_ref ---------
    if use_roll:
        lane = jax.lax.broadcasted_iota(jnp.int32, (TH, W), 1)   # hoisted

    for b, d in enumerate(DILATIONS):
        if use_roll:
            keep_l = lane >= d           # zero-pad mask for the x-d tap
            keep_r = lane < (W - d)      # zero-pad mask for the x+d tap
        for c in range(Cp):
            acc = jnp.zeros((TH, W), f32)
            for ky in range(3):
                h0 = MAXPAD + (ky - 1) * d
                if use_roll:
                    # one aligned full-width load; horizontal taps via XLU roll
                    row = ypad_ref[c, h0:h0 + TH, :]
                    w_l = wdw_ref[(b * 9 + ky * 3 + 0) * Cp + c]
                    w_c = wdw_ref[(b * 9 + ky * 3 + 1) * Cp + c]
                    w_r = wdw_ref[(b * 9 + ky * 3 + 2) * Cp + c]
                    left = jnp.where(keep_l, pltpu.roll(row, d, 1), 0.0)
                    right = jnp.where(keep_r, pltpu.roll(row, W - d, 1), 0.0)
                    acc = acc + w_l * left + w_c * row + w_r * right
                else:
                    for kx in range(3):
                        w0 = MAXPAD + (kx - 1) * d
                        wt = wdw_ref[(b * 9 + ky * 3 + kx) * Cp + c]
                        acc = acc + wt * ypad_ref[c, h0:h0 + TH, w0:w0 + W]
            # conv1x1_fuse (group b): accumulate into pre_ref so only one
            # depthwise plane is live at a time (no Cp-plane vreg spills).
            for o in range(Cp):
                oc = b * Cp + o
                contrib = wft_ref[oc * Cp + c] * acc
                if c == 0:
                    pre_ref[0, oc, :, :] = contrib
                else:
                    pre_ref[0, oc, :, :] = pre_ref[0, oc, :, :] + contrib

    # ---- per-tile BN partials: batched (Cout,) reductions, two stores ------
    # TODO(synk): E[x^2]-mean^2 in f32 can cancel when |mean| >> std; a
    # Welford-style per-tile (mean, M2) combine would be more robust.
    blk = pre_ref[0, :, :, :]
    s = jnp.sum(jnp.sum(blk, axis=2), axis=1)           # (Cout,)
    ss = jnp.sum(jnp.sum(blk * blk, axis=2), axis=1)    # (Cout,)
    stats_ref[0, 0, 0:1, :] = s.reshape(1, Cout)
    stats_ref[0, 0, 1:2, :] = ss.reshape(1, Cout)


def _dpcb_pass2_kernel(pre_ref, scale_ref, bias_ref, alpha_ref, o_ref):
    """BatchNorm affine (precomputed global scale/bias) + PReLU, lane-dense."""
    Cout = pre_ref.shape[1]
    for c in range(Cout):
        z = pre_ref[0, c:c + 1, :] * scale_ref[c] + bias_ref[c]
        o_ref[0, c:c + 1, :] = jnp.where(z >= 0, z, alpha_ref[c] * z)


def _padded_vmem_bytes(shape, itemsize=4):
    """Physical VMEM bytes of an f32 buffer under (8, 128) tiling."""
    if len(shape) < 2:
        return max(int(np.prod(shape)) * itemsize, 512)
    lead = 1
    for s in shape[:-2]:
        lead *= int(s)
    sub = -(-int(shape[-2]) // 8) * 8
    lane = -(-int(shape[-1]) // 128) * 128
    return lead * sub * lane * itemsize


def _vmem_budget_bytes():
    """Per-core VMEM budget: ~3/4 of physical (96 MiB v5e/v6e, 48 MiB v7x)."""
    cap = 64 << 20          # conservative fallback (v7x per-TC physical)
    try:
        cap = int(pltpu.get_tpu_info().vmem_capacity_bytes)
    except Exception:
        pass
    return min((cap * 3) // 4, 100 << 20)


def _pick_lane_tile(length, cout, budget_bytes=4 << 20):
    """Largest block of the folded H*W axis (multiple of 128 when possible)."""
    limit = max(128, budget_bytes // (cout * 4))
    if length <= limit:
        return length
    t = (limit // 128) * 128
    while t >= 128:
        if length % t == 0:
            return t
        t -= 128
    for t in range(min(length, limit), 0, -1):
        if length % t == 0:
            return t
    return length


@functools.partial(jax.jit, static_argnames=("row_tile",))
def dilated_parallel_conv_block(x, w_down, w_dw, w_fuse, gamma, beta, alpha,
                                *, row_tile=None):
    """Forward pass of DilatedParallelConvBlock (stride=1, training-mode BN).

    x      : [N, Cin, H, W]     (PyTorch NCHW layout)
    w_down : [Cp, Cin, 1, 1]    conv1x1_down.weight
    w_dw   : [4, Cp, 1, 3, 3]   conv1..conv4 depthwise weights (dilation 1/2/4/8)
    w_fuse : [Cout, Cp, 1, 1]   conv1x1_fuse.weight (groups=4)
    gamma, beta, alpha : [Cout] BN affine + PReLU slopes
    returns: [N, Cout, H, W]
    """
    N, Cin, H, W = x.shape
    Cp = w_down.shape[0]
    Cout = 4 * Cp
    assert w_fuse.shape[0] == Cout

    if H % MAXPAD != 0:
        # TODO(synk): general H needs padded row tiles; MiniSeg uses H % 8 == 0.
        raise NotImplementedError("H must be a multiple of 8")

    use_roll = (W % 128 == 0)           # lane-dense: roll+mask horizontal taps
    Wp = W if use_roll else W + 2 * MAXPAD
    budget = _vmem_budget_bytes()

    def est_vmem(th):
        blk = (_padded_vmem_bytes((1, Cin, th, W))
               + 2 * _padded_vmem_bytes((1, Cin, MAXPAD, W))
               + _padded_vmem_bytes((1, Cout, th, W))
               + _padded_vmem_bytes((1, 1, 2, Cout)))
        scratch = _padded_vmem_bytes((Cp, th + 2 * MAXPAD, Wp))
        temps = (Cout + 8) * _padded_vmem_bytes((th, W))
        return 2 * blk + scratch + temps + (2 << 20)

    if row_tile is None:
        cands = [t for t in range(min(H, 256), 7, -8) if H % t == 0]
        TH = cands[-1] if cands else MAXPAD
        for t in cands:
            if est_vmem(t) <= budget:
                TH = t
                break
        # keep enough grid steps so both v7x TensorCores stay busy
        while (TH > MAXPAD and N * (H // TH) < 4
               and H % (TH // 2) == 0 and (TH // 2) % MAXPAD == 0):
            TH //= 2
    else:
        TH = int(row_tile)
    assert H % TH == 0 and TH % MAXPAD == 0
    n_ht = H // TH
    n_hb = H // MAXPAD        # number of 8-row halo blocks along H
    r = TH // MAXPAD

    # ---- weights flattened for scalar SMEM access ----
    wdt = w_down[:, :, 0, 0].reshape(-1)                                # [Cp*Cin]
    wdw = jnp.transpose(w_dw[:, :, 0, :, :], (0, 2, 3, 1)).reshape(-1)  # [4*9*Cp]
    wft = w_fuse[:, :, 0, 0].reshape(-1)                                # [Cout*Cp]

    smem_spec = pl.BlockSpec(memory_space=pltpu.MemorySpace.SMEM)

    vmem1 = int(max(16 << 20, min(budget, est_vmem(TH))))
    cparams1 = pltpu.CompilerParams(
        dimension_semantics=("parallel", "parallel"),
        vmem_limit_bytes=vmem1)

    # ---- pass 1: convs + per-tile BN partial statistics --------------------
    # TODO(synk): the two MAXPAD-row halo streams re-read/re-project boundary
    # rows; a single Element-indexed TH+16-row window would fetch them once.
    pre, tile_stats = pl.pallas_call(
        functools.partial(_dpcb_pass1_kernel, use_roll=use_roll),
        grid=(N, n_ht),
        in_specs=[
            # 8 rows just above the tile (index wraps; gated in-kernel at i==0)
            pl.BlockSpec((1, Cin, MAXPAD, W),
                         lambda n, i: (n, 0, (i * r + n_hb - 1) % n_hb, 0)),
            # the tile itself
            pl.BlockSpec((1, Cin, TH, W), lambda n, i: (n, 0, i, 0)),
            # 8 rows just below the tile (index wraps; gated at the last tile)
            pl.BlockSpec((1, Cin, MAXPAD, W),
                         lambda n, i: (n, 0, ((i + 1) * r) % n_hb, 0)),
            smem_spec, smem_spec, smem_spec,
        ],
        out_specs=(
            pl.BlockSpec((1, Cout, TH, W), lambda n, i: (n, 0, i, 0)),
            pl.BlockSpec((1, 1, 2, Cout), lambda n, i: (n, i, 0, 0)),
        ),
        out_shape=(
            jax.ShapeDtypeStruct((N, Cout, H, W), jnp.float32),
            jax.ShapeDtypeStruct((N, n_ht, 2, Cout), jnp.float32),
        ),
        scratch_shapes=[pltpu.VMEM((Cp, TH + 2 * MAXPAD, Wp), jnp.float32)],
        compiler_params=cparams1,
    )(x, x, x, wdt, wdw, wft)

    # ---- batch-global BatchNorm statistics (training mode) -----------------
    cnt = float(N * H * W)
    tot = jnp.sum(tile_stats, axis=(0, 1))          # [2, Cout]
    mean = tot[0] / cnt
    var = jnp.maximum(tot[1] / cnt - mean * mean, 0.0)
    scale = gamma * jax.lax.rsqrt(var + BN_EPS)
    bias = beta - mean * scale

    # ---- pass 2: BN affine + PReLU on a lane-dense view, aliased in-place ---
    L = H * W
    TL = _pick_lane_tile(L, Cout)
    pre3 = pre.reshape(N, Cout, L)
    vmem2 = int(max(16 << 20,
                    min(budget,
                        4 * _padded_vmem_bytes((1, Cout, TL)) + (2 << 20))))
    cparams2 = pltpu.CompilerParams(
        dimension_semantics=("parallel", "parallel"),
        vmem_limit_bytes=vmem2)
    out3 = pl.pallas_call(
        _dpcb_pass2_kernel,
        grid=(N, L // TL),
        in_specs=[
            pl.BlockSpec((1, Cout, TL), lambda n, j: (n, 0, j)),
            smem_spec, smem_spec, smem_spec,
        ],
        out_specs=pl.BlockSpec((1, Cout, TL), lambda n, j: (n, 0, j)),
        out_shape=jax.ShapeDtypeStruct((N, Cout, L), jnp.float32),
        input_output_aliases={0: 0},
        compiler_params=cparams2,
    )(pre3, scale, bias, alpha)
    return out3.reshape(N, Cout, H, W)


def reference(x, w_down, w_dw, w_fuse, gamma, beta, alpha):
    """Pure-JAX NCHW reference mirroring the PyTorch forward (training-mode BN)."""
    Cp = w_down.shape[0]
    dn = ('NCHW', 'OIHW', 'NCHW')
    prec = jax.lax.Precision.HIGHEST
    y = jax.lax.conv_general_dilated(x, w_down, (1, 1), 'VALID',
                                     dimension_numbers=dn, precision=prec)
    branches = []
    for b, dil in enumerate(DILATIONS):
        branches.append(jax.lax.conv_general_dilated(
            y, w_dw[b], (1, 1), [(dil, dil), (dil, dil)],
            rhs_dilation=(dil, dil), dimension_numbers=dn,
            feature_group_count=Cp, precision=prec))
    cat = jnp.concatenate(branches, axis=1)
    pre = jax.lax.conv_general_dilated(cat, w_fuse, (1, 1), 'VALID',
                                       dimension_numbers=dn,
                                       feature_group_count=4, precision=prec)
    mean = pre.mean(axis=(0, 2, 3), keepdims=True)
    var = ((pre - mean) ** 2).mean(axis=(0, 2, 3), keepdims=True)
    z = (pre - mean) * jax.lax.rsqrt(var + BN_EPS)
    z = z * gamma.reshape(1, -1, 1, 1) + beta.reshape(1, -1, 1, 1)
    return jnp.where(z >= 0, z, alpha.reshape(1, -1, 1, 1) * z)


if __name__ == "__main__":
    # Module-consistent small shapes: in_planes=4, out_planes=8 (%4==0),
    # stride=1, batch=2.  W=128 exercises the lane-dense roll path, W=16 the
    # slice-fallback path; row_tile=16 covers the single-tile (no-halo) path.
    N, Cin, Cout = 2, 4, 8
    Cp = Cout // 4

    key = jax.random.PRNGKey(0)
    kx, k1, k2, k3 = jax.random.split(key, 4)

    # PyTorch-shaped parameters (BN gamma=1/beta=0, PReLU alpha=0.25 defaults).
    w_down = 0.5 * jax.random.normal(k1, (Cp, Cin, 1, 1), jnp.float32)
    w_dw = 0.3 * jax.random.normal(k2, (4, Cp, 1, 3, 3), jnp.float32)
    w_fuse = 0.5 * jax.random.normal(k3, (Cout, Cp, 1, 1), jnp.float32)
    gamma = jnp.ones((Cout,), jnp.float32)
    beta = jnp.zeros((Cout,), jnp.float32)
    alpha = jnp.full((Cout,), 0.25, jnp.float32)

    for (H, W, rt) in ((16, 128, None), (16, 128, 16), (16, 16, None)):
        x = jax.random.normal(kx, (N, Cin, H, W), jnp.float32)
        ref = jax.block_until_ready(
            reference(x, w_down, w_dw, w_fuse, gamma, beta, alpha))
        out = jax.block_until_ready(
            dilated_parallel_conv_block(x, w_down, w_dw, w_fuse,
                                        gamma, beta, alpha, row_tile=rt))
        np.testing.assert_allclose(np.asarray(out), np.asarray(ref),
                                   rtol=1e-3, atol=1e-3)

    print("KERNEL_OK")
</pallas_src>

<mosaic_0001>
module attributes {stable_mosaic.version = 11 : i64} {
  func.func @_dpcb_pass2_kernel(%arg0: i32, %arg1: i32, %arg2: memref<1x8x2048xf32, #tpu.memory_space<vmem>>, %arg3: memref<8xf32, #tpu.memory_space<smem>>, %arg4: memref<8xf32, #tpu.memory_space<smem>>, %arg5: memref<8xf32, #tpu.memory_space<smem>>, %arg6: memref<1x8x2048xf32, #tpu.memory_space<vmem>>) attributes {dimension_semantics = [#tpu.dimension_semantics<parallel>, #tpu.dimension_semantics<parallel>], iteration_bounds = array<i64: 2, 1>, scalar_prefetch = 0 : i64, scratch_operands = 0 : i64, tpu.core_type = #tpu.core_type<tc>, window_params = [{transform_indices = @transform_0, window_bounds = array<i64: 1, 8, 2048>}, {transform_indices = @transform_1, window_bounds = array<i64: 8>}, {transform_indices = @transform_2, window_bounds = array<i64: 8>}, {transform_indices = @transform_3, window_bounds = array<i64: 8>}, {transform_indices = @transform_4, window_bounds = array<i64: 1, 8, 2048>}]} {
    %c0 = arith.constant 0 : index
    %c0_0 = arith.constant 0 : index
    %c0_1 = arith.constant 0 : index
    %0 = vector.load %arg2[%c0, %c0_0, %c0_1] : memref<1x8x2048xf32, #tpu.memory_space<vmem>>, vector<1x1x2048xf32>
    %1 = vector.shape_cast %0 : vector<1x1x2048xf32> to vector<1x2048xf32>
    %c0_2 = arith.constant 0 : index
    %2 = memref.load %arg3[%c0_2] : memref<8xf32, #tpu.memory_space<smem>>
    %3 = vector.broadcast %2 : f32 to vector<1x2048xf32>
    %4 = arith.mulf %1, %3 : vector<1x2048xf32>
    %c0_3 = arith.constant 0 : index
    %5 = memref.load %arg4[%c0_3] : memref<8xf32, #tpu.memory_space<smem>>
    %6 = vector.broadcast %5 : f32 to vector<1x2048xf32>
    %7 = arith.addf %4, %6 : vector<1x2048xf32>
    %cst = arith.constant 0.000000e+00 : f32
    %8 = vector.broadcast %cst : f32 to vector<1x2048xf32>
    %9 = arith.cmpf oge, %7, %8 : vector<1x2048xf32>
    %c0_4 = arith.constant 0 : index
    %10 = memref.load %arg5[%c0_4] : memref<8xf32, #tpu.memory_space<smem>>
    %11 = vector.broadcast %10 : f32 to vector<1x2048xf32>
    %12 = arith.mulf %11, %7 : vector<1x2048xf32>
    %13 = arith.select %9, %7, %12 : vector<1x2048xi1>, vector<1x2048xf32>
    %c0_5 = arith.constant 0 : index
    %c0_6 = arith.constant 0 : index
    %c0_7 = arith.constant 0 : index
    %14 = vector.load %arg6[%c0_5, %c0_6, %c0_7] : memref<1x8x2048xf32, #tpu.memory_space<vmem>>, vector<1x1x2048xf32>
    %15 = vector.shape_cast %14 : vector<1x1x2048xf32> to vector<1x2048xf32>
    %16 = vector.shape_cast %13 : vector<1x2048xf32> to vector<1x1x2048xf32>
    tpu.vector_store %arg6[%c0_5, %c0_6, %c0_7], %16 {strides = array<i32>} : memref<1x8x2048xf32, #tpu.memory_space<vmem>>, vector<1x1x2048xf32>,
    %c0_8 = arith.constant 0 : index
    %c1 = arith.constant 1 : index
    %c0_9 = arith.constant 0 : index
    %17 = vector.load %arg2[%c0_8, %c1, %c0_9] : memref<1x8x2048xf32, #tpu.memory_space<vmem>>, vector<1x1x2048xf32>
    %18 = vector.shape_cast %17 : vector<1x1x2048xf32> to vector<1x2048xf32>
    %c1_10 = arith.constant 1 : index
    %19 = memref.load %arg3[%c1_10] : memref<8xf32, #tpu.memory_space<smem>>
    %20 = vector.broadcast %19 : f32 to vector<1x2048xf32>
    %21 = arith.mulf %18, %20 : vector<1x2048xf32>
    %c1_11 = arith.constant 1 : index
    %22 = memref.load %arg4[%c1_11] : memref<8xf32, #tpu.memory_space<smem>>
    %23 = vector.broadcast %22 : f32 to vector<1x2048xf32>
    %24 = arith.addf %21, %23 : vector<1x2048xf32>
    %cst_12 = arith.constant 0.000000e+00 : f32
    %25 = vector.broadcast %cst_12 : f32 to vector<1x2048xf32>
    %26 = arith.cmpf oge, %24, %25 : vector<1x2048xf32>
    %c1_13 = arith.constant 1 : index
    %27 = memref.load %arg5[%c1_13] : memref<8xf32, #tpu.memory_space<smem>>
    %28 = vector.broadcast %27 : f32 to vector<1x2048xf32>
    %29 = arith.mulf %28, %24 : vector<1x2048xf32>
    %30 = arith.select %26, %24, %29 : vector<1x2048xi1>, vector<1x2048xf32>
    %c0_14 = arith.constant 0 : index
    %c1_15 = arith.constant 1 : index
    %c0_16 = arith.constant 0 : index
    %31 = vector.load %arg6[%c0_14, %c1_15, %c0_16] : memref<1x8x2048xf32, #tpu.memory_space<vmem>>, vector<1x1x2048xf32>
    %32 = vector.shape_cast %31 : vector<1x1x2048xf32> to vector<1x2048xf32>
    %33 = vector.shape_cast %30 : vector<1x2048xf32> to vector<1x1x2048xf32>
    tpu.vector_store %arg6[%c0_14, %c1_15, %c0_16], %33 {strides = array<i32>} : memref<1x8x2048xf32, #tpu.memory_space<vmem>>, vector<1x1x2048xf32>,
    %c0_17 = arith.constant 0 : index
    %c2 = arith.constant 2 : index
    %c0_18 = arith.constant 0 : index
    %34 = vector.load %arg2[%c0_17, %c2, %c0_18] : memref<1x8x2048xf32, #tpu.memory_space<vmem>>, vector<1x1x2048xf32>
    %35 = vector.shape_cast %34 : vector<1x1x2048xf32> to vector<1x2048xf32>
    %c2_19 = arith.constant 2 : index
    %36 = memref.load %arg3[%c2_19] : memref<8xf32, #tpu.memory_space<smem>>
    %37 = vector.broadcast %36 : f32 to vector<1x2048xf32>
    %38 = arith.mulf %35, %37 : vector<1x2048xf32>
    %c2_20 = arith.constant 2 : index
    %39 = memref.load %arg4[%c2_20] : memref<8xf32, #tpu.memory_space<smem>>
    %40 = vector.broadcast %39 : f32 to vector<1x2048xf32>
    %41 = arith.addf %38, %40 : vector<1x2048xf32>
    %cst_21 = arith.constant 0.000000e+00 : f32
    %42 = vector.broadcast %cst_21 : f32 to vector<1x2048xf32>
    %43 = arith.cmpf oge, %41, %42 : vector<1x2048xf32>
    %c2_22 = arith.constant 2 : index
    %44 = memref.load %arg5[%c2_22] : memref<8xf32, #tpu.memory_space<smem>>
    %45 = vector.broadcast %44 : f32 to vector<1x2048xf32>
    %46 = arith.mulf %45, %41 : vector<1x2048xf32>
    %47 = arith.select %43, %41, %46 : vector<1x2048xi1>, vector<1x2048xf32>
    %c0_23 = arith.constant 0 : index
    %c2_24 = arith.constant 2 : index
    %c0_25 = arith.constant 0 : index
    %48 = vector.load %arg6[%c0_23, %c2_24, %c0_25] : memref<1x8x2048xf32, #tpu.memory_space<vmem>>, vector<1x1x2048xf32>
    %49 = vector.shape_cast %48 : vector<1x1x2048xf32> to vector<1x2048xf32>
    %50 = vector.shape_cast %47 : vector<1x2048xf32> to vector<1x1x2048xf32>
    tpu.vector_store %arg6[%c0_23, %c2_24, %c0_25], %50 {strides = array<i32>} : memref<1x8x2048xf32, #tpu.memory_space<vmem>>, vector<1x1x2048xf32>,
    %c0_26 = arith.constant 0 : index
    %c3 = arith.constant 3 : index
    %c0_27 = arith.constant 0 : index
    %51 = vector.load %arg2[%c0_26, %c3, %c0_27] : memref<1x8x2048xf32, #tpu.memory_space<vmem>>, vector<1x1x2048xf32>
    %52 = vector.shape_cast %51 : vector<1x1x2048xf32> to vector<1x2048xf32>
    %c3_28 = arith.constant 3 : index
    %53 = memref.load %arg3[%c3_28] : memref<8xf32, #tpu.memory_space<smem>>
    %54 = vector.broadcast %53 : f32 to vector<1x2048xf32>
    %55 = arith.mulf %52, %54 : vector<1x2048xf32>
    %c3_29 = arith.constant 3 : index
    %56 = memref.load %arg4[%c3_29] : memref<8xf32, #tpu.memory_space<smem>>
    %57 = vector.broadcast %56 : f32 to vector<1x2048xf32>
    %58 = arith.addf %55, %57 : vector<1x2048xf32>
    %cst_30 = arith.constant 0.000000e+00 : f32
    %59 = vector.broadcast %cst_30 : f32 to vector<1x2048xf32>
    %60 = arith.cmpf oge, %58, %59 : vector<1x2048xf32>
    %c3_31 = arith.constant 3 : index
    %61 = memref.load %arg5[%c3_31] : memref<8xf32, #tpu.memory_space<smem>>
    %62 = vector.broadcast %61 : f32 to vector<1x2048xf32>
    %63 = arith.mulf %62, %58 : vector<1x2048xf32>
    %64 = arith.select %60, %58, %63 : vector<1x2048xi1>, vector<1x2048xf32>
    %c0_32 = arith.constant 0 : index
    %c3_33 = arith.constant 3 : index
    %c0_34 = arith.constant 0 : index
    %65 = vector.load %arg6[%c0_32, %c3_33, %c0_34] : memref<1x8x2048xf32, #tpu.memory_space<vmem>>, vector<1x1x2048xf32>
    %66 = vector.shape_cast %65 : vector<1x1x2048xf32> to vector<1x2048xf32>
    %67 = vector.shape_cast %64 : vector<1x2048xf32> to vector<1x1x2048xf32>
    tpu.vector_store %arg6[%c0_32, %c3_33, %c0_34], %67 {strides = array<i32>} : memref<1x8x2048xf32, #tpu.memory_space<vmem>>, vector<1x1x2048xf32>,
    %c0_35 = arith.constant 0 : index
    %c4 = arith.constant 4 : index
    %c0_36 = arith.constant 0 : index
    %68 = vector.load %arg2[%c0_35, %c4, %c0_36] : memref<1x8x2048xf32, #tpu.memory_space<vmem>>, vector<1x1x2048xf32>
    %69 = vector.shape_cast %68 : vector<1x1x2048xf32> to vector<1x2048xf32>
    %c4_37 = arith.constant 4 : index
    %70 = memref.load %arg3[%c4_37] : memref<8xf32, #tpu.memory_space<smem>>
    %71 = vector.broadcast %70 : f32 to vector<1x2048xf32>
    %72 = arith.mulf %69, %71 : vector<1x2048xf32>
    %c4_38 = arith.constant 4 : index
    %73 = memref.load %arg4[%c4_38] : memref<8xf32, #tpu.memory_space<smem>>
    %74 = vector.broadcast %73 : f32 to vector<1x2048xf32>
    %75 = arith.addf %72, %74 : vector<1x2048xf32>
    %cst_39 = arith.constant 0.000000e+00 : f32
    %76 = vector.broadcast %cst_39 : f32 to vector<1x2048xf32>
    %77 = arith.cmpf oge, %75, %76 : vector<1x2048xf32>
    %c4_40 = arith.constant 4 : index
    %78 = memref.load %arg5[%c4_40] : memref<8xf32, #tpu.memory_space<smem>>
    %79 = vector.broadcast %78 : f32 to vector<1x2048xf32>
    %80 = arith.mulf %79, %75 : vector<1x2048xf32>
    %81 = arith.select %77, %75, %80 : vector<1x2048xi1>, vector<1x2048xf32>
    %c0_41 = arith.constant 0 : index
    %c4_42 = arith.constant 4 : index
    %c0_43 = arith.constant 0 : index
    %82 = vector.load %arg6[%c0_41, %c4_42, %c0_43] : memref<1x8x2048xf32, #tpu.memory_space<vmem>>, vector<1x1x2048xf32>
    %83 = vector.shape_cast %82 : vector<1x1x2048xf32> to vector<1x2048xf32>
    %84 = vector.shape_cast %81 : vector<1x2048xf32> to vector<1x1x2048xf32>
    tpu.vector_store %arg6[%c0_41, %c4_42, %c0_43], %84 {strides = array<i32>} : memref<1x8x2048xf32, #tpu.memory_space<vmem>>, vector<1x1x2048xf32>,
    %c0_44 = arith.constant 0 : index
    %c5 = arith.constant 5 : index
    %c0_45 = arith.constant 0 : index
    %85 = vector.load %arg2[%c0_44, %c5, %c0_45] : memref<1x8x2048xf32, #tpu.memory_space<vmem>>, vector<1x1x2048xf32>
    %86 = vector.shape_cast %85 : vector<1x1x2048xf32> to vector<1x2048xf32>
    %c5_46 = arith.constant 5 : index
    %87 = memref.load %arg3[%c5_46] : memref<8xf32, #tpu.memory_space<smem>>
    %88 = vector.broadcast %87 : f32 to vector<1x2048xf32>
    %89 = arith.mulf %86, %88 : vector<1x2048xf32>
    %c5_47 = arith.constant 5 : index
    %90 = memref.load %arg4[%c5_47] : memref<8xf32, #tpu.memory_space<smem>>
    %91 = vector.broadcast %90 : f32 to vector<1x2048xf32>
    %92 = arith.addf %89, %91 : vector<1x2048xf32>
    %cst_48 = arith.constant 0.000000e+00 : f32
    %93 = vector.broadcast %cst_48 : f32 to vector<1x2048xf32>
    %94 = arith.cmpf oge, %92, %93 : vector<1x2048xf32>
    %c5_49 = arith.constant 5 : index
    %95 = memref.load %arg5[%c5_49] : memref<8xf32, #tpu.memory_space<smem>>
    %96 = vector.broadcast %95 : f32 to vector<1x2048xf32>
    %97 = arith.mulf %96, %92 : vector<1x2048xf32>
    %98 = arith.select %94, %92, %97 : vector<1x2048xi1>, vector<1x2048xf32>
    %c0_50 = arith.constant 0 : index
    %c5_51 = arith.constant 5 : index
    %c0_52 = arith.constant 0 : index
    %99 = vector.load %arg6[%c0_50, %c5_51, %c0_52] : memref<1x8x2048xf32, #tpu.memory_space<vmem>>, vector<1x1x2048xf32>
    %100 = vector.shape_cast %99 : vector<1x1x2048xf32> to vector<1x2048xf32>
    %101 = vector.shape_cast %98 : vector<1x2048xf32> to vector<1x1x2048xf32>
    tpu.vector_store %arg6[%c0_50, %c5_51, %c0_52], %101 {strides = array<i32>} : memref<1x8x2048xf32, #tpu.memory_space<vmem>>, vector<1x1x2048xf32>,
    %c0_53 = arith.constant 0 : index
    %c6 = arith.constant 6 : index
    %c0_54 = arith.constant 0 : index
    %102 = vector.load %arg2[%c0_53, %c6, %c0_54] : memref<1x8x2048xf32, #tpu.memory_space<vmem>>, vector<1x1x2048xf32>
    %103 = vector.shape_cast %102 : vector<1x1x2048xf32> to vector<1x2048xf32>
    %c6_55 = arith.constant 6 : index
    %104 = memref.load %arg3[%c6_55] : memref<8xf32, #tpu.memory_space<smem>>
    %105 = vector.broadcast %104 : f32 to vector<1x2048xf32>
    %106 = arith.mulf %103, %105 : vector<1x2048xf32>
    %c6_56 = arith.constant 6 : index
    %107 = memref.load %arg4[%c6_56] : memref<8xf32, #tpu.memory_space<smem>>
    %108 = vector.broadcast %107 : f32 to vector<1x2048xf32>
    %109 = arith.addf %106, %108 : vector<1x2048xf32>
    %cst_57 = arith.constant 0.000000e+00 : f32
    %110 = vector.broadcast %cst_57 : f32 to vector<1x2048xf32>
    %111 = arith.cmpf oge, %109, %110 : vector<1x2048xf32>
    %c6_58 = arith.constant 6 : index
    %112 = memref.load %arg5[%c6_58] : memref<8xf32, #tpu.memory_space<smem>>
    %113 = vector.broadcast %112 : f32 to vector<1x2048xf32>
    %114 = arith.mulf %113, %109 : vector<1x2048xf32>
    %115 = arith.select %111, %109, %114 : vector<1x2048xi1>, vector<1x2048xf32>
    %c0_59 = arith.constant 0 : index
    %c6_60 = arith.constant 6 : index
    %c0_61 = arith.constant 0 : index
    %116 = vector.load %arg6[%c0_59, %c6_60, %c0_61] : memref<1x8x2048xf32, #tpu.memory_space<vmem>>, vector<1x1x2048xf32>
    %117 = vector.shape_cast %116 : vector<1x1x2048xf32> to vector<1x2048xf32>
    %118 = vector.shape_cast %115 : vector<1x2048xf32> to vector<1x1x2048xf32>
    tpu.vector_store %arg6[%c0_59, %c6_60, %c0_61], %118 {strides = array<i32>} : memref<1x8x2048xf32, #tpu.memory_space<vmem>>, vector<1x1x2048xf32>,
    %c0_62 = arith.constant 0 : index
    %c7 = arith.constant 7 : index
    %c0_63 = arith.constant 0 : index
    %119 = vector.load %arg2[%c0_62, %c7, %c0_63] : memref<1x8x2048xf32, #tpu.memory_space<vmem>>, vector<1x1x2048xf32>
    %120 = vector.shape_cast %119 : vector<1x1x2048xf32> to vector<1x2048xf32>
    %c7_64 = arith.constant 7 : index
    %121 = memref.load %arg3[%c7_64] : memref<8xf32, #tpu.memory_space<smem>>
    %122 = vector.broadcast %121 : f32 to vector<1x2048xf32>
    %123 = arith.mulf %120, %122 : vector<1x2048xf32>
    %c7_65 = arith.constant 7 : index
    %124 = memref.load %arg4[%c7_65] : memref<8xf32, #tpu.memory_space<smem>>
    %125 = vector.broadcast %124 : f32 to vector<1x2048xf32>
    %126 = arith.addf %123, %125 : vector<1x2048xf32>
    %cst_66 = arith.constant 0.000000e+00 : f32
    %127 = vector.broadcast %cst_66 : f32 to vector<1x2048xf32>
    %128 = arith.cmpf oge, %126, %127 : vector<1x2048xf32>
    %c7_67 = arith.constant 7 : index
    %129 = memref.load %arg5[%c7_67] : memref<8xf32, #tpu.memory_space<smem>>
    %130 = vector.broadcast %129 : f32 to vector<1x2048xf32>
    %131 = arith.mulf %130, %126 : vector<1x2048xf32>
    %132 = arith.select %128, %126, %131 : vector<1x2048xi1>, vector<1x2048xf32>
    %c0_68 = arith.constant 0 : index
    %c7_69 = arith.constant 7 : index
    %c0_70 = arith.constant 0 : index
    %133 = vector.load %arg6[%c0_68, %c7_69, %c0_70] : memref<1x8x2048xf32, #tpu.memory_space<vmem>>, vector<1x1x2048xf32>
    %134 = vector.shape_cast %133 : vector<1x1x2048xf32> to vector<1x2048xf32>
    %135 = vector.shape_cast %132 : vector<1x2048xf32> to vector<1x1x2048xf32>
    tpu.vector_store %arg6[%c0_68, %c7_69, %c0_70], %135 {strides = array<i32>} : memref<1x8x2048xf32, #tpu.memory_space<vmem>>, vector<1x1x2048xf32>,
    return
  }
  func.func @transform_0(%arg0: i32, %arg1: i32) -> (i32, i32, i32) {
    %c0_i32 = arith.constant 0 : i32
    %c0_i32_0 = arith.constant 0 : i32
    return %arg0, %c0_i32, %arg1 : i32, i32, i32
  }
  func.func @transform_1(%arg0: i32, %arg1: i32) -> i32 {
    %c0_i32 = arith.constant 0 : i32
    %c0_i32_0 = arith.constant 0 : i32
    return %c0_i32 : i32
  }
  func.func @transform_2(%arg0: i32, %arg1: i32) -> i32 {
    %c0_i32 = arith.constant 0 : i32
    %c0_i32_0 = arith.constant 0 : i32
    return %c0_i32 : i32
  }
  func.func @transform_3(%arg0: i32, %arg1: i32) -> i32 {
    %c0_i32 = arith.constant 0 : i32
    %c0_i32_0 = arith.constant 0 : i32
    return %c0_i32 : i32
  }
  func.func @transform_4(%arg0: i32, %arg1: i32) -> (i32, i32, i32) {
    %c0_i32 = arith.constant 0 : i32
    %c0_i32_0 = arith.constant 0 : i32
    return %arg0, %c0_i32, %arg1 : i32, i32, i32
  }
}

module attributes {stable_mosaic.version = 11 : i64} {
  func.func @_dpcb_pass1_kernel(%arg0: i32, %arg1: i32, %arg2: memref<1x4x8x128xf32, #tpu.memory_space<vmem>>, %arg3: memref<1x4x8x128xf32, #tpu.memory_space<vmem>>, %arg4: memref<1x4x8x128xf32, #tpu.memory_space<vmem>>, %arg5: memref<8xf32, #tpu.memory_space<smem>>, %arg6: memref<72xf32, #tpu.memory_space<smem>>, %arg7: memref<16xf32, #tpu.memory_space<smem>>, %arg8: memref<1x8x8x128xf32, #tpu.memory_space<vmem>>, %arg9: memref<1x1x2x8xf32, #tpu.memory_space<vmem>>, %arg10: memref<2x24x128xf32, #tpu.memory_space<vmem>>) attributes {dimension_semantics = [#tpu.dimension_semantics<parallel>, #tpu.dimension_semantics<parallel>], iteration_bounds = array<i64: 2, 2>, scalar_prefetch = 0 : i64, scratch_operands = 1 : i64, tpu.core_type = #tpu.core_type<tc>, window_params = [{transform_indices = @transform_0, window_bounds = array<i64: 1, 4, 8, 128>}, {transform_indices = @transform_1, window_bounds = array<i64: 1, 4, 8, 128>}, {transform_indices = @transform_2, window_bounds = array<i64: 1, 4, 8, 128>}, {transform_indices = @transform_3, window_bounds = array<i64: 8>}, {transform_indices = @transform_4, window_bounds = array<i64: 72>}, {transform_indices = @transform_5, window_bounds = array<i64: 16>}, {transform_indices = @transform_6, window_bounds = array<i64: 1, 8, 8, 128>}, {transform_indices = @transform_7, window_bounds = array<i64: 1, 1, 2, 8>}]} {
    %cst = arith.constant 0.000000e+00 : f32
    %0 = vector.broadcast %cst : f32 to vector<8x128xf32>
    %c0 = arith.constant 0 : index
    %1 = memref.load %arg5[%c0] : memref<8xf32, #tpu.memory_space<smem>>
    %c0_0 = arith.constant 0 : index
    %c0_1 = arith.constant 0 : index
    %c0_2 = arith.constant 0 : index
    %c0_3 = arith.constant 0 : index
    %2 = vector.load %arg3[%c0_0, %c0_1, %c0_2, %c0_3] : memref<1x4x8x128xf32, #tpu.memory_space<vmem>>, vector<1x1x8x128xf32>
    %3 = vector.shape_cast %2 : vector<1x1x8x128xf32> to vector<8x128xf32>
    %4 = vector.broadcast %1 : f32 to vector<8x128xf32>
    %5 = arith.mulf %4, %3 : vector<8x128xf32>
    %6 = arith.addf %0, %5 : vector<8x128xf32>
    %c1 = arith.constant 1 : index
    %7 = memref.load %arg5[%c1] : memref<8xf32, #tpu.memory_space<smem>>
    %c0_4 = arith.constant 0 : index
    %c1_5 = arith.constant 1 : index
    %c0_6 = arith.constant 0 : index
    %c0_7 = arith.constant 0 : index
    %8 = vector.load %arg3[%c0_4, %c1_5, %c0_6, %c0_7] : memref<1x4x8x128xf32, #tpu.memory_space<vmem>>, vector<1x1x8x128xf32>
    %9 = vector.shape_cast %8 : vector<1x1x8x128xf32> to vector<8x128xf32>
    %10 = vector.broadcast %7 : f32 to vector<8x128xf32>
    %11 = arith.mulf %10, %9 : vector<8x128xf32>
    %12 = arith.addf %6, %11 : vector<8x128xf32>
    %c2 = arith.constant 2 : index
    %13 = memref.load %arg5[%c2] : memref<8xf32, #tpu.memory_space<smem>>
    %c0_8 = arith.constant 0 : index
    %c2_9 = arith.constant 2 : index
    %c0_10 = arith.constant 0 : index
    %c0_11 = arith.constant 0 : index
    %14 = vector.load %arg3[%c0_8, %c2_9, %c0_10, %c0_11] : memref<1x4x8x128xf32, #tpu.memory_space<vmem>>, vector<1x1x8x128xf32>
    %15 = vector.shape_cast %14 : vector<1x1x8x128xf32> to vector<8x128xf32>
    %16 = vector.broadcast %13 : f32 to vector<8x128xf32>
    %17 = arith.mulf %16, %15 : vector<8x128xf32>
    %18 = arith.addf %12, %17 : vector<8x128xf32>
    %c3 = arith.constant 3 : index
    %19 = memref.load %arg5[%c3] : memref<8xf32, #tpu.memory_space<smem>>
    %c0_12 = arith.constant 0 : index
    %c3_13 = arith.constant 3 : index
    %c0_14 = arith.constant 0 : index
    %c0_15 = arith.constant 0 : index
    %20 = vector.load %arg3[%c0_12, %c3_13, %c0_14, %c0_15] : memref<1x4x8x128xf32, #tpu.memory_space<vmem>>, vector<1x1x8x128xf32>
    %21 = vector.shape_cast %20 : vector<1x1x8x128xf32> to vector<8x128xf32>
    %22 = vector.broadcast %19 : f32 to vector<8x128xf32>
    %23 = arith.mulf %22, %21 : vector<8x128xf32>
    %24 = arith.addf %18, %23 : vector<8x128xf32>
    %c0_16 = arith.constant 0 : index
    %c8 = arith.constant 8 : index
    %c0_17 = arith.constant 0 : index
    %25 = vector.load %arg10[%c0_16, %c8, %c0_17] : memref<2x24x128xf32, #tpu.memory_space<vmem>>, vector<1x8x128xf32>
    %26 = vector.shape_cast %25 : vector<1x8x128xf32> to vector<8x128xf32>
    %27 = vector.shape_cast %24 : vector<8x128xf32> to vector<1x8x128xf32>
    tpu.vector_store %arg10[%c0_16, %c8, %c0_17], %27 {strides = array<i32>} : memref<2x24x128xf32, #tpu.memory_space<vmem>>, vector<1x8x128xf32>,
    %cst_18 = arith.constant 0.000000e+00 : f32
    %28 = vector.broadcast %cst_18 : f32 to vector<8x128xf32>
    %c4 = arith.constant 4 : index
    %29 = memref.load %arg5[%c4] : memref<8xf32, #tpu.memory_space<smem>>
    %c0_19 = arith.constant 0 : index
    %c0_20 = arith.constant 0 : index
    %c0_21 = arith.constant 0 : index
    %c0_22 = arith.constant 0 : index
    %30 = vector.load %arg3[%c0_19, %c0_20, %c0_21, %c0_22] : memref<1x4x8x128xf32, #tpu.memory_space<vmem>>, vector<1x1x8x128xf32>
    %31 = vector.shape_cast %30 : vector<1x1x8x128xf32> to vector<8x128xf32>
    %32 = vector.broadcast %29 : f32 to vector<8x128xf32>
    %33 = arith.mulf %32, %31 : vector<8x128xf32>
    %34 = arith.addf %28, %33 : vector<8x128xf32>
    %c5 = arith.constant 5 : index
    %35 = memref.load %arg5[%c5] : memref<8xf32, #tpu.memory_space<smem>>
    %c0_23 = arith.constant 0 : index
    %c1_24 = arith.constant 1 : index
    %c0_25 = arith.constant 0 : index
    %c0_26 = arith.constant 0 : index
    %36 = vector.load %arg3[%c0_23, %c1_24, %c0_25, %c0_26] : memref<1x4x8x128xf32, #tpu.memory_space<vmem>>, vector<1x1x8x128xf32>
    %37 = vector.shape_cast %36 : vector<1x1x8x128xf32> to vector<8x128xf32>
    %38 = vector.broadcast %35 : f32 to vector<8x128xf32>
    %39 = arith.mulf %38, %37 : vector<8x128xf32>
    %40 = arith.addf %34, %39 : vector<8x128xf32>
    %c6 = arith.constant 6 : index
    %41 = memref.load %arg5[%c6] : memref<8xf32, #tpu.memory_space<smem>>
    %c0_27 = arith.constant 0 : index
    %c2_28 = arith.constant 2 : index
    %c0_29 = arith.constant 0 : index
    %c0_30 = arith.constant 0 : index
    %42 = vector.load %arg3[%c0_27, %c2_28, %c0_29, %c0_30] : memref<1x4x8x128xf32, #tpu.memory_space<vmem>>, vector<1x1x8x128xf32>
    %43 = vector.shape_cast %42 : vector<1x1x8x128xf32> to vector<8x128xf32>
    %44 = vector.broadcast %41 : f32 to vector<8x128xf32>
    %45 = arith.mulf %44, %43 : vector<8x128xf32>
    %46 = arith.addf %40, %45 : vector<8x128xf32>
    %c7 = arith.constant 7 : index
    %47 = memref.load %arg5[%c7] : memref<8xf32, #tpu.memory_space<smem>>
    %c0_31 = arith.constant 0 : index
    %c3_32 = arith.constant 3 : index
    %c0_33 = arith.constant 0 : index
    %c0_34 = arith.constant 0 : index
    %48 = vector.load %arg3[%c0_31, %c3_32, %c0_33, %c0_34] : memref<1x4x8x128xf32, #tpu.memory_space<vmem>>, vector<1x1x8x128xf32>
    %49 = vector.shape_cast %48 : vector<1x1x8x128xf32> to vector<8x128xf32>
    %50 = vector.broadcast %47 : f32 to vector<8x128xf32>
    %51 = arith.mulf %50, %49 : vector<8x128xf32>
    %52 = arith.addf %46, %51 : vector<8x128xf32>
    %c1_35 = arith.constant 1 : index
    %c8_36 = arith.constant 8 : index
    %c0_37 = arith.constant 0 : index
    %53 = vector.load %arg10[%c1_35, %c8_36, %c0_37] : memref<2x24x128xf32, #tpu.memory_space<vmem>>, vector<1x8x128xf32>
    %54 = vector.shape_cast %53 : vector<1x8x128xf32> to vector<8x128xf32>
    %55 = vector.shape_cast %52 : vector<8x128xf32> to vector<1x8x128xf32>
    tpu.vector_store %arg10[%c1_35, %c8_36, %c0_37], %55 {strides = array<i32>} : memref<2x24x128xf32, #tpu.memory_space<vmem>>, vector<1x8x128xf32>,
    %cst_38 = arith.constant 0.000000e+00 : f32
    %56 = vector.broadcast %cst_38 : f32 to vector<2x8x128xf32>
    %c0_i32 = arith.constant 0 : i32
    %57 = arith.cmpi eq, %arg1, %c0_i32 : i32
    %58 = arith.extui %57 : i1 to i32
    %c0_i32_39 = arith.constant 0 : i32
    %59 = arith.cmpi ne, %58, %c0_i32_39 : i32
    scf.if %59 {
      %c0_359 = arith.constant 0 : index
      %c0_360 = arith.constant 0 : index
      %c0_361 = arith.constant 0 : index
      %709 = vector.load %arg10[%c0_359, %c0_360, %c0_361] : memref<2x24x128xf32, #tpu.memory_space<vmem>>, vector<2x8x128xf32>
      tpu.vector_store %arg10[%c0_359, %c0_360, %c0_361], %56 {strides = array<i32>} : memref<2x24x128xf32, #tpu.memory_space<vmem>>, vector<2x8x128xf32>,
    } else {
    }
    %c0_i32_40 = arith.constant 0 : i32
    %60 = arith.cmpi sgt, %arg1, %c0_i32_40 : i32
    %61 = arith.extui %60 : i1 to i32
    %c0_i32_41 = arith.constant 0 : i32
    %62 = arith.cmpi ne, %61, %c0_i32_41 : i32
    scf.if %62 {
      %cst_359 = arith.constant 0.000000e+00 : f32
      %709 = vector.broadcast %cst_359 : f32 to vector<8x128xf32>
      %c0_360 = arith.constant 0 : index
      %710 = memref.load %arg5[%c0_360] : memref<8xf32, #tpu.memory_space<smem>>
      %c0_361 = arith.constant 0 : index
      %c0_362 = arith.constant 0 : index
      %c0_363 = arith.constant 0 : index
      %c0_364 = arith.constant 0 : index
      %711 = vector.load %arg2[%c0_361, %c0_362, %c0_363, %c0_364] : memref<1x4x8x128xf32, #tpu.memory_space<vmem>>, vector<1x1x8x128xf32>
      %712 = vector.shape_cast %711 : vector<1x1x8x128xf32> to vector<8x128xf32>
      %713 = vector.broadcast %710 : f32 to vector<8x128xf32>
      %714 = arith.mulf %713, %712 : vector<8x128xf32>
      %715 = arith.addf %709, %714 : vector<8x128xf32>
      %c1_365 = arith.constant 1 : index
      %716 = memref.load %arg5[%c1_365] : memref<8xf32, #tpu.memory_space<smem>>
      %c0_366 = arith.constant 0 : index
      %c1_367 = arith.constant 1 : index
      %c0_368 = arith.constant 0 : index
      %c0_369 = arith.constant 0 : index
      %717 = vector.load %arg2[%c0_366, %c1_367, %c0_368, %c0_369] : memref<1x4x8x128xf32, #tpu.memory_space<vmem>>, vector<1x1x8x128xf32>
      %718 = vector.shape_cast %717 : vector<1x1x8x128xf32> to vector<8x128xf32>
      %719 = vector.broadcast %716 : f32 to vector<8x128xf32>
      %720 = arith.mulf %719, %718 : vector<8x128xf32>
      %721 = arith.addf %715, %720 : vector<8x128xf32>
      %c2_370 = arith.constant 2 : index
      %722 = memref.load %arg5[%c2_370] : memref<8xf32, #tpu.memory_space<smem>>
      %c0_371 = arith.constant 0 : index
      %c2_372 = arith.constant 2 : index
      %c0_373 = arith.constant 0 : index
      %c0_374 = arith.constant 0 : index
      %723 = vector.load %arg2[%c0_371, %c2_372, %c0_373, %c0_374] : memref<1x4x8x128xf32, #tpu.memory_space<vmem>>, vector<1x1x8x128xf32>
      %724 = vector.shape_cast %723 : vector<1x1x8x128xf32> to vector<8x128xf32>
      %725 = vector.broadcast %722 : f32 to vector<8x128xf32>
      %726 = arith.mulf %725, %724 : vector<8x128xf32>
      %727 = arith.addf %721, %726 : vector<8x128xf32>
      %c3_375 = arith.constant 3 : index
      %728 = memref.load %arg5[%c3_375] : memref<8xf32, #tpu.memory_space<smem>>
      %c0_376 = arith.constant 0 : index
      %c3_377 = arith.constant 3 : index
      %c0_378 = arith.constant 0 : index
      %c0_379 = arith.constant 0 : index
      %729 = vector.load %arg2[%c0_376, %c3_377, %c0_378, %c0_379] : memref<1x4x8x128xf32, #tpu.memory_space<vmem>>, vector<1x1x8x128xf32>
      %730 = vector.shape_cast %729 : vector<1x1x8x128xf32> to vector<8x128xf32>
      %731 = vector.broadcast %728 : f32 to vector<8x128xf32>
      %732 = arith.mulf %731, %730 : vector<8x128xf32>
      %733 = arith.addf %727, %732 : vector<8x128xf32>
      %c0_380 = arith.constant 0 : index
      %c0_381 = arith.constant 0 : index
      %c0_382 = arith.constant 0 : index
      %734 = vector.load %arg10[%c0_380, %c0_381, %c0_382] : memref<2x24x128xf32, #tpu.memory_space<vmem>>, vector<1x8x128xf32>
      %735 = vector.shape_cast %734 : vector<1x8x128xf32> to vector<8x128xf32>
      %736 = vector.shape_cast %733 : vector<8x128xf32> to vector<1x8x128xf32>
      tpu.vector_store %arg10[%c0_380, %c0_381, %c0_382], %736 {strides = array<i32>} : memref<2x24x128xf32, #tpu.memory_space<vmem>>, vector<1x8x128xf32>,
      %cst_383 = arith.constant 0.000000e+00 : f32
      %737 = vector.broadcast %cst_383 : f32 to vector<8x128xf32>
      %c4_384 = arith.constant 4 : index
      %738 = memref.load %arg5[%c4_384] : memref<8xf32, #tpu.memory_space<smem>>
      %c0_385 = arith.constant 0 : index
      %c0_386 = arith.constant 0 : index
      %c0_387 = arith.constant 0 : index
      %c0_388 = arith.constant 0 : index
      %739 = vector.load %arg2[%c0_385, %c0_386, %c0_387, %c0_388] : memref<1x4x8x128xf32, #tpu.memory_space<vmem>>, vector<1x1x8x128xf32>
      %740 = vector.shape_cast %739 : vector<1x1x8x128xf32> to vector<8x128xf32>
      %741 = vector.broadcast %738 : f32 to vector<8x128xf32>
      %742 = arith.mulf %741, %740 : vector<8x128xf32>
      %743 = arith.addf %737, %742 : vector<8x128xf32>
      %c5_389 = arith.constant 5 : index
      %744 = memref.load %arg5[%c5_389] : memref<8xf32, #tpu.memory_space<smem>>
      %c0_390 = arith.constant 0 : index
      %c1_391 = arith.constant 1 : index
      %c0_392 = arith.constant 0 : index
      %c0_393 = arith.constant 0 : index
      %745 = vector.load %arg2[%c0_390, %c1_391, %c0_392, %c0_393] : memref<1x4x8x128xf32, #tpu.memory_space<vmem>>, vector<1x1x8x128xf32>
      %746 = vector.shape_cast %745 : vector<1x1x8x128xf32> to vector<8x128xf32>
      %747 = vector.broadcast %744 : f32 to vector<8x128xf32>
      %748 = arith.mulf %747, %746 : vector<8x128xf32>
      %749 = arith.addf %743, %748 : vector<8x128xf32>
      %c6_394 = arith.constant 6 : index
      %750 = memref.load %arg5[%c6_394] : memref<8xf32, #tpu.memory_space<smem>>
      %c0_395 = arith.constant 0 : index
      %c2_396 = arith.constant 2 : index
      %c0_397 = arith.constant 0 : index
      %c0_398 = arith.constant 0 : index
      %751 = vector.load %arg2[%c0_395, %c2_396, %c0_397, %c0_398] : memref<1x4x8x128xf32, #tpu.memory_space<vmem>>, vector<1x1x8x128xf32>
      %752 = vector.shape_cast %751 : vector<1x1x8x128xf32> to vector<8x128xf32>
      %753 = vector.broadcast %750 : f32 to vector<8x128xf32>
      %754 = arith.mulf %753, %752 : vector<8x128xf32>
      %755 = arith.addf %749, %754 : vector<8x128xf32>
      %c7_399 = arith.constant 7 : index
      %756 = memref.load %arg5[%c7_399] : memref<8xf32, #tpu.memory_space<smem>>
      %c0_400 = arith.constant 0 : index
      %c3_401 = arith.constant 3 : index
      %c0_402 = arith.constant 0 : index
      %c0_403 = arith.constant 0 : index
      %757 = vector.load %arg2[%c0_400, %c3_401, %c0_402, %c0_403] : memref<1x4x8x128xf32, #tpu.memory_space<vmem>>, vector<1x1x8x128xf32>
      %758 = vector.shape_cast %757 : vector<1x1x8x128xf32> to vector<8x128xf32>
      %759 = vector.broadcast %756 : f32 to vector<8x128xf32>
      %760 = arith.mulf %759, %758 : vector<8x128xf32>
      %761 = arith.addf %755, %760 : vector<8x128xf32>
      %c1_404 = arith.constant 1 : index
      %c0_405 = arith.constant 0 : index
      %c0_406 = arith.constant 0 : index
      %762 = vector.load %arg10[%c1_404, %c0_405, %c0_406] : memref<2x24x128xf32, #tpu.memory_space<vmem>>, vector<1x8x128xf32>
      %763 = vector.shape_cast %762 : vector<1x8x128xf32> to vector<8x128xf32>
      %764 = vector.shape_cast %761 : vector<8x128xf32> to vector<1x8x128xf32>
      tpu.vector_store %arg10[%c1_404, %c0_405, %c0_406], %764 {strides = array<i32>} : memref<2x24x128xf32, #tpu.memory_space<vmem>>, vector<1x8x128xf32>,
    } else {
    }
    %c1_i32 = arith.constant 1 : i32
    %63 = arith.cmpi eq, %arg1, %c1_i32 : i32
    %64 = arith.extui %63 : i1 to i32
    %c0_i32_42 = arith.constant 0 : i32
    %65 = arith.cmpi ne, %64, %c0_i32_42 : i32
    scf.if %65 {
      %c0_359 = arith.constant 0 : index
      %c16_360 = arith.constant 16 : index
      %c0_361 = arith.constant 0 : index
      %709 = vector.load %arg10[%c0_359, %c16_360, %c0_361] : memref<2x24x128xf32, #tpu.memory_space<vmem>>, vector<2x8x128xf32>
      tpu.vector_store %arg10[%c0_359, %c16_360, %c0_361], %56 {strides = array<i32>} : memref<2x24x128xf32, #tpu.memory_space<vmem>>, vector<2x8x128xf32>,
    } else {
    }
    %c1_i32_43 = arith.constant 1 : i32
    %66 = arith.cmpi slt, %arg1, %c1_i32_43 : i32
    %67 = arith.extui %66 : i1 to i32
    %c0_i32_44 = arith.constant 0 : i32
    %68 = arith.cmpi ne, %67, %c0_i32_44 : i32
    scf.if %68 {
      %cst_359 = arith.constant 0.000000e+00 : f32
      %709 = vector.broadcast %cst_359 : f32 to vector<8x128xf32>
      %c0_360 = arith.constant 0 : index
      %710 = memref.load %arg5[%c0_360] : memref<8xf32, #tpu.memory_space<smem>>
      %c0_361 = arith.constant 0 : index
      %c0_362 = arith.constant 0 : index
      %c0_363 = arith.constant 0 : index
      %c0_364 = arith.constant 0 : index
      %711 = vector.load %arg4[%c0_361, %c0_362, %c0_363, %c0_364] : memref<1x4x8x128xf32, #tpu.memory_space<vmem>>, vector<1x1x8x128xf32>
      %712 = vector.shape_cast %711 : vector<1x1x8x128xf32> to vector<8x128xf32>
      %713 = vector.broadcast %710 : f32 to vector<8x128xf32>
      %714 = arith.mulf %713, %712 : vector<8x128xf32>
      %715 = arith.addf %709, %714 : vector<8x128xf32>
      %c1_365 = arith.constant 1 : index
      %716 = memref.load %arg5[%c1_365] : memref<8xf32, #tpu.memory_space<smem>>
      %c0_366 = arith.constant 0 : index
      %c1_367 = arith.constant 1 : index
      %c0_368 = arith.constant 0 : index
      %c0_369 = arith.constant 0 : index
      %717 = vector.load %arg4[%c0_366, %c1_367, %c0_368, %c0_369] : memref<1x4x8x128xf32, #tpu.memory_space<vmem>>, vector<1x1x8x128xf32>
      %718 = vector.shape_cast %717 : vector<1x1x8x128xf32> to vector<8x128xf32>
      %719 = vector.broadcast %716 : f32 to vector<8x128xf32>
      %720 = arith.mulf %719, %718 : vector<8x128xf32>
      %721 = arith.addf %715, %720 : vector<8x128xf32>
      %c2_370 = arith.constant 2 : index
      %722 = memref.load %arg5[%c2_370] : memref<8xf32, #tpu.memory_space<smem>>
      %c0_371 = arith.constant 0 : index
      %c2_372 = arith.constant 2 : index
      %c0_373 = arith.constant 0 : index
      %c0_374 = arith.constant 0 : index
      %723 = vector.load %arg4[%c0_371, %c2_372, %c0_373, %c0_374] : memref<1x4x8x128xf32, #tpu.memory_space<vmem>>, vector<1x1x8x128xf32>
      %724 = vector.shape_cast %723 : vector<1x1x8x128xf32> to vector<8x128xf32>
      %725 = vector.broadcast %722 : f32 to vector<8x128xf32>
      %726 = arith.mulf %725, %724 : vector<8x128xf32>
      %727 = arith.addf %721, %726 : vector<8x128xf32>
      %c3_375 = arith.constant 3 : index
      %728 = memref.load %arg5[%c3_375] : memref<8xf32, #tpu.memory_space<smem>>
      %c0_376 = arith.constant 0 : index
      %c3_377 = arith.constant 3 : index
      %c0_378 = arith.constant 0 : index
      %c0_379 = arith.constant 0 : index
      %729 = vector.load %arg4[%c0_376, %c3_377, %c0_378, %c0_379] : memref<1x4x8x128xf32, #tpu.memory_space<vmem>>, vector<1x1x8x128xf32>
      %730 = vector.shape_cast %729 : vector<1x1x8x128xf32> to vector<8x128xf32>
      %731 = vector.broadcast %728 : f32 to vector<8x128xf32>
      %732 = arith.mulf %731, %730 : vector<8x128xf32>
      %733 = arith.addf %727, %732 : vector<8x128xf32>
      %c0_380 = arith.constant 0 : index
      %c16_381 = arith.constant 16 : index
      %c0_382 = arith.constant 0 : index
      %734 = vector.load %arg10[%c0_380, %c16_381, %c0_382] : memref<2x24x128xf32, #tpu.memory_space<vmem>>, vector<1x8x128xf32>
      %735 = vector.shape_cast %734 : vector<1x8x128xf32> to vector<8x128xf32>
      %736 = vector.shape_cast %733 : vector<8x128xf32> to vector<1x8x128xf32>
      tpu.vector_store %arg10[%c0_380, %c16_381, %c0_382], %736 {strides = array<i32>} : memref<2x24x128xf32, #tpu.memory_space<vmem>>, vector<1x8x128xf32>,
      %cst_383 = arith.constant 0.000000e+00 : f32
      %737 = vector.broadcast %cst_383 : f32 to vector<8x128xf32>
      %c4_384 = arith.constant 4 : index
      %738 = memref.load %arg5[%c4_384] : memref<8xf32, #tpu.memory_space<smem>>
      %c0_385 = arith.constant 0 : index
      %c0_386 = arith.constant 0 : index
      %c0_387 = arith.constant 0 : index
      %c0_388 = arith.constant 0 : index
      %739 = vector.load %arg4[%c0_385, %c0_386, %c0_387, %c0_388] : memref<1x4x8x128xf32, #tpu.memory_space<vmem>>, vector<1x1x8x128xf32>
      %740 = vector.shape_cast %739 : vector<1x1x8x128xf32> to vector<8x128xf32>
      %741 = vector.broadcast %738 : f32 to vector<8x128xf32>
      %742 = arith.mulf %741, %740 : vector<8x128xf32>
      %743 = arith.addf %737, %742 : vector<8x128xf32>
      %c5_389 = arith.constant 5 : index
      %744 = memref.load %arg5[%c5_389] : memref<8xf32, #tpu.memory_space<smem>>
      %c0_390 = arith.constant 0 : index
      %c1_391 = arith.constant 1 : index
      %c0_392 = arith.constant 0 : index
      %c0_393 = arith.constant 0 : index
      %745 = vector.load %arg4[%c0_390, %c1_391, %c0_392, %c0_393] : memref<1x4x8x128xf32, #tpu.memory_space<vmem>>, vector<1x1x8x128xf32>
      %746 = vector.shape_cast %745 : vector<1x1x8x128xf32> to vector<8x128xf32>
      %747 = vector.broadcast %744 : f32 to vector<8x128xf32>
      %748 = arith.mulf %747, %746 : vector<8x128xf32>
      %749 = arith.addf %743, %748 : vector<8x128xf32>
      %c6_394 = arith.constant 6 : index
      %750 = memref.load %arg5[%c6_394] : memref<8xf32, #tpu.memory_space<smem>>
      %c0_395 = arith.constant 0 : index
      %c2_396 = arith.constant 2 : index
      %c0_397 = arith.constant 0 : index
      %c0_398 = arith.constant 0 : index
      %751 = vector.load %arg4[%c0_395, %c2_396, %c0_397, %c0_398] : memref<1x4x8x128xf32, #tpu.memory_space<vmem>>, vector<1x1x8x128xf32>
      %752 = vector.shape_cast %751 : vector<1x1x8x128xf32> to vector<8x128xf32>
      %753 = vector.broadcast %750 : f32 to vector<8x128xf32>
      %754 = arith.mulf %753, %752 : vector<8x128xf32>
      %755 = arith.addf %749, %754 : vector<8x128xf32>
      %c7_399 = arith.constant 7 : index
      %756 = memref.load %arg5[%c7_399] : memref<8xf32, #tpu.memory_space<smem>>
      %c0_400 = arith.constant 0 : index
      %c3_401 = arith.constant 3 : index
      %c0_402 = arith.constant 0 : index
      %c0_403 = arith.constant 0 : index
      %757 = vector.load %arg4[%c0_400, %c3_401, %c0_402, %c0_403] : memref<1x4x8x128xf32, #tpu.memory_space<vmem>>, vector<1x1x8x128xf32>
      %758 = vector.shape_cast %757 : vector<1x1x8x128xf32> to vector<8x128xf32>
      %759 = vector.broadcast %756 : f32 to vector<8x128xf32>
      %760 = arith.mulf %759, %758 : vector<8x128xf32>
      %761 = arith.addf %755, %760 : vector<8x128xf32>
      %c1_404 = arith.constant 1 : index
      %c16_405 = arith.constant 16 : index
      %c0_406 = arith.constant 0 : index
      %762 = vector.load %arg10[%c1_404, %c16_405, %c0_406] : memref<2x24x128xf32, #tpu.memory_space<vmem>>, vector<1x8x128xf32>
      %763 = vector.shape_cast %762 : vector<1x8x128xf32> to vector<8x128xf32>
      %764 = vector.shape_cast %761 : vector<8x128xf32> to vector<1x8x128xf32>
      tpu.vector_store %arg10[%c1_404, %c16_405, %c0_406], %764 {strides = array<i32>} : memref<2x24x128xf32, #tpu.memory_space<vmem>>, vector<1x8x128xf32>,
    } else {
    }
    %69 = tpu.iota {dimensions = array<i32: 1>} : vector<8x128xi32>
    %c1_i32_45 = arith.constant 1 : i32
    %70 = vector.broadcast %c1_i32_45 : i32 to vector<8x128xi32>
    %71 = arith.cmpi sge, %69, %70 : vector<8x128xi32>
    %c127_i32 = arith.constant 127 : i32
    %72 = vector.broadcast %c127_i32 : i32 to vector<8x128xi32>
    %73 = arith.cmpi slt, %69, %72 : vector<8x128xi32>
    %cst_46 = arith.constant 0.000000e+00 : f32
    %74 = vector.broadcast %cst_46 : f32 to vector<8x128xf32>
    %c0_47 = arith.constant 0 : index
    %c7_48 = arith.constant 7 : index
    %c0_49 = arith.constant 0 : index
    %75 = vector.load %arg10[%c0_47, %c7_48, %c0_49] : memref<2x24x128xf32, #tpu.memory_space<vmem>>, vector<1x8x128xf32>
    %76 = vector.shape_cast %75 : vector<1x8x128xf32> to vector<8x128xf32>
    %c0_50 = arith.constant 0 : index
    %77 = memref.load %arg6[%c0_50] : memref<72xf32, #tpu.memory_space<smem>>
    %c2_51 = arith.constant 2 : index
    %78 = memref.load %arg6[%c2_51] : memref<72xf32, #tpu.memory_space<smem>>
    %c4_52 = arith.constant 4 : index
    %79 = memref.load %arg6[%c4_52] : memref<72xf32, #tpu.memory_space<smem>>
    %c1_i32_53 = arith.constant 1 : i32
    %80 = tpu.dynamic_rotate %76 by %c1_i32_53 dim 1 : vector<8x128xf32>, i32 -> vector<8x128xf32>
    %cst_54 = arith.constant 0.000000e+00 : f32
    %81 = vector.broadcast %cst_54 : f32 to vector<8x128xf32>
    %82 = arith.select %71, %80, %81 : vector<8x128xi1>, vector<8x128xf32>
    %c127_i32_55 = arith.constant 127 : i32
    %83 = tpu.dynamic_rotate %76 by %c127_i32_55 dim 1 : vector<8x128xf32>, i32 -> vector<8x128xf32>
    %cst_56 = arith.constant 0.000000e+00 : f32
    %84 = vector.broadcast %cst_56 : f32 to vector<8x128xf32>
    %85 = arith.select %73, %83, %84 : vector<8x128xi1>, vector<8x128xf32>
    %86 = vector.broadcast %77 : f32 to vector<8x128xf32>
    %87 = arith.mulf %86, %82 : vector<8x128xf32>
    %88 = arith.addf %74, %87 : vector<8x128xf32>
    %89 = vector.broadcast %78 : f32 to vector<8x128xf32>
    %90 = arith.mulf %89, %76 : vector<8x128xf32>
    %91 = arith.addf %88, %90 : vector<8x128xf32>
    %92 = vector.broadcast %79 : f32 to vector<8x128xf32>
    %93 = arith.mulf %92, %85 : vector<8x128xf32>
    %94 = arith.addf %91, %93 : vector<8x128xf32>
    %c0_57 = arith.constant 0 : index
    %c8_58 = arith.constant 8 : index
    %c0_59 = arith.constant 0 : index
    %95 = vector.load %arg10[%c0_57, %c8_58, %c0_59] : memref<2x24x128xf32, #tpu.memory_space<vmem>>, vector<1x8x128xf32>
    %96 = vector.shape_cast %95 : vector<1x8x128xf32> to vector<8x128xf32>
    %c6_60 = arith.constant 6 : index
    %97 = memref.load %arg6[%c6_60] : memref<72xf32, #tpu.memory_space<smem>>
    %c8_61 = arith.constant 8 : index
    %98 = memref.load %arg6[%c8_61] : memref<72xf32, #tpu.memory_space<smem>>
    %c10 = arith.constant 10 : index
    %99 = memref.load %arg6[%c10] : memref<72xf32, #tpu.memory_space<smem>>
    %c1_i32_62 = arith.constant 1 : i32
    %100 = tpu.dynamic_rotate %96 by %c1_i32_62 dim 1 : vector<8x128xf32>, i32 -> vector<8x128xf32>
    %cst_63 = arith.constant 0.000000e+00 : f32
    %101 = vector.broadcast %cst_63 : f32 to vector<8x128xf32>
    %102 = arith.select %71, %100, %101 : vector<8x128xi1>, vector<8x128xf32>
    %c127_i32_64 = arith.constant 127 : i32
    %103 = tpu.dynamic_rotate %96 by %c127_i32_64 dim 1 : vector<8x128xf32>, i32 -> vector<8x128xf32>
    %cst_65 = arith.constant 0.000000e+00 : f32
    %104 = vector.broadcast %cst_65 : f32 to vector<8x128xf32>
    %105 = arith.select %73, %103, %104 : vector<8x128xi1>, vector<8x128xf32>
    %106 = vector.broadcast %97 : f32 to vector<8x128xf32>
    %107 = arith.mulf %106, %102 : vector<8x128xf32>
    %108 = arith.addf %94, %107 : vector<8x128xf32>
    %109 = vector.broadcast %98 : f32 to vector<8x128xf32>
    %110 = arith.mulf %109, %96 : vector<8x128xf32>
    %111 = arith.addf %108, %110 : vector<8x128xf32>
    %112 = vector.broadcast %99 : f32 to vector<8x128xf32>
    %113 = arith.mulf %112, %105 : vector<8x128xf32>
    %114 = arith.addf %111, %113 : vector<8x128xf32>
    %c0_66 = arith.constant 0 : index
    %c9 = arith.constant 9 : index
    %c0_67 = arith.constant 0 : index
    %115 = vector.load %arg10[%c0_66, %c9, %c0_67] : memref<2x24x128xf32, #tpu.memory_space<vmem>>, vector<1x8x128xf32>
    %116 = vector.shape_cast %115 : vector<1x8x128xf32> to vector<8x128xf32>
    %c12 = arith.constant 12 : index
    %117 = memref.load %arg6[%c12] : memref<72xf32, #tpu.memory_space<smem>>
    %c14 = arith.constant 14 : index
    %118 = memref.load %arg6[%c14] : memref<72xf32, #tpu.memory_space<smem>>
    %c16 = arith.constant 16 : index
    %119 = memref.load %arg6[%c16] : memref<72xf32, #tpu.memory_space<smem>>
    %c1_i32_68 = arith.constant 1 : i32
    %120 = tpu.dynamic_rotate %116 by %c1_i32_68 dim 1 : vector<8x128xf32>, i32 -> vector<8x128xf32>
    %cst_69 = arith.constant 0.000000e+00 : f32
    %121 = vector.broadcast %cst_69 : f32 to vector<8x128xf32>
    %122 = arith.select %71, %120, %121 : vector<8x128xi1>, vector<8x128xf32>
    %c127_i32_70 = arith.constant 127 : i32
    %123 = tpu.dynamic_rotate %116 by %c127_i32_70 dim 1 : vector<8x128xf32>, i32 -> vector<8x128xf32>
    %cst_71 = arith.constant 0.000000e+00 : f32
    %124 = vector.broadcast %cst_71 : f32 to vector<8x128xf32>
    %125 = arith.select %73, %123, %124 : vector<8x128xi1>, vector<8x128xf32>
    %126 = vector.broadcast %117 : f32 to vector<8x128xf32>
    %127 = arith.mulf %126, %122 : vector<8x128xf32>
    %128 = arith.addf %114, %127 : vector<8x128xf32>
    %129 = vector.broadcast %118 : f32 to vector<8x128xf32>
    %130 = arith.mulf %129, %116 : vector<8x128xf32>
    %131 = arith.addf %128, %130 : vector<8x128xf32>
    %132 = vector.broadcast %119 : f32 to vector<8x128xf32>
    %133 = arith.mulf %132, %125 : vector<8x128xf32>
    %134 = arith.addf %131, %133 : vector<8x128xf32>
    %c0_72 = arith.constant 0 : index
    %135 = memref.load %arg7[%c0_72] : memref<16xf32, #tpu.memory_space<smem>>
    %136 = vector.broadcast %135 : f32 to vector<8x128xf32>
    %137 = arith.mulf %136, %134 : vector<8x128xf32>
    %c0_73 = arith.constant 0 : index
    %c0_74 = arith.constant 0 : index
    %c0_75 = arith.constant 0 : index
    %c0_76 = arith.constant 0 : index
    %138 = vector.load %arg8[%c0_73, %c0_74, %c0_75, %c0_76] : memref<1x8x8x128xf32, #tpu.memory_space<vmem>>, vector<1x1x8x128xf32>
    %139 = vector.shape_cast %138 : vector<1x1x8x128xf32> to vector<8x128xf32>
    %140 = vector.shape_cast %137 : vector<8x128xf32> to vector<1x1x8x128xf32>
    tpu.vector_store %arg8[%c0_73, %c0_74, %c0_75, %c0_76], %140 {strides = array<i32>} : memref<1x8x8x128xf32, #tpu.memory_space<vmem>>, vector<1x1x8x128xf32>,
    %c2_77 = arith.constant 2 : index
    %141 = memref.load %arg7[%c2_77] : memref<16xf32, #tpu.memory_space<smem>>
    %142 = vector.broadcast %141 : f32 to vector<8x128xf32>
    %143 = arith.mulf %142, %134 : vector<8x128xf32>
    %c0_78 = arith.constant 0 : index
    %c1_79 = arith.constant 1 : index
    %c0_80 = arith.constant 0 : index
    %c0_81 = arith.constant 0 : index
    %144 = vector.load %arg8[%c0_78, %c1_79, %c0_80, %c0_81] : memref<1x8x8x128xf32, #tpu.memory_space<vmem>>, vector<1x1x8x128xf32>
    %145 = vector.shape_cast %144 : vector<1x1x8x128xf32> to vector<8x128xf32>
    %146 = vector.shape_cast %143 : vector<8x128xf32> to vector<1x1x8x128xf32>
    tpu.vector_store %arg8[%c0_78, %c1_79, %c0_80, %c0_81], %146 {strides = array<i32>} : memref<1x8x8x128xf32, #tpu.memory_space<vmem>>, vector<1x1x8x128xf32>,
    %cst_82 = arith.constant 0.000000e+00 : f32
    %147 = vector.broadcast %cst_82 : f32 to vector<8x128xf32>
    %c1_83 = arith.constant 1 : index
    %c7_84 = arith.constant 7 : index
    %c0_85 = arith.constant 0 : index
    %148 = vector.load %arg10[%c1_83, %c7_84, %c0_85] : memref<2x24x128xf32, #tpu.memory_space<vmem>>, vector<1x8x128xf32>
    %149 = vector.shape_cast %148 : vector<1x8x128xf32> to vector<8x128xf32>
    %c1_86 = arith.constant 1 : index
    %150 = memref.load %arg6[%c1_86] : memref<72xf32, #tpu.memory_space<smem>>
    %c3_87 = arith.constant 3 : index
    %151 = memref.load %arg6[%c3_87] : memref<72xf32, #tpu.memory_space<smem>>
    %c5_88 = arith.constant 5 : index
    %152 = memref.load %arg6[%c5_88] : memref<72xf32, #tpu.memory_space<smem>>
    %c1_i32_89 = arith.constant 1 : i32
    %153 = tpu.dynamic_rotate %149 by %c1_i32_89 dim 1 : vector<8x128xf32>, i32 -> vector<8x128xf32>
    %cst_90 = arith.constant 0.000000e+00 : f32
    %154 = vector.broadcast %cst_90 : f32 to vector<8x128xf32>
    %155 = arith.select %71, %153, %154 : vector<8x128xi1>, vector<8x128xf32>
    %c127_i32_91 = arith.constant 127 : i32
    %156 = tpu.dynamic_rotate %149 by %c127_i32_91 dim 1 : vector<8x128xf32>, i32 -> vector<8x128xf32>
    %cst_92 = arith.constant 0.000000e+00 : f32
    %157 = vector.broadcast %cst_92 : f32 to vector<8x128xf32>
    %158 = arith.select %73, %156, %157 : vector<8x128xi1>, vector<8x128xf32>
    %159 = vector.broadcast %150 : f32 to vector<8x128xf32>
    %160 = arith.mulf %159, %155 : vector<8x128xf32>
    %161 = arith.addf %147, %160 : vector<8x128xf32>
    %162 = vector.broadcast %151 : f32 to vector<8x128xf32>
    %163 = arith.mulf %162, %149 : vector<8x128xf32>
    %164 = arith.addf %161, %163 : vector<8x128xf32>
    %165 = vector.broadcast %152 : f32 to vector<8x128xf32>
    %166 = arith.mulf %165, %158 : vector<8x128xf32>
    %167 = arith.addf %164, %166 : vector<8x128xf32>
    %c1_93 = arith.constant 1 : index
    %c8_94 = arith.constant 8 : index
    %c0_95 = arith.constant 0 : index
    %168 = vector.load %arg10[%c1_93, %c8_94, %c0_95] : memref<2x24x128xf32, #tpu.memory_space<vmem>>, vector<1x8x128xf32>
    %169 = vector.shape_cast %168 : vector<1x8x128xf32> to vector<8x128xf32>
    %c7_96 = arith.constant 7 : index
    %170 = memref.load %arg6[%c7_96] : memref<72xf32, #tpu.memory_space<smem>>
    %c9_97 = arith.constant 9 : index
    %171 = memref.load %arg6[%c9_97] : memref<72xf32, #tpu.memory_space<smem>>
    %c11 = arith.constant 11 : index
    %172 = memref.load %arg6[%c11] : memref<72xf32, #tpu.memory_space<smem>>
    %c1_i32_98 = arith.constant 1 : i32
    %173 = tpu.dynamic_rotate %169 by %c1_i32_98 dim 1 : vector<8x128xf32>, i32 -> vector<8x128xf32>
    %cst_99 = arith.constant 0.000000e+00 : f32
    %174 = vector.broadcast %cst_99 : f32 to vector<8x128xf32>
    %175 = arith.select %71, %173, %174 : vector<8x128xi1>, vector<8x128xf32>
    %c127_i32_100 = arith.constant 127 : i32
    %176 = tpu.dynamic_rotate %169 by %c127_i32_100 dim 1 : vector<8x128xf32>, i32 -> vector<8x128xf32>
    %cst_101 = arith.constant 0.000000e+00 : f32
    %177 = vector.broadcast %cst_101 : f32 to vector<8x128xf32>
    %178 = arith.select %73, %176, %177 : vector<8x128xi1>, vector<8x128xf32>
    %179 = vector.broadcast %170 : f32 to vector<8x128xf32>
    %180 = arith.mulf %179, %175 : vector<8x128xf32>
    %181 = arith.addf %167, %180 : vector<8x128xf32>
    %182 = vector.broadcast %171 : f32 to vector<8x128xf32>
    %183 = arith.mulf %182, %169 : vector<8x128xf32>
    %184 = arith.addf %181, %183 : vector<8x128xf32>
    %185 = vector.broadcast %172 : f32 to vector<8x128xf32>
    %186 = arith.mulf %185, %178 : vector<8x128xf32>
    %187 = arith.addf %184, %186 : vector<8x128xf32>
    %c1_102 = arith.constant 1 : index
    %c9_103 = arith.constant 9 : index
    %c0_104 = arith.constant 0 : index
    %188 = vector.load %arg10[%c1_102, %c9_103, %c0_104] : memref<2x24x128xf32, #tpu.memory_space<vmem>>, vector<1x8x128xf32>
    %189 = vector.shape_cast %188 : vector<1x8x128xf32> to vector<8x128xf32>
    %c13 = arith.constant 13 : index
    %190 = memref.load %arg6[%c13] : memref<72xf32, #tpu.memory_space<smem>>
    %c15 = arith.constant 15 : index
    %191 = memref.load %arg6[%c15] : memref<72xf32, #tpu.memory_space<smem>>
    %c17 = arith.constant 17 : index
    %192 = memref.load %arg6[%c17] : memref<72xf32, #tpu.memory_space<smem>>
    %c1_i32_105 = arith.constant 1 : i32
    %193 = tpu.dynamic_rotate %189 by %c1_i32_105 dim 1 : vector<8x128xf32>, i32 -> vector<8x128xf32>
    %cst_106 = arith.constant 0.000000e+00 : f32
    %194 = vector.broadcast %cst_106 : f32 to vector<8x128xf32>
    %195 = arith.select %71, %193, %194 : vector<8x128xi1>, vector<8x128xf32>
    %c127_i32_107 = arith.constant 127 : i32
    %196 = tpu.dynamic_rotate %189 by %c127_i32_107 dim 1 : vector<8x128xf32>, i32 -> vector<8x128xf32>
    %cst_108 = arith.constant 0.000000e+00 : f32
    %197 = vector.broadcast %cst_108 : f32 to vector<8x128xf32>
    %198 = arith.select %73, %196, %197 : vector<8x128xi1>, vector<8x128xf32>
    %199 = vector.broadcast %190 : f32 to vector<8x128xf32>
    %200 = arith.mulf %199, %195 : vector<8x128xf32>
    %201 = arith.addf %187, %200 : vector<8x128xf32>
    %202 = vector.broadcast %191 : f32 to vector<8x128xf32>
    %203 = arith.mulf %202, %189 : vector<8x128xf32>
    %204 = arith.addf %201, %203 : vector<8x128xf32>
    %205 = vector.broadcast %192 : f32 to vector<8x128xf32>
    %206 = arith.mulf %205, %198 : vector<8x128xf32>
    %207 = arith.addf %204, %206 : vector<8x128xf32>
    %c1_109 = arith.constant 1 : index
    %208 = memref.load %arg7[%c1_109] : memref<16xf32, #tpu.memory_space<smem>>
    %209 = vector.broadcast %208 : f32 to vector<8x128xf32>
    %210 = arith.mulf %209, %207 : vector<8x128xf32>
    %c0_110 = arith.constant 0 : index
    %c0_111 = arith.constant 0 : index
    %c0_112 = arith.constant 0 : index
    %c0_113 = arith.constant 0 : index
    %211 = vector.load %arg8[%c0_110, %c0_111, %c0_112, %c0_113] : memref<1x8x8x128xf32, #tpu.memory_space<vmem>>, vector<1x1x8x128xf32>
    %212 = vector.shape_cast %211 : vector<1x1x8x128xf32> to vector<8x128xf32>
    %213 = arith.addf %212, %210 : vector<8x128xf32>
    %c0_114 = arith.constant 0 : index
    %c0_115 = arith.constant 0 : index
    %c0_116 = arith.constant 0 : index
    %c0_117 = arith.constant 0 : index
    %214 = vector.load %arg8[%c0_114, %c0_115, %c0_116, %c0_117] : memref<1x8x8x128xf32, #tpu.memory_space<vmem>>, vector<1x1x8x128xf32>
    %215 = vector.shape_cast %214 : vector<1x1x8x128xf32> to vector<8x128xf32>
    %216 = vector.shape_cast %213 : vector<8x128xf32> to vector<1x1x8x128xf32>
    tpu.vector_store %arg8[%c0_114, %c0_115, %c0_116, %c0_117], %216 {strides = array<i32>} : memref<1x8x8x128xf32, #tpu.memory_space<vmem>>, vector<1x1x8x128xf32>,
    %c3_118 = arith.constant 3 : index
    %217 = memref.load %arg7[%c3_118] : memref<16xf32, #tpu.memory_space<smem>>
    %218 = vector.broadcast %217 : f32 to vector<8x128xf32>
    %219 = arith.mulf %218, %207 : vector<8x128xf32>
    %c0_119 = arith.constant 0 : index
    %c1_120 = arith.constant 1 : index
    %c0_121 = arith.constant 0 : index
    %c0_122 = arith.constant 0 : index
    %220 = vector.load %arg8[%c0_119, %c1_120, %c0_121, %c0_122] : memref<1x8x8x128xf32, #tpu.memory_space<vmem>>, vector<1x1x8x128xf32>
    %221 = vector.shape_cast %220 : vector<1x1x8x128xf32> to vector<8x128xf32>
    %222 = arith.addf %221, %219 : vector<8x128xf32>
    %c0_123 = arith.constant 0 : index
    %c1_124 = arith.constant 1 : index
    %c0_125 = arith.constant 0 : index
    %c0_126 = arith.constant 0 : index
    %223 = vector.load %arg8[%c0_123, %c1_124, %c0_125, %c0_126] : memref<1x8x8x128xf32, #tpu.memory_space<vmem>>, vector<1x1x8x128xf32>
    %224 = vector.shape_cast %223 : vector<1x1x8x128xf32> to vector<8x128xf32>
    %225 = vector.shape_cast %222 : vector<8x128xf32> to vector<1x1x8x128xf32>
    tpu.vector_store %arg8[%c0_123, %c1_124, %c0_125, %c0_126], %225 {strides = array<i32>} : memref<1x8x8x128xf32, #tpu.memory_space<vmem>>, vector<1x1x8x128xf32>,
    %c2_i32 = arith.constant 2 : i32
    %226 = vector.broadcast %c2_i32 : i32 to vector<8x128xi32>
    %227 = arith.cmpi sge, %69, %226 : vector<8x128xi32>
    %c126_i32 = arith.constant 126 : i32
    %228 = vector.broadcast %c126_i32 : i32 to vector<8x128xi32>
    %229 = arith.cmpi slt, %69, %228 : vector<8x128xi32>
    %cst_127 = arith.constant 0.000000e+00 : f32
    %230 = vector.broadcast %cst_127 : f32 to vector<8x128xf32>
    %c0_128 = arith.constant 0 : index
    %c6_129 = arith.constant 6 : index
    %c0_130 = arith.constant 0 : index
    %231 = vector.load %arg10[%c0_128, %c6_129, %c0_130] : memref<2x24x128xf32, #tpu.memory_space<vmem>>, vector<1x8x128xf32>
    %232 = vector.shape_cast %231 : vector<1x8x128xf32> to vector<8x128xf32>
    %c18 = arith.constant 18 : index
    %233 = memref.load %arg6[%c18] : memref<72xf32, #tpu.memory_space<smem>>
    %c20 = arith.constant 20 : index
    %234 = memref.load %arg6[%c20] : memref<72xf32, #tpu.memory_space<smem>>
    %c22 = arith.constant 22 : index
    %235 = memref.load %arg6[%c22] : memref<72xf32, #tpu.memory_space<smem>>
    %c2_i32_131 = arith.constant 2 : i32
    %236 = tpu.dynamic_rotate %232 by %c2_i32_131 dim 1 : vector<8x128xf32>, i32 -> vector<8x128xf32>
    %cst_132 = arith.constant 0.000000e+00 : f32
    %237 = vector.broadcast %cst_132 : f32 to vector<8x128xf32>
    %238 = arith.select %227, %236, %237 : vector<8x128xi1>, vector<8x128xf32>
    %c126_i32_133 = arith.constant 126 : i32
    %239 = tpu.dynamic_rotate %232 by %c126_i32_133 dim 1 : vector<8x128xf32>, i32 -> vector<8x128xf32>
    %cst_134 = arith.constant 0.000000e+00 : f32
    %240 = vector.broadcast %cst_134 : f32 to vector<8x128xf32>
    %241 = arith.select %229, %239, %240 : vector<8x128xi1>, vector<8x128xf32>
    %242 = vector.broadcast %233 : f32 to vector<8x128xf32>
    %243 = arith.mulf %242, %238 : vector<8x128xf32>
    %244 = arith.addf %230, %243 : vector<8x128xf32>
    %245 = vector.broadcast %234 : f32 to vector<8x128xf32>
    %246 = arith.mulf %245, %232 : vector<8x128xf32>
    %247 = arith.addf %244, %246 : vector<8x128xf32>
    %248 = vector.broadcast %235 : f32 to vector<8x128xf32>
    %249 = arith.mulf %248, %241 : vector<8x128xf32>
    %250 = arith.addf %247, %249 : vector<8x128xf32>
    %c0_135 = arith.constant 0 : index
    %c8_136 = arith.constant 8 : index
    %c0_137 = arith.constant 0 : index
    %251 = vector.load %arg10[%c0_135, %c8_136, %c0_137] : memref<2x24x128xf32, #tpu.memory_space<vmem>>, vector<1x8x128xf32>
    %252 = vector.shape_cast %251 : vector<1x8x128xf32> to vector<8x128xf32>
    %c24 = arith.constant 24 : index
    %253 = memref.load %arg6[%c24] : memref<72xf32, #tpu.memory_space<smem>>
    %c26 = arith.constant 26 : index
    %254 = memref.load %arg6[%c26] : memref<72xf32, #tpu.memory_space<smem>>
    %c28 = arith.constant 28 : index
    %255 = memref.load %arg6[%c28] : memref<72xf32, #tpu.memory_space<smem>>
    %c2_i32_138 = arith.constant 2 : i32
    %256 = tpu.dynamic_rotate %252 by %c2_i32_138 dim 1 : vector<8x128xf32>, i32 -> vector<8x128xf32>
    %cst_139 = arith.constant 0.000000e+00 : f32
    %257 = vector.broadcast %cst_139 : f32 to vector<8x128xf32>
    %258 = arith.select %227, %256, %257 : vector<8x128xi1>, vector<8x128xf32>
    %c126_i32_140 = arith.constant 126 : i32
    %259 = tpu.dynamic_rotate %252 by %c126_i32_140 dim 1 : vector<8x128xf32>, i32 -> vector<8x128xf32>
    %cst_141 = arith.constant 0.000000e+00 : f32
    %260 = vector.broadcast %cst_141 : f32 to vector<8x128xf32>
    %261 = arith.select %229, %259, %260 : vector<8x128xi1>, vector<8x128xf32>
    %262 = vector.broadcast %253 : f32 to vector<8x128xf32>
    %263 = arith.mulf %262, %258 : vector<8x128xf32>
    %264 = arith.addf %250, %263 : vector<8x128xf32>
    %265 = vector.broadcast %254 : f32 to vector<8x128xf32>
    %266 = arith.mulf %265, %252 : vector<8x128xf32>
    %267 = arith.addf %264, %266 : vector<8x128xf32>
    %268 = vector.broadcast %255 : f32 to vector<8x128xf32>
    %269 = arith.mulf %268, %261 : vector<8x128xf32>
    %270 = arith.addf %267, %269 : vector<8x128xf32>
    %c0_142 = arith.constant 0 : index
    %c10_143 = arith.constant 10 : index
    %c0_144 = arith.constant 0 : index
    %271 = vector.load %arg10[%c0_142, %c10_143, %c0_144] : memref<2x24x128xf32, #tpu.memory_space<vmem>>, vector<1x8x128xf32>
    %272 = vector.shape_cast %271 : vector<1x8x128xf32> to vector<8x128xf32>
    %c30 = arith.constant 30 : index
    %273 = memref.load %arg6[%c30] : memref<72xf32, #tpu.memory_space<smem>>
    %c32 = arith.constant 32 : index
    %274 = memref.load %arg6[%c32] : memref<72xf32, #tpu.memory_space<smem>>
    %c34 = arith.constant 34 : index
    %275 = memref.load %arg6[%c34] : memref<72xf32, #tpu.memory_space<smem>>
    %c2_i32_145 = arith.constant 2 : i32
    %276 = tpu.dynamic_rotate %272 by %c2_i32_145 dim 1 : vector<8x128xf32>, i32 -> vector<8x128xf32>
    %cst_146 = arith.constant 0.000000e+00 : f32
    %277 = vector.broadcast %cst_146 : f32 to vector<8x128xf32>
    %278 = arith.select %227, %276, %277 : vector<8x128xi1>, vector<8x128xf32>
    %c126_i32_147 = arith.constant 126 : i32
    %279 = tpu.dynamic_rotate %272 by %c126_i32_147 dim 1 : vector<8x128xf32>, i32 -> vector<8x128xf32>
    %cst_148 = arith.constant 0.000000e+00 : f32
    %280 = vector.broadcast %cst_148 : f32 to vector<8x128xf32>
    %281 = arith.select %229, %279, %280 : vector<8x128xi1>, vector<8x128xf32>
    %282 = vector.broadcast %273 : f32 to vector<8x128xf32>
    %283 = arith.mulf %282, %278 : vector<8x128xf32>
    %284 = arith.addf %270, %283 : vector<8x128xf32>
    %285 = vector.broadcast %274 : f32 to vector<8x128xf32>
    %286 = arith.mulf %285, %272 : vector<8x128xf32>
    %287 = arith.addf %284, %286 : vector<8x128xf32>
    %288 = vector.broadcast %275 : f32 to vector<8x128xf32>
    %289 = arith.mulf %288, %281 : vector<8x128xf32>
    %290 = arith.addf %287, %289 : vector<8x128xf32>
    %c4_149 = arith.constant 4 : index
    %291 = memref.load %arg7[%c4_149] : memref<16xf32, #tpu.memory_space<smem>>
    %292 = vector.broadcast %291 : f32 to vector<8x128xf32>
    %293 = arith.mulf %292, %290 : vector<8x128xf32>
    %c0_150 = arith.constant 0 : index
    %c2_151 = arith.constant 2 : index
    %c0_152 = arith.constant 0 : index
    %c0_153 = arith.constant 0 : index
    %294 = vector.load %arg8[%c0_150, %c2_151, %c0_152, %c0_153] : memref<1x8x8x128xf32, #tpu.memory_space<vmem>>, vector<1x1x8x128xf32>
    %295 = vector.shape_cast %294 : vector<1x1x8x128xf32> to vector<8x128xf32>
    %296 = vector.shape_cast %293 : vector<8x128xf32> to vector<1x1x8x128xf32>
    tpu.vector_store %arg8[%c0_150, %c2_151, %c0_152, %c0_153], %296 {strides = array<i32>} : memref<1x8x8x128xf32, #tpu.memory_space<vmem>>, vector<1x1x8x128xf32>,
    %c6_154 = arith.constant 6 : index
    %297 = memref.load %arg7[%c6_154] : memref<16xf32, #tpu.memory_space<smem>>
    %298 = vector.broadcast %297 : f32 to vector<8x128xf32>
    %299 = arith.mulf %298, %290 : vector<8x128xf32>
    %c0_155 = arith.constant 0 : index
    %c3_156 = arith.constant 3 : index
    %c0_157 = arith.constant 0 : index
    %c0_158 = arith.constant 0 : index
    %300 = vector.load %arg8[%c0_155, %c3_156, %c0_157, %c0_158] : memref<1x8x8x128xf32, #tpu.memory_space<vmem>>, vector<1x1x8x128xf32>
    %301 = vector.shape_cast %300 : vector<1x1x8x128xf32> to vector<8x128xf32>
    %302 = vector.shape_cast %299 : vector<8x128xf32> to vector<1x1x8x128xf32>
    tpu.vector_store %arg8[%c0_155, %c3_156, %c0_157, %c0_158], %302 {strides = array<i32>} : memref<1x8x8x128xf32, #tpu.memory_space<vmem>>, vector<1x1x8x128xf32>,
    %cst_159 = arith.constant 0.000000e+00 : f32
    %303 = vector.broadcast %cst_159 : f32 to vector<8x128xf32>
    %c1_160 = arith.constant 1 : index
    %c6_161 = arith.constant 6 : index
    %c0_162 = arith.constant 0 : index
    %304 = vector.load %arg10[%c1_160, %c6_161, %c0_162] : memref<2x24x128xf32, #tpu.memory_space<vmem>>, vector<1x8x128xf32>
    %305 = vector.shape_cast %304 : vector<1x8x128xf32> to vector<8x128xf32>
    %c19 = arith.constant 19 : index
    %306 = memref.load %arg6[%c19] : memref<72xf32, #tpu.memory_space<smem>>
    %c21 = arith.constant 21 : index
    %307 = memref.load %arg6[%c21] : memref<72xf32, #tpu.memory_space<smem>>
    %c23 = arith.constant 23 : index
    %308 = memref.load %arg6[%c23] : memref<72xf32, #tpu.memory_space<smem>>
    %c2_i32_163 = arith.constant 2 : i32
    %309 = tpu.dynamic_rotate %305 by %c2_i32_163 dim 1 : vector<8x128xf32>, i32 -> vector<8x128xf32>
    %cst_164 = arith.constant 0.000000e+00 : f32
    %310 = vector.broadcast %cst_164 : f32 to vector<8x128xf32>
    %311 = arith.select %227, %309, %310 : vector<8x128xi1>, vector<8x128xf32>
    %c126_i32_165 = arith.constant 126 : i32
    %312 = tpu.dynamic_rotate %305 by %c126_i32_165 dim 1 : vector<8x128xf32>, i32 -> vector<8x128xf32>
    %cst_166 = arith.constant 0.000000e+00 : f32
    %313 = vector.broadcast %cst_166 : f32 to vector<8x128xf32>
    %314 = arith.select %229, %312, %313 : vector<8x128xi1>, vector<8x128xf32>
    %315 = vector.broadcast %306 : f32 to vector<8x128xf32>
    %316 = arith.mulf %315, %311 : vector<8x128xf32>
    %317 = arith.addf %303, %316 : vector<8x128xf32>
    %318 = vector.broadcast %307 : f32 to vector<8x128xf32>
    %319 = arith.mulf %318, %305 : vector<8x128xf32>
    %320 = arith.addf %317, %319 : vector<8x128xf32>
    %321 = vector.broadcast %308 : f32 to vector<8x128xf32>
    %322 = arith.mulf %321, %314 : vector<8x128xf32>
    %323 = arith.addf %320, %322 : vector<8x128xf32>
    %c1_167 = arith.constant 1 : index
    %c8_168 = arith.constant 8 : index
    %c0_169 = arith.constant 0 : index
    %324 = vector.load %arg10[%c1_167, %c8_168, %c0_169] : memref<2x24x128xf32, #tpu.memory_space<vmem>>, vector<1x8x128xf32>
    %325 = vector.shape_cast %324 : vector<1x8x128xf32> to vector<8x128xf32>
    %c25 = arith.constant 25 : index
    %326 = memref.load %arg6[%c25] : memref<72xf32, #tpu.memory_space<smem>>
    %c27 = arith.constant 27 : index
    %327 = memref.load %arg6[%c27] : memref<72xf32, #tpu.memory_space<smem>>
    %c29 = arith.constant 29 : index
    %328 = memref.load %arg6[%c29] : memref<72xf32, #tpu.memory_space<smem>>
    %c2_i32_170 = arith.constant 2 : i32
    %329 = tpu.dynamic_rotate %325 by %c2_i32_170 dim 1 : vector<8x128xf32>, i32 -> vector<8x128xf32>
    %cst_171 = arith.constant 0.000000e+00 : f32
    %330 = vector.broadcast %cst_171 : f32 to vector<8x128xf32>
    %331 = arith.select %227, %329, %330 : vector<8x128xi1>, vector<8x128xf32>
    %c126_i32_172 = arith.constant 126 : i32
    %332 = tpu.dynamic_rotate %325 by %c126_i32_172 dim 1 : vector<8x128xf32>, i32 -> vector<8x128xf32>
    %cst_173 = arith.constant 0.000000e+00 : f32
    %333 = vector.broadcast %cst_173 : f32 to vector<8x128xf32>
    %334 = arith.select %229, %332, %333 : vector<8x128xi1>, vector<8x128xf32>
    %335 = vector.broadcast %326 : f32 to vector<8x128xf32>
    %336 = arith.mulf %335, %331 : vector<8x128xf32>
    %337 = arith.addf %323, %336 : vector<8x128xf32>
    %338 = vector.broadcast %327 : f32 to vector<8x128xf32>
    %339 = arith.mulf %338, %325 : vector<8x128xf32>
    %340 = arith.addf %337, %339 : vector<8x128xf32>
    %341 = vector.broadcast %328 : f32 to vector<8x128xf32>
    %342 = arith.mulf %341, %334 : vector<8x128xf32>
    %343 = arith.addf %340, %342 : vector<8x128xf32>
    %c1_174 = arith.constant 1 : index
    %c10_175 = arith.constant 10 : index
    %c0_176 = arith.constant 0 : index
    %344 = vector.load %arg10[%c1_174, %c10_175, %c0_176] : memref<2x24x128xf32, #tpu.memory_space<vmem>>, vector<1x8x128xf32>
    %345 = vector.shape_cast %344 : vector<1x8x128xf32> to vector<8x128xf32>
    %c31 = arith.constant 31 : index
    %346 = memref.load %arg6[%c31] : memref<72xf32, #tpu.memory_space<smem>>
    %c33 = arith.constant 33 : index
    %347 = memref.load %arg6[%c33] : memref<72xf32, #tpu.memory_space<smem>>
    %c35 = arith.constant 35 : index
    %348 = memref.load %arg6[%c35] : memref<72xf32, #tpu.memory_space<smem>>
    %c2_i32_177 = arith.constant 2 : i32
    %349 = tpu.dynamic_rotate %345 by %c2_i32_177 dim 1 : vector<8x128xf32>, i32 -> vector<8x128xf32>
    %cst_178 = arith.constant 0.000000e+00 : f32
    %350 = vector.broadcast %cst_178 : f32 to vector<8x128xf32>
    %351 = arith.select %227, %349, %350 : vector<8x128xi1>, vector<8x128xf32>
    %c126_i32_179 = arith.constant 126 : i32
    %352 = tpu.dynamic_rotate %345 by %c126_i32_179 dim 1 : vector<8x128xf32>, i32 -> vector<8x128xf32>
    %cst_180 = arith.constant 0.000000e+00 : f32
    %353 = vector.broadcast %cst_180 : f32 to vector<8x128xf32>
    %354 = arith.select %229, %352, %353 : vector<8x128xi1>, vector<8x128xf32>
    %355 = vector.broadcast %346 : f32 to vector<8x128xf32>
    %356 = arith.mulf %355, %351 : vector<8x128xf32>
    %357 = arith.addf %343, %356 : vector<8x128xf32>
    %358 = vector.broadcast %347 : f32 to vector<8x128xf32>
    %359 = arith.mulf %358, %345 : vector<8x128xf32>
    %360 = arith.addf %357, %359 : vector<8x128xf32>
    %361 = vector.broadcast %348 : f32 to vector<8x128xf32>
    %362 = arith.mulf %361, %354 : vector<8x128xf32>
    %363 = arith.addf %360, %362 : vector<8x128xf32>
    %c5_181 = arith.constant 5 : index
    %364 = memref.load %arg7[%c5_181] : memref<16xf32, #tpu.memory_space<smem>>
    %365 = vector.broadcast %364 : f32 to vector<8x128xf32>
    %366 = arith.mulf %365, %363 : vector<8x128xf32>
    %c0_182 = arith.constant 0 : index
    %c2_183 = arith.constant 2 : index
    %c0_184 = arith.constant 0 : index
    %c0_185 = arith.constant 0 : index
    %367 = vector.load %arg8[%c0_182, %c2_183, %c0_184, %c0_185] : memref<1x8x8x128xf32, #tpu.memory_space<vmem>>, vector<1x1x8x128xf32>
    %368 = vector.shape_cast %367 : vector<1x1x8x128xf32> to vector<8x128xf32>
    %369 = arith.addf %368, %366 : vector<8x128xf32>
    %c0_186 = arith.constant 0 : index
    %c2_187 = arith.constant 2 : index
    %c0_188 = arith.constant 0 : index
    %c0_189 = arith.constant 0 : index
    %370 = vector.load %arg8[%c0_186, %c2_187, %c0_188, %c0_189] : memref<1x8x8x128xf32, #tpu.memory_space<vmem>>, vector<1x1x8x128xf32>
    %371 = vector.shape_cast %370 : vector<1x1x8x128xf32> to vector<8x128xf32>
    %372 = vector.shape_cast %369 : vector<8x128xf32> to vector<1x1x8x128xf32>
    tpu.vector_store %arg8[%c0_186, %c2_187, %c0_188, %c0_189], %372 {strides = array<i32>} : memref<1x8x8x128xf32, #tpu.memory_space<vmem>>, vector<1x1x8x128xf32>,
    %c7_190 = arith.constant 7 : index
    %373 = memref.load %arg7[%c7_190] : memref<16xf32, #tpu.memory_space<smem>>
    %374 = vector.broadcast %373 : f32 to vector<8x128xf32>
    %375 = arith.mulf %374, %363 : vector<8x128xf32>
    %c0_191 = arith.constant 0 : index
    %c3_192 = arith.constant 3 : index
    %c0_193 = arith.constant 0 : index
    %c0_194 = arith.constant 0 : index
    %376 = vector.load %arg8[%c0_191, %c3_192, %c0_193, %c0_194] : memref<1x8x8x128xf32, #tpu.memory_space<vmem>>, vector<1x1x8x128xf32>
    %377 = vector.shape_cast %376 : vector<1x1x8x128xf32> to vector<8x128xf32>
    %378 = arith.addf %377, %375 : vector<8x128xf32>
    %c0_195 = arith.constant 0 : index
    %c3_196 = arith.constant 3 : index
    %c0_197 = arith.constant 0 : index
    %c0_198 = arith.constant 0 : index
    %379 = vector.load %arg8[%c0_195, %c3_196, %c0_197, %c0_198] : memref<1x8x8x128xf32, #tpu.memory_space<vmem>>, vector<1x1x8x128xf32>
    %380 = vector.shape_cast %379 : vector<1x1x8x128xf32> to vector<8x128xf32>
    %381 = vector.shape_cast %378 : vector<8x128xf32> to vector<1x1x8x128xf32>
    tpu.vector_store %arg8[%c0_195, %c3_196, %c0_197, %c0_198], %381 {strides = array<i32>} : memref<1x8x8x128xf32, #tpu.memory_space<vmem>>, vector<1x1x8x128xf32>,
    %c4_i32 = arith.constant 4 : i32
    %382 = vector.broadcast %c4_i32 : i32 to vector<8x128xi32>
    %383 = arith.cmpi sge, %69, %382 : vector<8x128xi32>
    %c124_i32 = arith.constant 124 : i32
    %384 = vector.broadcast %c124_i32 : i32 to vector<8x128xi32>
    %385 = arith.cmpi slt, %69, %384 : vector<8x128xi32>
    %cst_199 = arith.constant 0.000000e+00 : f32
    %386 = vector.broadcast %cst_199 : f32 to vector<8x128xf32>
    %c0_200 = arith.constant 0 : index
    %c4_201 = arith.constant 4 : index
    %c0_202 = arith.constant 0 : index
    %387 = vector.load %arg10[%c0_200, %c4_201, %c0_202] : memref<2x24x128xf32, #tpu.memory_space<vmem>>, vector<1x8x128xf32>
    %388 = vector.shape_cast %387 : vector<1x8x128xf32> to vector<8x128xf32>
    %c36 = arith.constant 36 : index
    %389 = memref.load %arg6[%c36] : memref<72xf32, #tpu.memory_space<smem>>
    %c38 = arith.constant 38 : index
    %390 = memref.load %arg6[%c38] : memref<72xf32, #tpu.memory_space<smem>>
    %c40 = arith.constant 40 : index
    %391 = memref.load %arg6[%c40] : memref<72xf32, #tpu.memory_space<smem>>
    %c4_i32_203 = arith.constant 4 : i32
    %392 = tpu.dynamic_rotate %388 by %c4_i32_203 dim 1 : vector<8x128xf32>, i32 -> vector<8x128xf32>
    %cst_204 = arith.constant 0.000000e+00 : f32
    %393 = vector.broadcast %cst_204 : f32 to vector<8x128xf32>
    %394 = arith.select %383, %392, %393 : vector<8x128xi1>, vector<8x128xf32>
    %c124_i32_205 = arith.constant 124 : i32
    %395 = tpu.dynamic_rotate %388 by %c124_i32_205 dim 1 : vector<8x128xf32>, i32 -> vector<8x128xf32>
    %cst_206 = arith.constant 0.000000e+00 : f32
    %396 = vector.broadcast %cst_206 : f32 to vector<8x128xf32>
    %397 = arith.select %385, %395, %396 : vector<8x128xi1>, vector<8x128xf32>
    %398 = vector.broadcast %389 : f32 to vector<8x128xf32>
    %399 = arith.mulf %398, %394 : vector<8x128xf32>
    %400 = arith.addf %386, %399 : vector<8x128xf32>
    %401 = vector.broadcast %390 : f32 to vector<8x128xf32>
    %402 = arith.mulf %401, %388 : vector<8x128xf32>
    %403 = arith.addf %400, %402 : vector<8x128xf32>
    %404 = vector.broadcast %391 : f32 to vector<8x128xf32>
    %405 = arith.mulf %404, %397 : vector<8x128xf32>
    %406 = arith.addf %403, %405 : vector<8x128xf32>
    %c0_207 = arith.constant 0 : index
    %c8_208 = arith.constant 8 : index
    %c0_209 = arith.constant 0 : index
    %407 = vector.load %arg10[%c0_207, %c8_208, %c0_209] : memref<2x24x128xf32, #tpu.memory_space<vmem>>, vector<1x8x128xf32>
    %408 = vector.shape_cast %407 : vector<1x8x128xf32> to vector<8x128xf32>
    %c42 = arith.constant 42 : index
    %409 = memref.load %arg6[%c42] : memref<72xf32, #tpu.memory_space<smem>>
    %c44 = arith.constant 44 : index
    %410 = memref.load %arg6[%c44] : memref<72xf32, #tpu.memory_space<smem>>
    %c46 = arith.constant 46 : index
    %411 = memref.load %arg6[%c46] : memref<72xf32, #tpu.memory_space<smem>>
    %c4_i32_210 = arith.constant 4 : i32
    %412 = tpu.dynamic_rotate %408 by %c4_i32_210 dim 1 : vector<8x128xf32>, i32 -> vector<8x128xf32>
    %cst_211 = arith.constant 0.000000e+00 : f32
    %413 = vector.broadcast %cst_211 : f32 to vector<8x128xf32>
    %414 = arith.select %383, %412, %413 : vector<8x128xi1>, vector<8x128xf32>
    %c124_i32_212 = arith.constant 124 : i32
    %415 = tpu.dynamic_rotate %408 by %c124_i32_212 dim 1 : vector<8x128xf32>, i32 -> vector<8x128xf32>
    %cst_213 = arith.constant 0.000000e+00 : f32
    %416 = vector.broadcast %cst_213 : f32 to vector<8x128xf32>
    %417 = arith.select %385, %415, %416 : vector<8x128xi1>, vector<8x128xf32>
    %418 = vector.broadcast %409 : f32 to vector<8x128xf32>
    %419 = arith.mulf %418, %414 : vector<8x128xf32>
    %420 = arith.addf %406, %419 : vector<8x128xf32>
    %421 = vector.broadcast %410 : f32 to vector<8x128xf32>
    %422 = arith.mulf %421, %408 : vector<8x128xf32>
    %423 = arith.addf %420, %422 : vector<8x128xf32>
    %424 = vector.broadcast %411 : f32 to vector<8x128xf32>
    %425 = arith.mulf %424, %417 : vector<8x128xf32>
    %426 = arith.addf %423, %425 : vector<8x128xf32>
    %c0_214 = arith.constant 0 : index
    %c12_215 = arith.constant 12 : index
    %c0_216 = arith.constant 0 : index
    %427 = vector.load %arg10[%c0_214, %c12_215, %c0_216] : memref<2x24x128xf32, #tpu.memory_space<vmem>>, vector<1x8x128xf32>
    %428 = vector.shape_cast %427 : vector<1x8x128xf32> to vector<8x128xf32>
    %c48 = arith.constant 48 : index
    %429 = memref.load %arg6[%c48] : memref<72xf32, #tpu.memory_space<smem>>
    %c50 = arith.constant 50 : index
    %430 = memref.load %arg6[%c50] : memref<72xf32, #tpu.memory_space<smem>>
    %c52 = arith.constant 52 : index
    %431 = memref.load %arg6[%c52] : memref<72xf32, #tpu.memory_space<smem>>
    %c4_i32_217 = arith.constant 4 : i32
    %432 = tpu.dynamic_rotate %428 by %c4_i32_217 dim 1 : vector<8x128xf32>, i32 -> vector<8x128xf32>
    %cst_218 = arith.constant 0.000000e+00 : f32
    %433 = vector.broadcast %cst_218 : f32 to vector<8x128xf32>
    %434 = arith.select %383, %432, %433 : vector<8x128xi1>, vector<8x128xf32>
    %c124_i32_219 = arith.constant 124 : i32
    %435 = tpu.dynamic_rotate %428 by %c124_i32_219 dim 1 : vector<8x128xf32>, i32 -> vector<8x128xf32>
    %cst_220 = arith.constant 0.000000e+00 : f32
    %436 = vector.broadcast %cst_220 : f32 to vector<8x128xf32>
    %437 = arith.select %385, %435, %436 : vector<8x128xi1>, vector<8x128xf32>
    %438 = vector.broadcast %429 : f32 to vector<8x128xf32>
    %439 = arith.mulf %438, %434 : vector<8x128xf32>
    %440 = arith.addf %426, %439 : vector<8x128xf32>
    %441 = vector.broadcast %430 : f32 to vector<8x128xf32>
    %442 = arith.mulf %441, %428 : vector<8x128xf32>
    %443 = arith.addf %440, %442 : vector<8x128xf32>
    %444 = vector.broadcast %431 : f32 to vector<8x128xf32>
    %445 = arith.mulf %444, %437 : vector<8x128xf32>
    %446 = arith.addf %443, %445 : vector<8x128xf32>
    %c8_221 = arith.constant 8 : index
    %447 = memref.load %arg7[%c8_221] : memref<16xf32, #tpu.memory_space<smem>>
    %448 = vector.broadcast %447 : f32 to vector<8x128xf32>
    %449 = arith.mulf %448, %446 : vector<8x128xf32>
    %c0_222 = arith.constant 0 : index
    %c4_223 = arith.constant 4 : index
    %c0_224 = arith.constant 0 : index
    %c0_225 = arith.constant 0 : index
    %450 = vector.load %arg8[%c0_222, %c4_223, %c0_224, %c0_225] : memref<1x8x8x128xf32, #tpu.memory_space<vmem>>, vector<1x1x8x128xf32>
    %451 = vector.shape_cast %450 : vector<1x1x8x128xf32> to vector<8x128xf32>
    %452 = vector.shape_cast %449 : vector<8x128xf32> to vector<1x1x8x128xf32>
    tpu.vector_store %arg8[%c0_222, %c4_223, %c0_224, %c0_225], %452 {strides = array<i32>} : memref<1x8x8x128xf32, #tpu.memory_space<vmem>>, vector<1x1x8x128xf32>,
    %c10_226 = arith.constant 10 : index
    %453 = memref.load %arg7[%c10_226] : memref<16xf32, #tpu.memory_space<smem>>
    %454 = vector.broadcast %453 : f32 to vector<8x128xf32>
    %455 = arith.mulf %454, %446 : vector<8x128xf32>
    %c0_227 = arith.constant 0 : index
    %c5_228 = arith.constant 5 : index
    %c0_229 = arith.constant 0 : index
    %c0_230 = arith.constant 0 : index
    %456 = vector.load %arg8[%c0_227, %c5_228, %c0_229, %c0_230] : memref<1x8x8x128xf32, #tpu.memory_space<vmem>>, vector<1x1x8x128xf32>
    %457 = vector.shape_cast %456 : vector<1x1x8x128xf32> to vector<8x128xf32>
    %458 = vector.shape_cast %455 : vector<8x128xf32> to vector<1x1x8x128xf32>
    tpu.vector_store %arg8[%c0_227, %c5_228, %c0_229, %c0_230], %458 {strides = array<i32>} : memref<1x8x8x128xf32, #tpu.memory_space<vmem>>, vector<1x1x8x128xf32>,
    %cst_231 = arith.constant 0.000000e+00 : f32
    %459 = vector.broadcast %cst_231 : f32 to vector<8x128xf32>
    %c1_232 = arith.constant 1 : index
    %c4_233 = arith.constant 4 : index
    %c0_234 = arith.constant 0 : index
    %460 = vector.load %arg10[%c1_232, %c4_233, %c0_234] : memref<2x24x128xf32, #tpu.memory_space<vmem>>, vector<1x8x128xf32>
    %461 = vector.shape_cast %460 : vector<1x8x128xf32> to vector<8x128xf32>
    %c37 = arith.constant 37 : index
    %462 = memref.load %arg6[%c37] : memref<72xf32, #tpu.memory_space<smem>>
    %c39 = arith.constant 39 : index
    %463 = memref.load %arg6[%c39] : memref<72xf32, #tpu.memory_space<smem>>
    %c41 = arith.constant 41 : index
    %464 = memref.load %arg6[%c41] : memref<72xf32, #tpu.memory_space<smem>>
    %c4_i32_235 = arith.constant 4 : i32
    %465 = tpu.dynamic_rotate %461 by %c4_i32_235 dim 1 : vector<8x128xf32>, i32 -> vector<8x128xf32>
    %cst_236 = arith.constant 0.000000e+00 : f32
    %466 = vector.broadcast %cst_236 : f32 to vector<8x128xf32>
    %467 = arith.select %383, %465, %466 : vector<8x128xi1>, vector<8x128xf32>
    %c124_i32_237 = arith.constant 124 : i32
    %468 = tpu.dynamic_rotate %461 by %c124_i32_237 dim 1 : vector<8x128xf32>, i32 -> vector<8x128xf32>
    %cst_238 = arith.constant 0.000000e+00 : f32
    %469 = vector.broadcast %cst_238 : f32 to vector<8x128xf32>
    %470 = arith.select %385, %468, %469 : vector<8x128xi1>, vector<8x128xf32>
    %471 = vector.broadcast %462 : f32 to vector<8x128xf32>
    %472 = arith.mulf %471, %467 : vector<8x128xf32>
    %473 = arith.addf %459, %472 : vector<8x128xf32>
    %474 = vector.broadcast %463 : f32 to vector<8x128xf32>
    %475 = arith.mulf %474, %461 : vector<8x128xf32>
    %476 = arith.addf %473, %475 : vector<8x128xf32>
    %477 = vector.broadcast %464 : f32 to vector<8x128xf32>
    %478 = arith.mulf %477, %470 : vector<8x128xf32>
    %479 = arith.addf %476, %478 : vector<8x128xf32>
    %c1_239 = arith.constant 1 : index
    %c8_240 = arith.constant 8 : index
    %c0_241 = arith.constant 0 : index
    %480 = vector.load %arg10[%c1_239, %c8_240, %c0_241] : memref<2x24x128xf32, #tpu.memory_space<vmem>>, vector<1x8x128xf32>
    %481 = vector.shape_cast %480 : vector<1x8x128xf32> to vector<8x128xf32>
    %c43 = arith.constant 43 : index
    %482 = memref.load %arg6[%c43] : memref<72xf32, #tpu.memory_space<smem>>
    %c45 = arith.constant 45 : index
    %483 = memref.load %arg6[%c45] : memref<72xf32, #tpu.memory_space<smem>>
    %c47 = arith.constant 47 : index
    %484 = memref.load %arg6[%c47] : memref<72xf32, #tpu.memory_space<smem>>
    %c4_i32_242 = arith.constant 4 : i32
    %485 = tpu.dynamic_rotate %481 by %c4_i32_242 dim 1 : vector<8x128xf32>, i32 -> vector<8x128xf32>
    %cst_243 = arith.constant 0.000000e+00 : f32
    %486 = vector.broadcast %cst_243 : f32 to vector<8x128xf32>
    %487 = arith.select %383, %485, %486 : vector<8x128xi1>, vector<8x128xf32>
    %c124_i32_244 = arith.constant 124 : i32
    %488 = tpu.dynamic_rotate %481 by %c124_i32_244 dim 1 : vector<8x128xf32>, i32 -> vector<8x128xf32>
    %cst_245 = arith.constant 0.000000e+00 : f32
    %489 = vector.broadcast %cst_245 : f32 to vector<8x128xf32>
    %490 = arith.select %385, %488, %489 : vector<8x128xi1>, vector<8x128xf32>
    %491 = vector.broadcast %482 : f32 to vector<8x128xf32>
    %492 = arith.mulf %491, %487 : vector<8x128xf32>
    %493 = arith.addf %479, %492 : vector<8x128xf32>
    %494 = vector.broadcast %483 : f32 to vector<8x128xf32>
    %495 = arith.mulf %494, %481 : vector<8x128xf32>
    %496 = arith.addf %493, %495 : vector<8x128xf32>
    %497 = vector.broadcast %484 : f32 to vector<8x128xf32>
    %498 = arith.mulf %497, %490 : vector<8x128xf32>
    %499 = arith.addf %496, %498 : vector<8x128xf32>
    %c1_246 = arith.constant 1 : index
    %c12_247 = arith.constant 12 : index
    %c0_248 = arith.constant 0 : index
    %500 = vector.load %arg10[%c1_246, %c12_247, %c0_248] : memref<2x24x128xf32, #tpu.memory_space<vmem>>, vector<1x8x128xf32>
    %501 = vector.shape_cast %500 : vector<1x8x128xf32> to vector<8x128xf32>
    %c49 = arith.constant 49 : index
    %502 = memref.load %arg6[%c49] : memref<72xf32, #tpu.memory_space<smem>>
    %c51 = arith.constant 51 : index
    %503 = memref.load %arg6[%c51] : memref<72xf32, #tpu.memory_space<smem>>
    %c53 = arith.constant 53 : index
    %504 = memref.load %arg6[%c53] : memref<72xf32, #tpu.memory_space<smem>>
    %c4_i32_249 = arith.constant 4 : i32
    %505 = tpu.dynamic_rotate %501 by %c4_i32_249 dim 1 : vector<8x128xf32>, i32 -> vector<8x128xf32>
    %cst_250 = arith.constant 0.000000e+00 : f32
    %506 = vector.broadcast %cst_250 : f32 to vector<8x128xf32>
    %507 = arith.select %383, %505, %506 : vector<8x128xi1>, vector<8x128xf32>
    %c124_i32_251 = arith.constant 124 : i32
    %508 = tpu.dynamic_rotate %501 by %c124_i32_251 dim 1 : vector<8x128xf32>, i32 -> vector<8x128xf32>
    %cst_252 = arith.constant 0.000000e+00 : f32
    %509 = vector.broadcast %cst_252 : f32 to vector<8x128xf32>
    %510 = arith.select %385, %508, %509 : vector<8x128xi1>, vector<8x128xf32>
    %511 = vector.broadcast %502 : f32 to vector<8x128xf32>
    %512 = arith.mulf %511, %507 : vector<8x128xf32>
    %513 = arith.addf %499, %512 : vector<8x128xf32>
    %514 = vector.broadcast %503 : f32 to vector<8x128xf32>
    %515 = arith.mulf %514, %501 : vector<8x128xf32>
    %516 = arith.addf %513, %515 : vector<8x128xf32>
    %517 = vector.broadcast %504 : f32 to vector<8x128xf32>
    %518 = arith.mulf %517, %510 : vector<8x128xf32>
    %519 = arith.addf %516, %518 : vector<8x128xf32>
    %c9_253 = arith.constant 9 : index
    %520 = memref.load %arg7[%c9_253] : memref<16xf32, #tpu.memory_space<smem>>
    %521 = vector.broadcast %520 : f32 to vector<8x128xf32>
    %522 = arith.mulf %521, %519 : vector<8x128xf32>
    %c0_254 = arith.constant 0 : index
    %c4_255 = arith.constant 4 : index
    %c0_256 = arith.constant 0 : index
    %c0_257 = arith.constant 0 : index
    %523 = vector.load %arg8[%c0_254, %c4_255, %c0_256, %c0_257] : memref<1x8x8x128xf32, #tpu.memory_space<vmem>>, vector<1x1x8x128xf32>
    %524 = vector.shape_cast %523 : vector<1x1x8x128xf32> to vector<8x128xf32>
    %525 = arith.addf %524, %522 : vector<8x128xf32>
    %c0_258 = arith.constant 0 : index
    %c4_259 = arith.constant 4 : index
    %c0_260 = arith.constant 0 : index
    %c0_261 = arith.constant 0 : index
    %526 = vector.load %arg8[%c0_258, %c4_259, %c0_260, %c0_261] : memref<1x8x8x128xf32, #tpu.memory_space<vmem>>, vector<1x1x8x128xf32>
    %527 = vector.shape_cast %526 : vector<1x1x8x128xf32> to vector<8x128xf32>
    %528 = vector.shape_cast %525 : vector<8x128xf32> to vector<1x1x8x128xf32>
    tpu.vector_store %arg8[%c0_258, %c4_259, %c0_260, %c0_261], %528 {strides = array<i32>} : memref<1x8x8x128xf32, #tpu.memory_space<vmem>>, vector<1x1x8x128xf32>,
    %c11_262 = arith.constant 11 : index
    %529 = memref.load %arg7[%c11_262] : memref<16xf32, #tpu.memory_space<smem>>
    %530 = vector.broadcast %529 : f32 to vector<8x128xf32>
    %531 = arith.mulf %530, %519 : vector<8x128xf32>
    %c0_263 = arith.constant 0 : index
    %c5_264 = arith.constant 5 : index
    %c0_265 = arith.constant 0 : index
    %c0_266 = arith.constant 0 : index
    %532 = vector.load %arg8[%c0_263, %c5_264, %c0_265, %c0_266] : memref<1x8x8x128xf32, #tpu.memory_space<vmem>>, vector<1x1x8x128xf32>
    %533 = vector.shape_cast %532 : vector<1x1x8x128xf32> to vector<8x128xf32>
    %534 = arith.addf %533, %531 : vector<8x128xf32>
    %c0_267 = arith.constant 0 : index
    %c5_268 = arith.constant 5 : index
    %c0_269 = arith.constant 0 : index
    %c0_270 = arith.constant 0 : index
    %535 = vector.load %arg8[%c0_267, %c5_268, %c0_269, %c0_270] : memref<1x8x8x128xf32, #tpu.memory_space<vmem>>, vector<1x1x8x128xf32>
    %536 = vector.shape_cast %535 : vector<1x1x8x128xf32> to vector<8x128xf32>
    %537 = vector.shape_cast %534 : vector<8x128xf32> to vector<1x1x8x128xf32>
    tpu.vector_store %arg8[%c0_267, %c5_268, %c0_269, %c0_270], %537 {strides = array<i32>} : memref<1x8x8x128xf32, #tpu.memory_space<vmem>>, vector<1x1x8x128xf32>,
    %c8_i32 = arith.constant 8 : i32
    %538 = vector.broadcast %c8_i32 : i32 to vector<8x128xi32>
    %539 = arith.cmpi sge, %69, %538 : vector<8x128xi32>
    %c120_i32 = arith.constant 120 : i32
    %540 = vector.broadcast %c120_i32 : i32 to vector<8x128xi32>
    %541 = arith.cmpi slt, %69, %540 : vector<8x128xi32>
    %cst_271 = arith.constant 0.000000e+00 : f32
    %542 = vector.broadcast %cst_271 : f32 to vector<8x128xf32>
    %c0_272 = arith.constant 0 : index
    %c0_273 = arith.constant 0 : index
    %c0_274 = arith.constant 0 : index
    %543 = vector.load %arg10[%c0_272, %c0_273, %c0_274] : memref<2x24x128xf32, #tpu.memory_space<vmem>>, vector<1x8x128xf32>
    %544 = vector.shape_cast %543 : vector<1x8x128xf32> to vector<8x128xf32>
    %c54 = arith.constant 54 : index
    %545 = memref.load %arg6[%c54] : memref<72xf32, #tpu.memory_space<smem>>
    %c56 = arith.constant 56 : index
    %546 = memref.load %arg6[%c56] : memref<72xf32, #tpu.memory_space<smem>>
    %c58 = arith.constant 58 : index
    %547 = memref.load %arg6[%c58] : memref<72xf32, #tpu.memory_space<smem>>
    %c8_i32_275 = arith.constant 8 : i32
    %548 = tpu.dynamic_rotate %544 by %c8_i32_275 dim 1 : vector<8x128xf32>, i32 -> vector<8x128xf32>
    %cst_276 = arith.constant 0.000000e+00 : f32
    %549 = vector.broadcast %cst_276 : f32 to vector<8x128xf32>
    %550 = arith.select %539, %548, %549 : vector<8x128xi1>, vector<8x128xf32>
    %c120_i32_277 = arith.constant 120 : i32
    %551 = tpu.dynamic_rotate %544 by %c120_i32_277 dim 1 : vector<8x128xf32>, i32 -> vector<8x128xf32>
    %cst_278 = arith.constant 0.000000e+00 : f32
    %552 = vector.broadcast %cst_278 : f32 to vector<8x128xf32>
    %553 = arith.select %541, %551, %552 : vector<8x128xi1>, vector<8x128xf32>
    %554 = vector.broadcast %545 : f32 to vector<8x128xf32>
    %555 = arith.mulf %554, %550 : vector<8x128xf32>
    %556 = arith.addf %542, %555 : vector<8x128xf32>
    %557 = vector.broadcast %546 : f32 to vector<8x128xf32>
    %558 = arith.mulf %557, %544 : vector<8x128xf32>
    %559 = arith.addf %556, %558 : vector<8x128xf32>
    %560 = vector.broadcast %547 : f32 to vector<8x128xf32>
    %561 = arith.mulf %560, %553 : vector<8x128xf32>
    %562 = arith.addf %559, %561 : vector<8x128xf32>
    %c0_279 = arith.constant 0 : index
    %c8_280 = arith.constant 8 : index
    %c0_281 = arith.constant 0 : index
    %563 = vector.load %arg10[%c0_279, %c8_280, %c0_281] : memref<2x24x128xf32, #tpu.memory_space<vmem>>, vector<1x8x128xf32>
    %564 = vector.shape_cast %563 : vector<1x8x128xf32> to vector<8x128xf32>
    %c60 = arith.constant 60 : index
    %565 = memref.load %arg6[%c60] : memref<72xf32, #tpu.memory_space<smem>>
    %c62 = arith.constant 62 : index
    %566 = memref.load %arg6[%c62] : memref<72xf32, #tpu.memory_space<smem>>
    %c64 = arith.constant 64 : index
    %567 = memref.load %arg6[%c64] : memref<72xf32, #tpu.memory_space<smem>>
    %c8_i32_282 = arith.constant 8 : i32
    %568 = tpu.dynamic_rotate %564 by %c8_i32_282 dim 1 : vector<8x128xf32>, i32 -> vector<8x128xf32>
    %cst_283 = arith.constant 0.000000e+00 : f32
    %569 = vector.broadcast %cst_283 : f32 to vector<8x128xf32>
    %570 = arith.select %539, %568, %569 : vector<8x128xi1>, vector<8x128xf32>
    %c120_i32_284 = arith.constant 120 : i32
    %571 = tpu.dynamic_rotate %564 by %c120_i32_284 dim 1 : vector<8x128xf32>, i32 -> vector<8x128xf32>
    %cst_285 = arith.constant 0.000000e+00 : f32
    %572 = vector.broadcast %cst_285 : f32 to vector<8x128xf32>
    %573 = arith.select %541, %571, %572 : vector<8x128xi1>, vector<8x128xf32>
    %574 = vector.broadcast %565 : f32 to vector<8x128xf32>
    %575 = arith.mulf %574, %570 : vector<8x128xf32>
    %576 = arith.addf %562, %575 : vector<8x128xf32>
    %577 = vector.broadcast %566 : f32 to vector<8x128xf32>
    %578 = arith.mulf %577, %564 : vector<8x128xf32>
    %579 = arith.addf %576, %578 : vector<8x128xf32>
    %580 = vector.broadcast %567 : f32 to vector<8x128xf32>
    %581 = arith.mulf %580, %573 : vector<8x128xf32>
    %582 = arith.addf %579, %581 : vector<8x128xf32>
    %c0_286 = arith.constant 0 : index
    %c16_287 = arith.constant 16 : index
    %c0_288 = arith.constant 0 : index
    %583 = vector.load %arg10[%c0_286, %c16_287, %c0_288] : memref<2x24x128xf32, #tpu.memory_space<vmem>>, vector<1x8x128xf32>
    %584 = vector.shape_cast %583 : vector<1x8x128xf32> to vector<8x128xf32>
    %c66 = arith.constant 66 : index
    %585 = memref.load %arg6[%c66] : memref<72xf32, #tpu.memory_space<smem>>
    %c68 = arith.constant 68 : index
    %586 = memref.load %arg6[%c68] : memref<72xf32, #tpu.memory_space<smem>>
    %c70 = arith.constant 70 : index
    %587 = memref.load %arg6[%c70] : memref<72xf32, #tpu.memory_space<smem>>
    %c8_i32_289 = arith.constant 8 : i32
    %588 = tpu.dynamic_rotate %584 by %c8_i32_289 dim 1 : vector<8x128xf32>, i32 -> vector<8x128xf32>
    %cst_290 = arith.constant 0.000000e+00 : f32
    %589 = vector.broadcast %cst_290 : f32 to vector<8x128xf32>
    %590 = arith.select %539, %588, %589 : vector<8x128xi1>, vector<8x128xf32>
    %c120_i32_291 = arith.constant 120 : i32
    %591 = tpu.dynamic_rotate %584 by %c120_i32_291 dim 1 : vector<8x128xf32>, i32 -> vector<8x128xf32>
    %cst_292 = arith.constant 0.000000e+00 : f32
    %592 = vector.broadcast %cst_292 : f32 to vector<8x128xf32>
    %593 = arith.select %541, %591, %592 : vector<8x128xi1>, vector<8x128xf32>
    %594 = vector.broadcast %585 : f32 to vector<8x128xf32>
    %595 = arith.mulf %594, %590 : vector<8x128xf32>
    %596 = arith.addf %582, %595 : vector<8x128xf32>
    %597 = vector.broadcast %586 : f32 to vector<8x128xf32>
    %598 = arith.mulf %597, %584 : vector<8x128xf32>
    %599 = arith.addf %596, %598 : vector<8x128xf32>
    %600 = vector.broadcast %587 : f32 to vector<8x128xf32>
    %601 = arith.mulf %600, %593 : vector<8x128xf32>
    %602 = arith.addf %599, %601 : vector<8x128xf32>
    %c12_293 = arith.constant 12 : index
    %603 = memref.load %arg7[%c12_293] : memref<16xf32, #tpu.memory_space<smem>>
    %604 = vector.broadcast %603 : f32 to vector<8x128xf32>
    %605 = arith.mulf %604, %602 : vector<8x128xf32>
    %c0_294 = arith.constant 0 : index
    %c6_295 = arith.constant 6 : index
    %c0_296 = arith.constant 0 : index
    %c0_297 = arith.constant 0 : index
    %606 = vector.load %arg8[%c0_294, %c6_295, %c0_296, %c0_297] : memref<1x8x8x128xf32, #tpu.memory_space<vmem>>, vector<1x1x8x128xf32>
    %607 = vector.shape_cast %606 : vector<1x1x8x128xf32> to vector<8x128xf32>
    %608 = vector.shape_cast %605 : vector<8x128xf32> to vector<1x1x8x128xf32>
    tpu.vector_store %arg8[%c0_294, %c6_295, %c0_296, %c0_297], %608 {strides = array<i32>} : memref<1x8x8x128xf32, #tpu.memory_space<vmem>>, vector<1x1x8x128xf32>,
    %c14_298 = arith.constant 14 : index
    %609 = memref.load %arg7[%c14_298] : memref<16xf32, #tpu.memory_space<smem>>
    %610 = vector.broadcast %609 : f32 to vector<8x128xf32>
    %611 = arith.mulf %610, %602 : vector<8x128xf32>
    %c0_299 = arith.constant 0 : index
    %c7_300 = arith.constant 7 : index
    %c0_301 = arith.constant 0 : index
    %c0_302 = arith.constant 0 : index
    %612 = vector.load %arg8[%c0_299, %c7_300, %c0_301, %c0_302] : memref<1x8x8x128xf32, #tpu.memory_space<vmem>>, vector<1x1x8x128xf32>
    %613 = vector.shape_cast %612 : vector<1x1x8x128xf32> to vector<8x128xf32>
    %614 = vector.shape_cast %611 : vector<8x128xf32> to vector<1x1x8x128xf32>
    tpu.vector_store %arg8[%c0_299, %c7_300, %c0_301, %c0_302], %614 {strides = array<i32>} : memref<1x8x8x128xf32, #tpu.memory_space<vmem>>, vector<1x1x8x128xf32>,
    %cst_303 = arith.constant 0.000000e+00 : f32
    %615 = vector.broadcast %cst_303 : f32 to vector<8x128xf32>
    %c1_304 = arith.constant 1 : index
    %c0_305 = arith.constant 0 : index
    %c0_306 = arith.constant 0 : index
    %616 = vector.load %arg10[%c1_304, %c0_305, %c0_306] : memref<2x24x128xf32, #tpu.memory_space<vmem>>, vector<1x8x128xf32>
    %617 = vector.shape_cast %616 : vector<1x8x128xf32> to vector<8x128xf32>
    %c55 = arith.constant 55 : index
    %618 = memref.load %arg6[%c55] : memref<72xf32, #tpu.memory_space<smem>>
    %c57 = arith.constant 57 : index
    %619 = memref.load %arg6[%c57] : memref<72xf32, #tpu.memory_space<smem>>
    %c59 = arith.constant 59 : index
    %620 = memref.load %arg6[%c59] : memref<72xf32, #tpu.memory_space<smem>>
    %c8_i32_307 = arith.constant 8 : i32
    %621 = tpu.dynamic_rotate %617 by %c8_i32_307 dim 1 : vector<8x128xf32>, i32 -> vector<8x128xf32>
    %cst_308 = arith.constant 0.000000e+00 : f32
    %622 = vector.broadcast %cst_308 : f32 to vector<8x128xf32>
    %623 = arith.select %539, %621, %622 : vector<8x128xi1>, vector<8x128xf32>
    %c120_i32_309 = arith.constant 120 : i32
    %624 = tpu.dynamic_rotate %617 by %c120_i32_309 dim 1 : vector<8x128xf32>, i32 -> vector<8x128xf32>
    %cst_310 = arith.constant 0.000000e+00 : f32
    %625 = vector.broadcast %cst_310 : f32 to vector<8x128xf32>
    %626 = arith.select %541, %624, %625 : vector<8x128xi1>, vector<8x128xf32>
    %627 = vector.broadcast %618 : f32 to vector<8x128xf32>
    %628 = arith.mulf %627, %623 : vector<8x128xf32>
    %629 = arith.addf %615, %628 : vector<8x128xf32>
    %630 = vector.broadcast %619 : f32 to vector<8x128xf32>
    %631 = arith.mulf %630, %617 : vector<8x128xf32>
    %632 = arith.addf %629, %631 : vector<8x128xf32>
    %633 = vector.broadcast %620 : f32 to vector<8x128xf32>
    %634 = arith.mulf %633, %626 : vector<8x128xf32>
    %635 = arith.addf %632, %634 : vector<8x128xf32>
    %c1_311 = arith.constant 1 : index
    %c8_312 = arith.constant 8 : index
    %c0_313 = arith.constant 0 : index
    %636 = vector.load %arg10[%c1_311, %c8_312, %c0_313] : memref<2x24x128xf32, #tpu.memory_space<vmem>>, vector<1x8x128xf32>
    %637 = vector.shape_cast %636 : vector<1x8x128xf32> to vector<8x128xf32>
    %c61 = arith.constant 61 : index
    %638 = memref.load %arg6[%c61] : memref<72xf32, #tpu.memory_space<smem>>
    %c63 = arith.constant 63 : index
    %639 = memref.load %arg6[%c63] : memref<72xf32, #tpu.memory_space<smem>>
    %c65 = arith.constant 65 : index
    %640 = memref.load %arg6[%c65] : memref<72xf32, #tpu.memory_space<smem>>
    %c8_i32_314 = arith.constant 8 : i32
    %641 = tpu.dynamic_rotate %637 by %c8_i32_314 dim 1 : vector<8x128xf32>, i32 -> vector<8x128xf32>
    %cst_315 = arith.constant 0.000000e+00 : f32
    %642 = vector.broadcast %cst_315 : f32 to vector<8x128xf32>
    %643 = arith.select %539, %641, %642 : vector<8x128xi1>, vector<8x128xf32>
    %c120_i32_316 = arith.constant 120 : i32
    %644 = tpu.dynamic_rotate %637 by %c120_i32_316 dim 1 : vector<8x128xf32>, i32 -> vector<8x128xf32>
    %cst_317 = arith.constant 0.000000e+00 : f32
    %645 = vector.broadcast %cst_317 : f32 to vector<8x128xf32>
    %646 = arith.select %541, %644, %645 : vector<8x128xi1>, vector<8x128xf32>
    %647 = vector.broadcast %638 : f32 to vector<8x128xf32>
    %648 = arith.mulf %647, %643 : vector<8x128xf32>
    %649 = arith.addf %635, %648 : vector<8x128xf32>
    %650 = vector.broadcast %639 : f32 to vector<8x128xf32>
    %651 = arith.mulf %650, %637 : vector<8x128xf32>
    %652 = arith.addf %649, %651 : vector<8x128xf32>
    %653 = vector.broadcast %640 : f32 to vector<8x128xf32>
    %654 = arith.mulf %653, %646 : vector<8x128xf32>
    %655 = arith.addf %652, %654 : vector<8x128xf32>
    %c1_318 = arith.constant 1 : index
    %c16_319 = arith.constant 16 : index
    %c0_320 = arith.constant 0 : index
    %656 = vector.load %arg10[%c1_318, %c16_319, %c0_320] : memref<2x24x128xf32, #tpu.memory_space<vmem>>, vector<1x8x128xf32>
    %657 = vector.shape_cast %656 : vector<1x8x128xf32> to vector<8x128xf32>
    %c67 = arith.constant 67 : index
    %658 = memref.load %arg6[%c67] : memref<72xf32, #tpu.memory_space<smem>>
    %c69 = arith.constant 69 : index
    %659 = memref.load %arg6[%c69] : memref<72xf32, #tpu.memory_space<smem>>
    %c71 = arith.constant 71 : index
    %660 = memref.load %arg6[%c71] : memref<72xf32, #tpu.memory_space<smem>>
    %c8_i32_321 = arith.constant 8 : i32
    %661 = tpu.dynamic_rotate %657 by %c8_i32_321 dim 1 : vector<8x128xf32>, i32 -> vector<8x128xf32>
    %cst_322 = arith.constant 0.000000e+00 : f32
    %662 = vector.broadcast %cst_322 : f32 to vector<8x128xf32>
    %663 = arith.select %539, %661, %662 : vector<8x128xi1>, vector<8x128xf32>
    %c120_i32_323 = arith.constant 120 : i32
    %664 = tpu.dynamic_rotate %657 by %c120_i32_323 dim 1 : vector<8x128xf32>, i32 -> vector<8x128xf32>
    %cst_324 = arith.constant 0.000000e+00 : f32
    %665 = vector.broadcast %cst_324 : f32 to vector<8x128xf32>
    %666 = arith.select %541, %664, %665 : vector<8x128xi1>, vector<8x128xf32>
    %667 = vector.broadcast %658 : f32 to vector<8x128xf32>
    %668 = arith.mulf %667, %663 : vector<8x128xf32>
    %669 = arith.addf %655, %668 : vector<8x128xf32>
    %670 = vector.broadcast %659 : f32 to vector<8x128xf32>
    %671 = arith.mulf %670, %657 : vector<8x128xf32>
    %672 = arith.addf %669, %671 : vector<8x128xf32>
    %673 = vector.broadcast %660 : f32 to vector<8x128xf32>
    %674 = arith.mulf %673, %666 : vector<8x128xf32>
    %675 = arith.addf %672, %674 : vector<8x128xf32>
    %c13_325 = arith.constant 13 : index
    %676 = memref.load %arg7[%c13_325] : memref<16xf32, #tpu.memory_space<smem>>
    %677 = vector.broadcast %676 : f32 to vector<8x128xf32>
    %678 = arith.mulf %677, %675 : vector<8x128xf32>
    %c0_326 = arith.constant 0 : index
    %c6_327 = arith.constant 6 : index
    %c0_328 = arith.constant 0 : index
    %c0_329 = arith.constant 0 : index
    %679 = vector.load %arg8[%c0_326, %c6_327, %c0_328, %c0_329] : memref<1x8x8x128xf32, #tpu.memory_space<vmem>>, vector<1x1x8x128xf32>
    %680 = vector.shape_cast %679 : vector<1x1x8x128xf32> to vector<8x128xf32>
    %681 = arith.addf %680, %678 : vector<8x128xf32>
    %c0_330 = arith.constant 0 : index
    %c6_331 = arith.constant 6 : index
    %c0_332 = arith.constant 0 : index
    %c0_333 = arith.constant 0 : index
    %682 = vector.load %arg8[%c0_330, %c6_331, %c0_332, %c0_333] : memref<1x8x8x128xf32, #tpu.memory_space<vmem>>, vector<1x1x8x128xf32>
    %683 = vector.shape_cast %682 : vector<1x1x8x128xf32> to vector<8x128xf32>
    %684 = vector.shape_cast %681 : vector<8x128xf32> to vector<1x1x8x128xf32>
    tpu.vector_store %arg8[%c0_330, %c6_331, %c0_332, %c0_333], %684 {strides = array<i32>} : memref<1x8x8x128xf32, #tpu.memory_space<vmem>>, vector<1x1x8x128xf32>,
    %c15_334 = arith.constant 15 : index
    %685 = memref.load %arg7[%c15_334] : memref<16xf32, #tpu.memory_space<smem>>
    %686 = vector.broadcast %685 : f32 to vector<8x128xf32>
    %687 = arith.mulf %686, %675 : vector<8x128xf32>
    %c0_335 = arith.constant 0 : index
    %c7_336 = arith.constant 7 : index
    %c0_337 = arith.constant 0 : index
    %c0_338 = arith.constant 0 : index
    %688 = vector.load %arg8[%c0_335, %c7_336, %c0_337, %c0_338] : memref<1x8x8x128xf32, #tpu.memory_space<vmem>>, vector<1x1x8x128xf32>
    %689 = vector.shape_cast %688 : vector<1x1x8x128xf32> to vector<8x128xf32>
    %690 = arith.addf %689, %687 : vector<8x128xf32>
    %c0_339 = arith.constant 0 : index
    %c7_340 = arith.constant 7 : index
    %c0_341 = arith.constant 0 : index
    %c0_342 = arith.constant 0 : index
    %691 = vector.load %arg8[%c0_339, %c7_340, %c0_341, %c0_342] : memref<1x8x8x128xf32, #tpu.memory_space<vmem>>, vector<1x1x8x128xf32>
    %692 = vector.shape_cast %691 : vector<1x1x8x128xf32> to vector<8x128xf32>
    %693 = vector.shape_cast %690 : vector<8x128xf32> to vector<1x1x8x128xf32>
    tpu.vector_store %arg8[%c0_339, %c7_340, %c0_341, %c0_342], %693 {strides = array<i32>} : memref<1x8x8x128xf32, #tpu.memory_space<vmem>>, vector<1x1x8x128xf32>,
    %c0_343 = arith.constant 0 : index
    %c0_344 = arith.constant 0 : index
    %c0_345 = arith.constant 0 : index
    %c0_346 = arith.constant 0 : index
    %694 = vector.load %arg8[%c0_343, %c0_344, %c0_345, %c0_346] : memref<1x8x8x128xf32, #tpu.memory_space<vmem>>, vector<1x8x8x128xf32>
    %695 = vector.shape_cast %694 : vector<1x8x8x128xf32> to vector<8x8x128xf32>
    %cst_347 = arith.constant dense<0.000000e+00> : vector<8x8xf32>
    %696 = vector.multi_reduction <add>, %695, %cst_347 [2] : vector<8x8x128xf32> to vector<8x8xf32>
    %cst_348 = arith.constant dense<0.000000e+00> : vector<8xf32>
    %697 = vector.multi_reduction <add>, %696, %cst_348 [1] : vector<8x8xf32> to vector<8xf32>
    %698 = arith.mulf %695, %695 : vector<8x8x128xf32>
    %cst_349 = arith.constant dense<0.000000e+00> : vector<8x8xf32>
    %699 = vector.multi_reduction <add>, %698, %cst_349 [2] : vector<8x8x128xf32> to vector<8x8xf32>
    %cst_350 = arith.constant dense<0.000000e+00> : vector<8xf32>
    %700 = vector.multi_reduction <add>, %699, %cst_350 [1] : vector<8x8xf32> to vector<8xf32>
    %701 = vector.shape_cast %697 : vector<8xf32> to vector<1x8xf32>
    %c0_351 = arith.constant 0 : index
    %c0_352 = arith.constant 0 : index
    %c0_353 = arith.constant 0 : index
    %c0_354 = arith.constant 0 : index
    %702 = vector.load %arg9[%c0_351, %c0_352, %c0_353, %c0_354] : memref<1x1x2x8xf32, #tpu.memory_space<vmem>>, vector<1x1x1x8xf32>
    %703 = vector.shape_cast %702 : vector<1x1x1x8xf32> to vector<1x8xf32>
    %704 = vector.shape_cast %701 : vector<1x8xf32> to vector<1x1x1x8xf32>
    tpu.vector_store %arg9[%c0_351, %c0_352, %c0_353, %c0_354], %704 {strides = array<i32>} : memref<1x1x2x8xf32, #tpu.memory_space<vmem>>, vector<1x1x1x8xf32>,
    %705 = vector.shape_cast %700 : vector<8xf32> to vector<1x8xf32>
    %c0_355 = arith.constant 0 : index
    %c0_356 = arith.constant 0 : index
    %c1_357 = arith.constant 1 : index
    %c0_358 = arith.constant 0 : index
    %706 = vector.load %arg9[%c0_355, %c0_356, %c1_357, %c0_358] : memref<1x1x2x8xf32, #tpu.memory_space<vmem>>, vector<1x1x1x8xf32>
    %707 = vector.shape_cast %706 : vector<1x1x1x8xf32> to vector<1x8xf32>
    %708 = vector.shape_cast %705 : vector<1x8xf32> to vector<1x1x1x8xf32>
    tpu.vector_store %arg9[%c0_355, %c0_356, %c1_357, %c0_358], %708 {strides = array<i32>} : memref<1x1x2x8xf32, #tpu.memory_space<vmem>>, vector<1x1x1x8xf32>,
    return
  }
  func.func @transform_0(%arg0: i32, %arg1: i32) -> (i32, i32, i32, i32) {
    %c1_i32 = arith.constant 1 : i32
    %0 = arith.muli %arg1, %c1_i32 : i32
    %c2_i32 = arith.constant 2 : i32
    %1 = arith.addi %0, %c2_i32 : i32
    %c1_i32_0 = arith.constant 1 : i32
    %2 = arith.subi %1, %c1_i32_0 : i32
    %c2_i32_1 = arith.constant 2 : i32
    %c0_i32 = arith.constant 0 : i32
    %3 = arith.cmpi eq, %c2_i32_1, %c0_i32 : i32
    %c1_i32_2 = arith.constant 1 : i32
    %4 = arith.select %3, %c1_i32_2, %c2_i32_1 : i32
    %5 = arith.remsi %2, %4 : i32
    %c0_i32_3 = arith.constant 0 : i32
    %6 = arith.cmpi ne, %5, %c0_i32_3 : i32
    %c0_i32_4 = arith.constant 0 : i32
    %7 = arith.cmpi slt, %5, %c0_i32_4 : i32
    %c0_i32_5 = arith.constant 0 : i32
    %8 = arith.cmpi slt, %4, %c0_i32_5 : i32
    %9 = arith.xori %7, %8 : i1
    %10 = arith.andi %9, %6 : i1
    %11 = arith.addi %5, %4 : i32
    %12 = arith.select %10, %11, %5 : i32
    %c0_i32_6 = arith.constant 0 : i32
    %c0_i32_7 = arith.constant 0 : i32
    %c0_i32_8 = arith.constant 0 : i32
    return %arg0, %c0_i32_6, %12, %c0_i32_7 : i32, i32, i32, i32
  }
  func.func @transform_1(%arg0: i32, %arg1: i32) -> (i32, i32, i32, i32) {
    %c0_i32 = arith.constant 0 : i32
    %c0_i32_0 = arith.constant 0 : i32
    %c0_i32_1 = arith.constant 0 : i32
    return %arg0, %c0_i32, %arg1, %c0_i32_0 : i32, i32, i32, i32
  }
  func.func @transform_2(%arg0: i32, %arg1: i32) -> (i32, i32, i32, i32) {
    %c1_i32 = arith.constant 1 : i32
    %0 = arith.addi %arg1, %c1_i32 : i32
    %c1_i32_0 = arith.constant 1 : i32
    %1 = arith.muli %0, %c1_i32_0 : i32
    %c2_i32 = arith.constant 2 : i32
    %c0_i32 = arith.constant 0 : i32
    %2 = arith.cmpi eq, %c2_i32, %c0_i32 : i32
    %c1_i32_1 = arith.constant 1 : i32
    %3 = arith.select %2, %c1_i32_1, %c2_i32 : i32
    %4 = arith.remsi %1, %3 : i32
    %c0_i32_2 = arith.constant 0 : i32
    %5 = arith.cmpi ne, %4, %c0_i32_2 : i32
    %c0_i32_3 = arith.constant 0 : i32
    %6 = arith.cmpi slt, %4, %c0_i32_3 : i32
    %c0_i32_4 = arith.constant 0 : i32
    %7 = arith.cmpi slt, %3, %c0_i32_4 : i32
    %8 = arith.xori %6, %7 : i1
    %9 = arith.andi %8, %5 : i1
    %10 = arith.addi %4, %3 : i32
    %11 = arith.select %9, %10, %4 : i32
    %c0_i32_5 = arith.constant 0 : i32
    %c0_i32_6 = arith.constant 0 : i32
    %c0_i32_7 = arith.constant 0 : i32
    return %arg0, %c0_i32_5, %11, %c0_i32_6 : i32, i32, i32, i32
  }
  func.func @transform_3(%arg0: i32, %arg1: i32) -> i32 {
    %c0_i32 = arith.constant 0 : i32
    %c0_i32_0 = arith.constant 0 : i32
    return %c0_i32 : i32
  }
  func.func @transform_4(%arg0: i32, %arg1: i32) -> i32 {
    %c0_i32 = arith.constant 0 : i32
    %c0_i32_0 = arith.constant 0 : i32
    return %c0_i32 : i32
  }
  func.func @transform_5(%arg0: i32, %arg1: i32) -> i32 {
    %c0_i32 = arith.constant 0 : i32
    %c0_i32_0 = arith.constant 0 : i32
    return %c0_i32 : i32
  }
  func.func @transform_6(%arg0: i32, %arg1: i32) -> (i32, i32, i32, i32) {
    %c0_i32 = arith.constant 0 : i32
    %c0_i32_0 = arith.constant 0 : i32
    %c0_i32_1 = arith.constant 0 : i32
    return %arg0, %c0_i32, %arg1, %c0_i32_0 : i32, i32, i32, i32
  }
  func.func @transform_7(%arg0: i32, %arg1: i32) -> (i32, i32, i32, i32) {
    %c0_i32 = arith.constant 0 : i32
    %c0_i32_0 = arith.constant 0 : i32
    %c0_i32_1 = arith.constant 0 : i32
    return %arg0, %arg1, %c0_i32, %c0_i32_0 : i32, i32, i32, i32
  }
}

</mosaic_0001>

<llo_original>
// kernel: squeeze.7
$region0: #{squeeze.7}
  %s0 = inlined_call_operand.vmem [shape: f32[8,2,1,1], index: 0, kind: input, shape index: {}]
  %s1 = inlined_call_operand.vmem [shape: f32[16], index: 1, kind: output, shape index: {}]
  $region1: #{squeeze.7} parent=0
    #allocation0 [shape = 'u8[4096]{0}', space=vmem, size = 0x1000, scoped, tag = 'scoped mem for output reshape']
    %v2 = vld [vmem:[%s0] sm:$0x1]
    %vm3 = vcmask 15360
    %4 = vst.msk [vmem:[#allocation0] sm:$0x1] %vm3, %v2
    %s5 = scalar_lea.vmem %s0, 7
    %v6 = vld [vmem:[%s5] sm:$0x1]
    %7 = vrot.lane.b32.xlu0 %v6, 14
    %v8 = vpop.permute.xlu0 %7
    %vm9 = vcmask 130160
    %10 = vst.msk [vmem:[#allocation0] sm:$0x1] %vm9, %v8
    %s11 = scalar_lea.vmem %s0, 6
    %v12 = vld [vmem:[%s11] sm:$0x1]
    %13 = vrot.lane.b32.xlu0 %v12, 12
    %v14 = vpop.permute.xlu0 %13
    %vm15 = vcmask 113760
    %16 = vst.msk [vmem:[#allocation0] sm:$0x1] %vm15, %v14
    %s17 = scalar_lea.vmem %s0, 5
    %v18 = vld [vmem:[%s17] sm:$0x1]
    %19 = vrot.lane.b32.xlu0 %v18, 10
    %v20 = vpop.permute.xlu0 %19
    %vm21 = vcmask 97360
    %22 = vst.msk [vmem:[#allocation0] sm:$0x1] %vm21, %v20
    %s23 = scalar_lea.vmem %s0, 4
    %v24 = vld [vmem:[%s23] sm:$0x1]
    %25 = vrot.lane.b32.xlu0 %v24, 8
    %v26 = vpop.permute.xlu0 %25
    %vm27 = vcmask 80960
    %28 = vst.msk [vmem:[#allocation0] sm:$0x1] %vm27, %v26
    %s29 = scalar_lea.vmem %s0, 3
    %v30 = vld [vmem:[%s29] sm:$0x1]
    %31 = vrot.lane.b32.xlu0 %v30, 6
    %v32 = vpop.permute.xlu0 %31
    %vm33 = vcmask 64560
    %34 = vst.msk [vmem:[#allocation0] sm:$0x1] %vm33, %v32
    %s35 = scalar_lea.vmem %s0, 2
    %v36 = vld [vmem:[%s35] sm:$0x1]
    %37 = vrot.lane.b32.xlu0 %v36, 4
    %v38 = vpop.permute.xlu0 %37
    %vm39 = vcmask 48160
    %40 = vst.msk [vmem:[#allocation0] sm:$0x1] %vm39, %v38
    %s41 = scalar_lea.vmem %s0, 1
    %v42 = vld [vmem:[%s41] sm:$0x1]
    %43 = vrot.lane.b32.xlu0 %v42, 2
    %v44 = vpop.permute.xlu0 %43
    %vm45 = vcmask 31760
    %46 = vst.msk [vmem:[#allocation0] sm:$0x1] %vm45, %v44
    %s48 = sshll.u32 1, 1
    %s49 = ssub.s32 %s48, 1
    %v51 = vld [vmem:[#allocation0] sm:%s49]
    %s52 = sshll.u32 1, 1
    %s53 = ssub.s32 %s52, 1
    %54 = vst [vmem:[%s1] sm:%s53] %v51

// kernel: squeeze.5
$region0: #{squeeze.5}
  %s0 = inlined_call_operand.vmem [shape: f32[2,4], index: 0, kind: input, shape index: {}]
  %s1 = inlined_call_operand.vmem [shape: f32[8], index: 1, kind: output, shape index: {}]
  $region1: #{squeeze.5} parent=0
    #allocation0 [shape = 'u8[4096]{0}', space=vmem, size = 0x1000, scoped, tag = 'scoped mem for output reshape']
    #allocation1 [shape = 'u8[4096]{0}', space=vmem, size = 0x1000, scoped, tag = 'scoped mem for input reshape']
    %s3 = sshll.u32 1, 2
    %s4 = ssub.s32 %s3, 1
    %v5 = vld [vmem:[%s0] sm:%s4]
    %6 = vst [vmem:[#allocation1] sm:%s4] %v5
    %v7 = vld [vmem:[#allocation1] sm:$0x1]
    %vm8 = vcmask 31744
    %9 = vst.msk [vmem:[#allocation0] sm:$0x1] %vm8, %v7
    %s10 = scalar_lea.vmem [#allocation1], 1
    %v11 = vld [vmem:[%s10] sm:$0x1]
    %12 = vrot.lane.b32.xlu0 %v11, 4
    %v13 = vpop.permute.xlu0 %12
    %vm14 = vcmask 64544
    %15 = vst.msk [vmem:[#allocation0] sm:$0x1] %vm14, %v13
    %s17 = sshll.u32 1, 1
    %s18 = ssub.s32 %s17, 1
    %v20 = vld [vmem:[#allocation0] sm:%s18]
    %s21 = sshll.u32 1, 1
    %s22 = ssub.s32 %s21, 1
    %23 = vst [vmem:[%s1] sm:%s22] %v20

// kernel: dilated_parallel_conv_block.3
$region0: #{dilated_parallel_conv_block.3}
  #allocation0 [shape = 'u32[]', space=smem, size = 0x4, offset = 0x4, fixed_abs, tag = 'smem constant byte address 0x4 - core index']
  #allocation1 [shape = 'u32[144,128]{1,0:T(1,128)}', space=vmem, size = 0x12000, scoped, tag = 'internal scratch']
  %s0 = inlined_call_operand.vmem [shape: f32[2,8,2048], index: 0, kind: input, shape index: {}, may-alias: {0,4}]
  %s1 = inlined_call_operand.vmem [shape: f32[8], index: 1, kind: input, shape index: {}]
  %s2 = inlined_call_operand.vmem [shape: f32[8], index: 2, kind: input, shape index: {}]
  %s3 = inlined_call_operand.vmem [shape: f32[8], index: 3, kind: input, shape index: {}]
  %s4 = inlined_call_operand.vmem [shape: f32[2,8,2048], index: 4, kind: output, shape index: {}, may-alias: {0,4}]
  %s5 = sld [smem:[#allocation0]]
  $region61: #{dilated_parallel_conv_block.3} parent=0
    _
  %s7 = ssub.s32 1, %s5
  %s8 = scalar_select 0, %s7, %s5
  $region1: #{dilated_parallel_conv_block.3} parent=0
    #allocation2 [shape = 'u8[512]{0}', space=smem, size = 0x200, scoped, tag = 'input window, operand 1, single buffered']
    #allocation3 [shape = 's32[2]{0}', space=sflag, size = 0x8, scoped, tag = 'scoped memory for dilated_parallel_conv_block.3']
    #allocation4 [shape = 'u8[512]{0}', space=smem, size = 0x200, scoped, tag = 'input window, operand 2, single buffered']
    #allocation5 [shape = 's32[1]{0}', space=sflag, size = 0x4, scoped, tag = 'scoped memory for dilated_parallel_conv_block.3']
    #allocation6 [shape = 'u8[512]{0}', space=smem, size = 0x200, scoped, tag = 'input window, operand 3, single buffered']
    %9 = vsyncpa [#allocation3], 0
    %10 = vsyncpa [#allocation5], 0
    loop: start=0, step=1, limit=4
    $region2: #{dilated_parallel_conv_block.3} parent=1 // loop_pre_header
      _
    $region3: #{dilated_parallel_conv_block.3} parent=1 // loop_header
      %s12 = sphi 0, %s16
      %p13 = scmp.ge.s32.totalorder %s12, 4
      %s19 = sphi 0, %s31
      %s20 = sphi 0, %s27
      %s21 = sphi 0, %s19
      %s22 = sphi 0, %s20
      %s23 = sphi 0, %s21
      %s24 = sphi 0, %s22
      %s36 = sphi 0, %s38
      %s39 = sphi 0, %s36
      %s40 = sphi 0, %s39
      %s56 = sphi 0, %s40
      %s60 = sphi 0, %s60
      %s62 = sphi 0, %s60
      %s63 = sphi 0, %s62
      %s77 = sphi 0, %s63
      %s81 = sphi 0, %s81
      %s83 = sphi 0, %s81
      %s84 = sphi 0, %s83
      %s98 = sphi 0, %s84
      %s102 = sphi 0, %s102
      %s104 = sphi 0, %s102
      %s105 = sphi 0, %s104
      %s119 = sphi 0, %s105
      %s127 = sphi 0, %s129
      %s130 = sphi 0, %s127
      %s131 = sphi 0, %s130
      %s147 = sphi 0, %s131
    $region4: #{dilated_parallel_conv_block.3} parent=1 // loop_header_branch
      %15 = sbr.rel (%p13) target = $region8
    $region5: #{dilated_parallel_conv_block.3} parent=1 // loop_body
      %s17 = ssub.s32 %s12, 1
      %s18 = ssub.s32 %s12, 2
      %s25 = sadd.s32 1, %s20
      %p26 = scmp.ge.s32.totalorder %s25, 1
      %s27 = scalar_select %p26, 0, %s25
      %s28 = sadd.s32 1, %s19
      %s29 = scalar_select %p26, %s28, %s19
      %p30 = scmp.ge.s32.totalorder %s29, 2
      %s31 = scalar_select %p30, 0, %s29
      %s32 = ssub.s32 %s19, %s31
      %s33 = ssub.s32 %s20, %s27
      %s34 = sor.u32 %s32, %s33
      %p35 = scmp.eq.s32.totalorder %s34, 0
      %s37 = sadd.s32 %s36, 1
      %s38 = scalar_select %p35, %s36, %s37
      %p41 = pneg %p35
      %p42 = scmp.eq.s32.totalorder %s12, 1
      %p43 = por %p41, %p42
      %p44 = scmp.ne.s32.totalorder %s36, %s39
      %p45 = scmp.eq.s32.totalorder %s12, 0
      %p46 = por %p44, %p45
      %p47 = scmp.ne.s32.totalorder %s36, %s39
      %p48 = scmp.eq.s32.totalorder %s17, 1
      %p49 = por %p47, %p48
      %p50 = scmp.ne.s32.totalorder %s39, %s40
      %p51 = scmp.eq.s32.totalorder %s17, 0
      %p52 = por %p50, %p51
      %p53 = scmp.ne.s32.totalorder %s39, %s40
      %p54 = scmp.eq.s32.totalorder %s18, 1
      %p55 = por %p53, %p54
      %p57 = scmp.ne.s32.totalorder %s40, %s56
      %p58 = scmp.eq.s32.totalorder %s18, 0
      %p59 = por %p57, %p58
      %s61 = sadd.s32 %s60, 1
      %p64 = scmp.eq.s32.totalorder %s12, 1
      %p65 = scmp.ne.s32.totalorder %s60, %s62
      %p66 = scmp.eq.s32.totalorder %s12, 0
      %p67 = por %p65, %p66
      %p68 = scmp.ne.s32.totalorder %s60, %s62
      %p69 = scmp.eq.s32.totalorder %s17, 1
      %p70 = por %p68, %p69
      %p71 = scmp.ne.s32.totalorder %s62, %s63
      %p72 = scmp.eq.s32.totalorder %s17, 0
      %p73 = por %p71, %p72
      %p74 = scmp.ne.s32.totalorder %s62, %s63
      %p75 = scmp.eq.s32.totalorder %s18, 1
      %p76 = por %p74, %p75
      %p78 = scmp.ne.s32.totalorder %s63, %s77
      %p79 = scmp.eq.s32.totalorder %s18, 0
      %p80 = por %p78, %p79
      %s82 = sadd.s32 %s81, 1
      %p85 = scmp.eq.s32.totalorder %s12, 1
      %p86 = scmp.ne.s32.totalorder %s81, %s83
      %p87 = scmp.eq.s32.totalorder %s12, 0
      %p88 = por %p86, %p87
      %p89 = scmp.ne.s32.totalorder %s81, %s83
      %p90 = scmp.eq.s32.totalorder %s17, 1
      %p91 = por %p89, %p90
      %p92 = scmp.ne.s32.totalorder %s83, %s84
      %p93 = scmp.eq.s32.totalorder %s17, 0
      %p94 = por %p92, %p93
      %p95 = scmp.ne.s32.totalorder %s83, %s84
      %p96 = scmp.eq.s32.totalorder %s18, 1
      %p97 = por %p95, %p96
      %p99 = scmp.ne.s32.totalorder %s84, %s98
      %p100 = scmp.eq.s32.totalorder %s18, 0
      %p101 = por %p99, %p100
      %s103 = sadd.s32 %s102, 1
      %p106 = scmp.eq.s32.totalorder %s12, 1
      %p107 = scmp.ne.s32.totalorder %s102, %s104
      %p108 = scmp.eq.s32.totalorder %s12, 0
      %p109 = por %p107, %p108
      %p110 = scmp.ne.s32.totalorder %s102, %s104
      %p111 = scmp.eq.s32.totalorder %s17, 1
      %p112 = por %p110, %p111
      %p113 = scmp.ne.s32.totalorder %s104, %s105
      %p114 = scmp.eq.s32.totalorder %s17, 0
      %p115 = por %p113, %p114
      %p116 = scmp.ne.s32.totalorder %s104, %s105
      %p117 = scmp.eq.s32.totalorder %s18, 1
      %p118 = por %p116, %p117
      %p120 = scmp.ne.s32.totalorder %s105, %s119
      %p121 = scmp.eq.s32.totalorder %s18, 0
      %p122 = por %p120, %p121
      %s123 = ssub.s32 %s19, %s31
      %s124 = ssub.s32 %s20, %s27
      %s125 = sor.u32 %s123, %s124
      %p126 = scmp.eq.s32.totalorder %s125, 0
      %s128 = sadd.s32 %s127, 1
      %s129 = scalar_select %p126, %s127, %s128
      %p132 = pneg %p126
      %p133 = scmp.eq.s32.totalorder %s12, 1
      %p134 = por %p132, %p133
      %p135 = scmp.ne.s32.totalorder %s127, %s130
      %p136 = scmp.eq.s32.totalorder %s12, 0
      %p137 = por %p135, %p136
      %p138 = scmp.ne.s32.totalorder %s127, %s130
      %p139 = scmp.eq.s32.totalorder %s17, 1
      %p140 = por %p138, %p139
      %p141 = scmp.ne.s32.totalorder %s130, %s131
      %p142 = scmp.eq.s32.totalorder %s17, 0
      %p143 = por %p141, %p142
      %p144 = scmp.ne.s32.totalorder %s130, %s131
      %p145 = scmp.eq.s32.totalorder %s18, 1
      %p146 = por %p144, %p145
      %p148 = scmp.ne.s32.totalorder %s131, %s147
      %p149 = scmp.eq.s32.totalorder %s18, 0
      %p150 = por %p148, %p149
      %p151 = scmp.le.s32.totalorder 1, %s12
      %p152 = scmp.lt.s32.totalorder %s12, 3
      %p153 = pnand %p151, %p152
      %p154 = pneg %p153
      // Predicated region
      $region9: #{dilated_parallel_conv_block.3} parent=5 // pred_check
        _
      $region10: #{dilated_parallel_conv_block.3} parent=5 // pred_check_branch
        %156 = sbr.rel (%p153) target = $region12
      $region11: #{dilated_parallel_conv_block.3} parent=5 // pred_region
        %s157 = ssub.s32 %s12, 1
        // Predicated region
        $region13: #{dilated_parallel_conv_block.3} parent=11 // pred_check
          %p158 = pneg %p73
        $region14: #{dilated_parallel_conv_block.3} parent=11 // pred_check_branch
          %160 = sbr.rel (%p158) target = $region16
        $region15: #{dilated_parallel_conv_block.3} parent=11 // pred_region
          %s162 = ssub.s32 16, 16
          %163 = vsyncadd [#allocation3], %s162
          %s165 = sshll.u32 %s1, 4
          %s166 = int_to_ptr.vmem [resolvable:$true] %s165
          %168 = dma.vmem_to_smem %s166, 16, [#allocation2], [#allocation3]
        $region16: #{dilated_parallel_conv_block.3} parent=11 // pred_fallthru
          _
        // Predicated region
        $region17: #{dilated_parallel_conv_block.3} parent=11 // pred_check
          %p169 = pneg %p94
        $region18: #{dilated_parallel_conv_block.3} parent=11 // pred_check_branch
          %171 = sbr.rel (%p169) target = $region20
        $region19: #{dilated_parallel_conv_block.3} parent=11 // pred_region
          %s173 = ssub.s32 16, 16
          %174 = vsyncadd [#allocation5], %s173
          %s176 = sshll.u32 %s2, 4
          %s177 = int_to_ptr.vmem [resolvable:$true] %s176
          %179 = dma.vmem_to_smem %s177, 16, [#allocation4], [#allocation5]
        $region20: #{dilated_parallel_conv_block.3} parent=11 // pred_fallthru
          _
        // Predicated region
        $region21: #{dilated_parallel_conv_block.3} parent=11 // pred_check
          %p180 = pneg %p115
        $region22: #{dilated_parallel_conv_block.3} parent=11 // pred_check_branch
          %182 = sbr.rel (%p180) target = $region24
        $region23: #{dilated_parallel_conv_block.3} parent=11 // pred_region
          %s184 = ssub.s32 16, 16
          %185 = vsyncadd [#allocation5], %s184
          %s187 = sshll.u32 %s3, 4
          %s188 = int_to_ptr.vmem [resolvable:$true] %s187
          %190 = dma.vmem_to_smem %s188, 16, [#allocation6], [#allocation5]
        $region24: #{dilated_parallel_conv_block.3} parent=11 // pred_fallthru
          _
      $region12: #{dilated_parallel_conv_block.3} parent=5 // pred_fallthru
        _
      %p191 = scmp.lt.s32.totalorder %s12, 2
      // Predicated region
      $region25: #{dilated_parallel_conv_block.3} parent=5 // pred_check
        %p192 = pneg %p191
      $region26: #{dilated_parallel_conv_block.3} parent=5 // pred_check_branch
        %194 = sbr.rel (%p192) target = $region28
      $region27: #{dilated_parallel_conv_block.3} parent=5 // pred_region
        // Predicated region
        $region29: #{dilated_parallel_conv_block.3} parent=27 // pred_check
          %p195 = pneg %p46
        $region30: #{dilated_parallel_conv_block.3} parent=27 // pred_check_branch
          %197 = sbr.rel (%p195) target = $region32
        $region31: #{dilated_parallel_conv_block.3} parent=27 // pred_region
          %s198 = smul.u32 16, %s20
          %p199 = scmp.lt.s32.totalorder %s19, 1
          %s200 = scalar_select %p199, %s19, 1
          %p201 = scmp.lt.s32.totalorder %s198, 15
          %s202 = scalar_select %p201, %s198, 15
          %s203 = smul.addr %s200, 16
          %s204 = sadd.s32 %s202, %s203
          %s205 = smul.addr %s204, 8
          %s206 = scalar_lea.vmem %s0, %s205
          %s207 = smul.u32 16, %s20
        $region32: #{dilated_parallel_conv_block.3} parent=27 // pred_fallthru
          _
      $region28: #{dilated_parallel_conv_block.3} parent=5 // pred_fallthru
        _
      %p208 = scmp.le.s32.totalorder 1, %s12
      %p209 = scmp.lt.s32.totalorder %s12, 3
      %p210 = pnand %p208, %p209
      %p211 = pneg %p210
      // Predicated region
      $region33: #{dilated_parallel_conv_block.3} parent=5 // pred_check
        _
      $region34: #{dilated_parallel_conv_block.3} parent=5 // pred_check_branch
        %213 = sbr.rel (%p210) target = $region36
      $region35: #{dilated_parallel_conv_block.3} parent=5 // pred_region
        %s214 = ssub.s32 %s12, 1
        // Predicated region
        $region37: #{dilated_parallel_conv_block.3} parent=35 // pred_check
          %p215 = pneg %p73
        $region38: #{dilated_parallel_conv_block.3} parent=35 // pred_check_branch
          %217 = sbr.rel (%p215) target = $region40
        $region39: #{dilated_parallel_conv_block.3} parent=35 // pred_region
          %218 = dma.done [#allocation3], 16
        $region40: #{dilated_parallel_conv_block.3} parent=35 // pred_fallthru
          _
        // Predicated region
        $region41: #{dilated_parallel_conv_block.3} parent=35 // pred_check
          %p219 = pneg %p94
        $region42: #{dilated_parallel_conv_block.3} parent=35 // pred_check_branch
          %221 = sbr.rel (%p219) target = $region44
        $region43: #{dilated_parallel_conv_block.3} parent=35 // pred_region
          %222 = dma.done [#allocation5], 16
        $region44: #{dilated_parallel_conv_block.3} parent=35 // pred_fallthru
          _
        // Predicated region
        $region45: #{dilated_parallel_conv_block.3} parent=35 // pred_check
          %p223 = pneg %p115
        $region46: #{dilated_parallel_conv_block.3} parent=35 // pred_check_branch
          %225 = sbr.rel (%p223) target = $region48
        $region47: #{dilated_parallel_conv_block.3} parent=35 // pred_region
          %226 = dma.done [#allocation5], 16
        $region48: #{dilated_parallel_conv_block.3} parent=35 // pred_fallthru
          _
        %227 = sfence
        %s228 = smul.u32 16, %s22
        %p229 = scmp.lt.s32.totalorder %s21, 1
        %s230 = scalar_select %p229, %s21, 1
        %p231 = scmp.lt.s32.totalorder %s228, 15
        %s232 = scalar_select %p231, %s228, 15
        %s233 = smul.addr %s230, 16
        %s234 = sadd.s32 %s232, %s233
        %s235 = smul.addr %s234, 8
        %s236 = scalar_lea.vmem %s0, %s235
        %p237 = pneg %p52
        %p238 = pneg %p49
        %p239 = pneg %p73
        %p240 = pneg %p70
        %p241 = pneg %p94
        %p242 = pneg %p91
        %p243 = pneg %p115
        %p244 = pneg %p112
        %p245 = pneg %p143
        %p246 = pneg %p140
        %s247 = smul.u32 16, %s22
        %p248 = scmp.lt.s32.totalorder %s21, 1
        %s249 = scalar_select %p248, %s21, 1
        %p250 = scmp.lt.s32.totalorder %s247, 15
        %s251 = scalar_select %p250, %s247, 15
        %s252 = smul.addr %s249, 16
        %s253 = sadd.s32 %s251, %s252
        %s254 = smul.addr %s253, 8
        %s255 = scalar_lea.vmem %s4, %s254
        %s256 = smul.u32 16, %s22
        %p257 = scmp.lt.s32.totalorder %s21, 1
        %s258 = scalar_select %p257, %s21, 1
        %p259 = scmp.lt.s32.totalorder %s256, 15
        %s260 = scalar_select %p259, %s256, 15
        %s261 = smul.addr %s258, 16
        %s262 = sadd.s32 %s260, %s261
        %s263 = smul.addr %s262, 8
        %s264 = scalar_lea.vmem %s0, %s263
        %s265 = smul.u32 16, %s22
        %s266 = smul.u32 16, %s22
        %p267 = scmp.lt.s32.totalorder %s21, 1
        %s268 = scalar_select %p267, %s21, 1
        %p269 = scmp.lt.s32.totalorder %s266, 15
        %s270 = scalar_select %p269, %s266, 15
        %s271 = smul.addr %s268, 16
        %s272 = sadd.s32 %s270, %s271
        %s273 = smul.addr %s272, 8
        %s274 = scalar_lea.vmem %s4, %s273
        %s275 = smul.u32 16, %s22
        %v276 = vld [vmem:[%s264] ss:$8 sm:$0xf]
        %v277 = vld [vmem:[%s264] ss:$8 sm:$0xf0]
        %v278 = vor.u32 %v276, %v277
        %s279 = scalar_lea.vmem %s264, 64
        %v280 = vld [vmem:[%s279] ss:$8 sm:$0xf]
        %v281 = vld [vmem:[%s279] ss:$8 sm:$0xf0]
        %v282 = vor.u32 %v280, %v281
        %s283 = sld [smem:[#allocation2]]
        %v284 = vstv %s283
        %v285 = vmul.f32 %v278, %v284
        %v286 = vmul.f32 %v282, %v284
        %s287 = sld [smem:[#allocation4]]
        %v288 = vstv %s287
        %v289 = vadd.f32 %v285, %v288
        %v290 = vadd.f32 %v286, %v288
        %vm291 = vcmp.ge.f32.partialorder %v289, 0.0
        %vm292 = vcmp.ge.f32.partialorder %v290, 0.0
        %s293 = sld [smem:[#allocation6]]
        %v294 = vstv %s293
        %v295 = vmul.f32 %v294, %v289
        %v296 = vmul.f32 %v294, %v290
        %v297 = vsel %vm291, %v289, %v295
        %v298 = vsel %vm292, %v290, %v296
        %299 = vst [vmem:[%s274] ss:$8 sm:$0xf] %v297
        %300 = vst [vmem:[%s274] ss:$8 sm:$0xf0] %v297
        %s301 = scalar_lea.vmem %s274, 64
        %302 = vst [vmem:[%s301] ss:$8 sm:$0xf] %v298
        %303 = vst [vmem:[%s301] ss:$8 sm:$0xf0] %v298
        %s304 = scalar_lea.vmem %s264, 1
        %v305 = vld [vmem:[%s304] ss:$8 sm:$0xf]
        %v306 = vld [vmem:[%s304] ss:$8 sm:$0xf0]
        %v307 = vor.u32 %v305, %v306
        %s308 = scalar_lea.vmem %s264, 65
        %v309 = vld [vmem:[%s308] ss:$8 sm:$0xf]
        %v310 = vld [vmem:[%s308] ss:$8 sm:$0xf0]
        %v311 = vor.u32 %v309, %v310
        %s312 = sld [smem:[#allocation2 + $0x1]]
        %v313 = vstv %s312
        %v314 = vmul.f32 %v307, %v313
        %v315 = vmul.f32 %v311, %v313
        %s316 = sld [smem:[#allocation4 + $0x1]]
        %v317 = vstv %s316
        %v318 = vadd.f32 %v314, %v317
        %v319 = vadd.f32 %v315, %v317
        %vm320 = vcmp.ge.f32.partialorder %v318, 0.0
        %vm321 = vcmp.ge.f32.partialorder %v319, 0.0
        %s322 = sld [smem:[#allocation6 + $0x1]]
        %v323 = vstv %s322
        %v324 = vmul.f32 %v323, %v318
        %v325 = vmul.f32 %v323, %v319
        %v326 = vsel %vm320, %v318, %v324
        %v327 = vsel %vm321, %v319, %v325
        %s328 = scalar_lea.vmem %s274, 1
        %329 = vst [vmem:[%s328] ss:$8 sm:$0xf] %v326
        %330 = vst [vmem:[%s328] ss:$8 sm:$0xf0] %v326
        %s331 = scalar_lea.vmem %s274, 65
        %332 = vst [vmem:[%s331] ss:$8 sm:$0xf] %v327
        %333 = vst [vmem:[%s331] ss:$8 sm:$0xf0] %v327
        %s334 = scalar_lea.vmem %s264, 2
        %v335 = vld [vmem:[%s334] ss:$8 sm:$0xf]
        %v336 = vld [vmem:[%s334] ss:$8 sm:$0xf0]
        %v337 = vor.u32 %v335, %v336
        %s338 = scalar_lea.vmem %s264, 66
        %v339 = vld [vmem:[%s338] ss:$8 sm:$0xf]
        %v340 = vld [vmem:[%s338] ss:$8 sm:$0xf0]
        %v341 = vor.u32 %v339, %v340
        %s342 = sld [smem:[#allocation2 + $0x2]]
        %v343 = vstv %s342
        %v344 = vmul.f32 %v337, %v343
        %v345 = vmul.f32 %v341, %v343
        %s346 = sld [smem:[#allocation4 + $0x2]]
        %v347 = vstv %s346
        %v348 = vadd.f32 %v344, %v347
        %v349 = vadd.f32 %v345, %v347
        %vm350 = vcmp.ge.f32.partialorder %v348, 0.0
        %vm351 = vcmp.ge.f32.partialorder %v349, 0.0
        %s352 = sld [smem:[#allocation6 + $0x2]]
        %v353 = vstv %s352
        %v354 = vmul.f32 %v353, %v348
        %v355 = vmul.f32 %v353, %v349
        %v356 = vsel %vm350, %v348, %v354
        %v357 = vsel %vm351, %v349, %v355
        %s358 = scalar_lea.vmem %s274, 2
        %359 = vst [vmem:[%s358] ss:$8 sm:$0xf] %v356
        %360 = vst [vmem:[%s358] ss:$8 sm:$0xf0] %v356
        %s361 = scalar_lea.vmem %s274, 66
        %362 = vst [vmem:[%s361] ss:$8 sm:$0xf] %v357
        %363 = vst [vmem:[%s361] ss:$8 sm:$0xf0] %v357
        %s364 = scalar_lea.vmem %s264, 3
        %v365 = vld [vmem:[%s364] ss:$8 sm:$0xf]
        %v366 = vld [vmem:[%s364] ss:$8 sm:$0xf0]
        %v367 = vor.u32 %v365, %v366
        %s368 = scalar_lea.vmem %s264, 67
        %v369 = vld [vmem:[%s368] ss:$8 sm:$0xf]
        %v370 = vld [vmem:[%s368] ss:$8 sm:$0xf0]
        %v371 = vor.u32 %v369, %v370
        %s372 = sld [smem:[#allocation2 + $0x3]]
        %v373 = vstv %s372
        %v374 = vmul.f32 %v367, %v373
        %v375 = vmul.f32 %v371, %v373
        %s376 = sld [smem:[#allocation4 + $0x3]]
        %v377 = vstv %s376
        %v378 = vadd.f32 %v374, %v377
        %v379 = vadd.f32 %v375, %v377
        %vm380 = vcmp.ge.f32.partialorder %v378, 0.0
        %vm381 = vcmp.ge.f32.partialorder %v379, 0.0
        %s382 = sld [smem:[#allocation6 + $0x3]]
        %v383 = vstv %s382
        %v384 = vmul.f32 %v383, %v378
        %v385 = vmul.f32 %v383, %v379
        %v386 = vsel %vm380, %v378, %v384
        %v387 = vsel %vm381, %v379, %v385
        %s388 = scalar_lea.vmem %s274, 3
        %389 = vst [vmem:[%s388] ss:$8 sm:$0xf] %v386
        %390 = vst [vmem:[%s388] ss:$8 sm:$0xf0] %v386
        %s391 = scalar_lea.vmem %s274, 67
        %392 = vst [vmem:[%s391] ss:$8 sm:$0xf] %v387
        %393 = vst [vmem:[%s391] ss:$8 sm:$0xf0] %v387
        %s394 = scalar_lea.vmem %s264, 4
        %v395 = vld [vmem:[%s394] ss:$8 sm:$0xf]
        %v396 = vld [vmem:[%s394] ss:$8 sm:$0xf0]
        %v397 = vor.u32 %v395, %v396
        %s398 = scalar_lea.vmem %s264, 68
        %v399 = vld [vmem:[%s398] ss:$8 sm:$0xf]
        %v400 = vld [vmem:[%s398] ss:$8 sm:$0xf0]
        %v401 = vor.u32 %v399, %v400
        %s402 = sld [smem:[#allocation2 + $0x4]]
        %v403 = vstv %s402
        %v404 = vmul.f32 %v397, %v403
        %v405 = vmul.f32 %v401, %v403
        %s406 = sld [smem:[#allocation4 + $0x4]]
        %v407 = vstv %s406
        %v408 = vadd.f32 %v404, %v407
        %v409 = vadd.f32 %v405, %v407
        %vm410 = vcmp.ge.f32.partialorder %v408, 0.0
        %vm411 = vcmp.ge.f32.partialorder %v409, 0.0
        %s412 = sld [smem:[#allocation6 + $0x4]]
        %v413 = vstv %s412
        %v414 = vmul.f32 %v413, %v408
        %v415 = vmul.f32 %v413, %v409
        %v416 = vsel %vm410, %v408, %v414
        %v417 = vsel %vm411, %v409, %v415
        %s418 = scalar_lea.vmem %s274, 4
        %419 = vst [vmem:[%s418] ss:$8 sm:$0xf] %v416
        %420 = vst [vmem:[%s418] ss:$8 sm:$0xf0] %v416
        %s421 = scalar_lea.vmem %s274, 68
        %422 = vst [vmem:[%s421] ss:$8 sm:$0xf] %v417
        %423 = vst [vmem:[%s421] ss:$8 sm:$0xf0] %v417
        %s424 = scalar_lea.vmem %s264, 5
        %v425 = vld [vmem:[%s424] ss:$8 sm:$0xf]
        %v426 = vld [vmem:[%s424] ss:$8 sm:$0xf0]
        %v427 = vor.u32 %v425, %v426
        %s428 = scalar_lea.vmem %s264, 69
        %v429 = vld [vmem:[%s428] ss:$8 sm:$0xf]
        %v430 = vld [vmem:[%s428] ss:$8 sm:$0xf0]
        %v431 = vor.u32 %v429, %v430
        %s432 = sld [smem:[#allocation2 + $0x5]]
        %v433 = vstv %s432
        %v434 = vmul.f32 %v427, %v433
        %v435 = vmul.f32 %v431, %v433
        %s436 = sld [smem:[#allocation4 + $0x5]]
        %v437 = vstv %s436
        %v438 = vadd.f32 %v434, %v437
        %v439 = vadd.f32 %v435, %v437
        %vm440 = vcmp.ge.f32.partialorder %v438, 0.0
        %vm441 = vcmp.ge.f32.partialorder %v439, 0.0
        %s442 = sld [smem:[#allocation6 + $0x5]]
        %v443 = vstv %s442
        %v444 = vmul.f32 %v443, %v438
        %v445 = vmul.f32 %v443, %v439
        %v446 = vsel %vm440, %v438, %v444
        %v447 = vsel %vm441, %v439, %v445
        %s448 = scalar_lea.vmem %s274, 5
        %449 = vst [vmem:[%s448] ss:$8 sm:$0xf] %v446
        %450 = vst [vmem:[%s448] ss:$8 sm:$0xf0] %v446
        %s451 = scalar_lea.vmem %s274, 69
        %452 = vst [vmem:[%s451] ss:$8 sm:$0xf] %v447
        %453 = vst [vmem:[%s451] ss:$8 sm:$0xf0] %v447
        %s454 = scalar_lea.vmem %s264, 6
        %v455 = vld [vmem:[%s454] ss:$8 sm:$0xf]
        %v456 = vld [vmem:[%s454] ss:$8 sm:$0xf0]
        %v457 = vor.u32 %v455, %v456
        %s458 = scalar_lea.vmem %s264, 70
        %v459 = vld [vmem:[%s458] ss:$8 sm:$0xf]
        %v460 = vld [vmem:[%s458] ss:$8 sm:$0xf0]
        %v461 = vor.u32 %v459, %v460
        %s462 = sld [smem:[#allocation2 + $0x6]]
        %v463 = vstv %s462
        %v464 = vmul.f32 %v457, %v463
        %v465 = vmul.f32 %v461, %v463
        %s466 = sld [smem:[#allocation4 + $0x6]]
        %v467 = vstv %s466
        %v468 = vadd.f32 %v464, %v467
        %v469 = vadd.f32 %v465, %v467
        %vm470 = vcmp.ge.f32.partialorder %v468, 0.0
        %vm471 = vcmp.ge.f32.partialorder %v469, 0.0
        %s472 = sld [smem:[#allocation6 + $0x6]]
        %v473 = vstv %s472
        %v474 = vmul.f32 %v473, %v468
        %v475 = vmul.f32 %v473, %v469
        %v476 = vsel %vm470, %v468, %v474
        %v477 = vsel %vm471, %v469, %v475
        %s478 = scalar_lea.vmem %s274, 6
        %479 = vst [vmem:[%s478] ss:$8 sm:$0xf] %v476
        %480 = vst [vmem:[%s478] ss:$8 sm:$0xf0] %v476
        %s481 = scalar_lea.vmem %s274, 70
        %482 = vst [vmem:[%s481] ss:$8 sm:$0xf] %v477
        %483 = vst [vmem:[%s481] ss:$8 sm:$0xf0] %v477
        %s484 = scalar_lea.vmem %s264, 7
        %v485 = vld [vmem:[%s484] ss:$8 sm:$0xf]
        %v486 = vld [vmem:[%s484] ss:$8 sm:$0xf0]
        %v487 = vor.u32 %v485, %v486
        %s488 = scalar_lea.vmem %s264, 71
        %v489 = vld [vmem:[%s488] ss:$8 sm:$0xf]
        %v490 = vld [vmem:[%s488] ss:$8 sm:$0xf0]
        %v491 = vor.u32 %v489, %v490
        %s492 = sld [smem:[#allocation2 + $0x7]]
        %v493 = vstv %s492
        %v494 = vmul.f32 %v487, %v493
        %v495 = vmul.f32 %v491, %v493
        %s496 = sld [smem:[#allocation4 + $0x7]]
        %v497 = vstv %s496
        %v498 = vadd.f32 %v494, %v497
        %v499 = vadd.f32 %v495, %v497
        %vm500 = vcmp.ge.f32.partialorder %v498, 0.0
        %vm501 = vcmp.ge.f32.partialorder %v499, 0.0
        %s502 = sld [smem:[#allocation6 + $0x7]]
        %v503 = vstv %s502
        %v504 = vmul.f32 %v503, %v498
        %v505 = vmul.f32 %v503, %v499
        %v506 = vsel %vm500, %v498, %v504
        %v507 = vsel %vm501, %v499, %v505
        %s508 = scalar_lea.vmem %s274, 7
        %509 = vst [vmem:[%s508] ss:$8 sm:$0xf] %v506
        %510 = vst [vmem:[%s508] ss:$8 sm:$0xf0] %v506
        %s511 = scalar_lea.vmem %s274, 71
        %512 = vst [vmem:[%s511] ss:$8 sm:$0xf] %v507
        %513 = vst [vmem:[%s511] ss:$8 sm:$0xf0] %v507
        %s514 = smul.u32 16, %s22
        %p515 = scmp.lt.s32.totalorder %s21, 1
        %s516 = scalar_select %p515, %s21, 1
        %p517 = scmp.lt.s32.totalorder %s514, 15
        %s518 = scalar_select %p517, %s514, 15
        %s519 = smul.addr %s516, 16
        %s520 = sadd.s32 %s518, %s519
        %s521 = smul.addr %s520, 8
        %s522 = scalar_lea.vmem %s4, %s521
        // Predicated region
        $region49: #{dilated_parallel_conv_block.3} parent=35 // pred_check
          %p523 = pneg %p140
        $region50: #{dilated_parallel_conv_block.3} parent=35 // pred_check_branch
          %525 = sbr.rel (%p523) target = $region52
        $region51: #{dilated_parallel_conv_block.3} parent=35 // pred_region
          %s526 = smul.u32 16, %s22
        $region52: #{dilated_parallel_conv_block.3} parent=35 // pred_fallthru
          _
      $region36: #{dilated_parallel_conv_block.3} parent=5 // pred_fallthru
        _
      %p527 = scmp.le.s32.totalorder 2, %s12
      // Predicated region
      $region53: #{dilated_parallel_conv_block.3} parent=5 // pred_check
        %p528 = pneg %p527
      $region54: #{dilated_parallel_conv_block.3} parent=5 // pred_check_branch
        %530 = sbr.rel (%p528) target = $region56
      $region55: #{dilated_parallel_conv_block.3} parent=5 // pred_region
        %s531 = ssub.s32 %s12, 2
        // Predicated region
        $region57: #{dilated_parallel_conv_block.3} parent=55 // pred_check
          %p532 = pneg %p146
        $region58: #{dilated_parallel_conv_block.3} parent=55 // pred_check_branch
          %534 = sbr.rel (%p532) target = $region60
        $region59: #{dilated_parallel_conv_block.3} parent=55 // pred_region
          %s535 = smul.u32 16, %s24
          %p536 = scmp.lt.s32.totalorder %s23, 1
          %s537 = scalar_select %p536, %s23, 1
          %p538 = scmp.lt.s32.totalorder %s535, 15
          %s539 = scalar_select %p538, %s535, 15
          %s540 = smul.addr %s537, 16
          %s541 = sadd.s32 %s539, %s540
          %s542 = smul.addr %s541, 8
          %s543 = scalar_lea.vmem %s4, %s542
        $region60: #{dilated_parallel_conv_block.3} parent=55 // pred_fallthru
          _
      $region56: #{dilated_parallel_conv_block.3} parent=5 // pred_fallthru
        _
    $region6: #{dilated_parallel_conv_block.3} parent=1 // loop_footer
      %s16 = sadd.s32 1, %s12
    $region7: #{dilated_parallel_conv_block.3} parent=1 // loop_footer_branch
      %11 = sbr.rel target = $region3
    $region8: #{dilated_parallel_conv_block.3} parent=1 // loop_exit
      _
    %544 = vsyncpa [#allocation3], 1
    %s545 = scalar_lea.sflag [#allocation3], 1
    %546 = vsyncpa %s545, 1
    %547 = vsyncpa [#allocation5], 1

// kernel: dilated_parallel_conv_block.2
$region0: #{dilated_parallel_conv_block.2}
  #allocation0 [shape = 'u32[]', space=smem, size = 0x4, offset = 0x4, fixed_abs, tag = 'smem constant byte address 0x4 - core index']
  #allocation1 [shape = 'u32[144,128]{1,0:T(1,128)}', space=vmem, size = 0x12000, scoped, tag = 'internal scratch']
  #allocation2 [shape = 'f32[2,24,128]{2,1,0:T(8,128)}', space=vmem, size = 0x6000, scoped, tag = 'scratch operand']
  %s0 = inlined_call_operand.vmem [shape: f32[2,4,16,128], index: 0, kind: input, shape index: {}, may-alias: {0,1,2}]
  %s1 = inlined_call_operand.vmem [shape: f32[2,4,16,128], index: 1, kind: input, shape index: {}, may-alias: {0,1,2}]
  %s2 = inlined_call_operand.vmem [shape: f32[2,4,16,128], index: 2, kind: input, shape index: {}, may-alias: {0,1,2}]
  %s3 = inlined_call_operand.vmem [shape: f32[8], index: 3, kind: input, shape index: {}]
  %s4 = inlined_call_operand.vmem [shape: f32[72], index: 4, kind: input, shape index: {}]
  %s5 = inlined_call_operand.vmem [shape: f32[16], index: 5, kind: input, shape index: {}]
  %s6 = inlined_call_operand.vmem [shape: f32[2,8,16,128], index: 6, kind: output, shape index: {0}]
  %s7 = inlined_call_operand.vmem [shape: f32[2,2,2,8], index: 7, kind: output, shape index: {1}]
  %8 = xla_tuple %s6, %s7
  %s9 = sld [smem:[#allocation0]]
  $region241: #{dilated_parallel_conv_block.2} parent=0
    _
  %s11 = ssub.s32 1, %s9
  %s12 = scalar_select 0, %s11, %s9
  $region1: #{dilated_parallel_conv_block.2} parent=0
    #allocation3 [shape = 'u8[32768]{0}', space=vmem, size = 0x8000, scoped, tag = 'input window, operand 0']
    #allocation4 [shape = 'u8[32768]{0}', space=vmem, size = 0x8000, scoped, tag = 'input window, operand 1']
    #allocation5 [shape = 'u8[32768]{0}', space=vmem, size = 0x8000, scoped, tag = 'input window, operand 2']
    #allocation6 [shape = 'u8[512]{0}', space=smem, size = 0x200, scoped, tag = 'input window, operand 3, single buffered']
    #allocation7 [shape = 's32[2]{0}', space=sflag, size = 0x8, scoped, tag = 'scoped memory for dilated_parallel_conv_block.2']
    #allocation8 [shape = 'u8[512]{0}', space=smem, size = 0x200, scoped, tag = 'input window, operand 4, single buffered']
    #allocation9 [shape = 's32[1]{0}', space=sflag, size = 0x4, scoped, tag = 'scoped memory for dilated_parallel_conv_block.2']
    #allocation10 [shape = 'u8[512]{0}', space=smem, size = 0x200, scoped, tag = 'input window, operand 5, single buffered']
    #allocation11 [shape = 'u8[65536]{0}', space=vmem, size = 0x10000, scoped, tag = 'output window, operand 0']
    %13 = vsyncpa [#allocation7], 0
    %14 = vsyncpa [#allocation9], 0
    loop: start=0, step=1, limit=6
    $region2: #{dilated_parallel_conv_block.2} parent=1 // loop_pre_header
      _
    $region3: #{dilated_parallel_conv_block.2} parent=1 // loop_header
      %s16 = sphi 0, %s20
      %p17 = scmp.ge.s32.totalorder %s16, 6
      %s23 = sphi 0, %s35
      %s24 = sphi 0, %s31
      %s25 = sphi 0, %s23
      %s26 = sphi 0, %s24
      %s27 = sphi 0, %s25
      %s28 = sphi 0, %s26
      %s66 = sphi 0, %s68
      %s69 = sphi 0, %s66
      %s70 = sphi 0, %s69
      %s86 = sphi 0, %s70
      %s94 = sphi 0, %s96
      %s97 = sphi 0, %s94
      %s98 = sphi 0, %s97
      %s114 = sphi 0, %s98
      %s148 = sphi 0, %s150
      %s151 = sphi 0, %s148
      %s152 = sphi 0, %s151
      %s168 = sphi 0, %s152
      %s172 = sphi 0, %s172
      %s174 = sphi 0, %s172
      %s175 = sphi 0, %s174
      %s189 = sphi 0, %s175
      %s193 = sphi 0, %s193
      %s195 = sphi 0, %s193
      %s196 = sphi 0, %s195
      %s210 = sphi 0, %s196
      %s214 = sphi 0, %s214
      %s216 = sphi 0, %s214
      %s217 = sphi 0, %s216
      %s231 = sphi 0, %s217
      %s239 = sphi 0, %s241
      %s242 = sphi 0, %s239
      %s243 = sphi 0, %s242
      %s259 = sphi 0, %s243
      %s267 = sphi 0, %s269
      %s270 = sphi 0, %s267
      %s271 = sphi 0, %s270
      %s287 = sphi 0, %s271
    $region4: #{dilated_parallel_conv_block.2} parent=1 // loop_header_branch
      %19 = sbr.rel (%p17) target = $region8
    $region5: #{dilated_parallel_conv_block.2} parent=1 // loop_body
      %s21 = ssub.s32 %s16, 1
      %s22 = ssub.s32 %s16, 2
      %s29 = sadd.s32 1, %s24
      %p30 = scmp.ge.s32.totalorder %s29, 2
      %s31 = scalar_select %p30, 0, %s29
      %s32 = sadd.s32 1, %s23
      %s33 = scalar_select %p30, %s32, %s23
      %p34 = scmp.ge.s32.totalorder %s33, 2
      %s35 = scalar_select %p34, 0, %s33
      %s36 = sadd.s32 %s24, 1
      %p37 = scmp.lt.s32.totalorder %s36, 0
      %s38 = ssub.s32 0, %s36
      %s39 = scalar_select %p37, %s38, %s36
      %s40 = sand.u32 %s39, 1
      %s41 = ssub.s32 0, %s40
      %s42 = scalar_select %p37, %s41, %s40
      %p43 = scmp.ne.s32.totalorder %s42, 0
      %p44 = scmp.lt.s32.totalorder %s42, 0
      %p45 = pnand %p44, %p43
      %p46 = pneg %p45
      %s47 = sadd.s32 %s42, 2
      %s48 = scalar_select %p46, %s47, %s42
      %s49 = sadd.s32 %s31, 1
      %p50 = scmp.lt.s32.totalorder %s49, 0
      %s51 = ssub.s32 0, %s49
      %s52 = scalar_select %p50, %s51, %s49
      %s53 = sand.u32 %s52, 1
      %s54 = ssub.s32 0, %s53
      %s55 = scalar_select %p50, %s54, %s53
      %p56 = scmp.ne.s32.totalorder %s55, 0
      %p57 = scmp.lt.s32.totalorder %s55, 0
      %p58 = pnand %p57, %p56
      %p59 = pneg %p58
      %s60 = sadd.s32 %s55, 2
      %s61 = scalar_select %p59, %s60, %s55
      %s62 = ssub.s32 %s23, %s35
      %s63 = ssub.s32 %s48, %s61
      %s64 = sor.u32 %s62, %s63
      %p65 = scmp.eq.s32.totalorder %s64, 0
      %s67 = sadd.s32 %s66, 1
      %s68 = scalar_select %p65, %s66, %s67
      %p71 = pneg %p65
      %p72 = scmp.eq.s32.totalorder %s16, 3
      %p73 = por %p71, %p72
      %p74 = scmp.ne.s32.totalorder %s66, %s69
      %p75 = scmp.eq.s32.totalorder %s16, 0
      %p76 = por %p74, %p75
      %p77 = scmp.ne.s32.totalorder %s66, %s69
      %p78 = scmp.eq.s32.totalorder %s21, 3
      %p79 = por %p77, %p78
      %p80 = scmp.ne.s32.totalorder %s69, %s70
      %p81 = scmp.eq.s32.totalorder %s21, 0
      %p82 = por %p80, %p81
      %p83 = scmp.ne.s32.totalorder %s69, %s70
      %p84 = scmp.eq.s32.totalorder %s22, 3
      %p85 = por %p83, %p84
      %p87 = scmp.ne.s32.totalorder %s70, %s86
      %p88 = scmp.eq.s32.totalorder %s22, 0
      %p89 = por %p87, %p88
      %s90 = ssub.s32 %s23, %s35
      %s91 = ssub.s32 %s24, %s31
      %s92 = sor.u32 %s90, %s91
      %p93 = scmp.eq.s32.totalorder %s92, 0
      %s95 = sadd.s32 %s94, 1
      %s96 = scalar_select %p93, %s94, %s95
      %p99 = pneg %p93
      %p100 = scmp.eq.s32.totalorder %s16, 3
      %p101 = por %p99, %p100
      %p102 = scmp.ne.s32.totalorder %s94, %s97
      %p103 = scmp.eq.s32.totalorder %s16, 0
      %p104 = por %p102, %p103
      %p105 = scmp.ne.s32.totalorder %s94, %s97
      %p106 = scmp.eq.s32.totalorder %s21, 3
      %p107 = por %p105, %p106
      %p108 = scmp.ne.s32.totalorder %s97, %s98
      %p109 = scmp.eq.s32.totalorder %s21, 0
      %p110 = por %p108, %p109
      %p111 = scmp.ne.s32.totalorder %s97, %s98
      %p112 = scmp.eq.s32.totalorder %s22, 3
      %p113 = por %p111, %p112
      %p115 = scmp.ne.s32.totalorder %s98, %s114
      %p116 = scmp.eq.s32.totalorder %s22, 0
      %p117 = por %p115, %p116
      %s118 = sadd.s32 %s24, 1
      %p119 = scmp.lt.s32.totalorder %s118, 0
      %s120 = ssub.s32 0, %s118
      %s121 = scalar_select %p119, %s120, %s118
      %s122 = sand.u32 %s121, 1
      %s123 = ssub.s32 0, %s122
      %s124 = scalar_select %p119, %s123, %s122
      %p125 = scmp.ne.s32.totalorder %s124, 0
      %p126 = scmp.lt.s32.totalorder %s124, 0
      %p127 = pnand %p126, %p125
      %p128 = pneg %p127
      %s129 = sadd.s32 %s124, 2
      %s130 = scalar_select %p128, %s129, %s124
      %s131 = sadd.s32 %s31, 1
      %p132 = scmp.lt.s32.totalorder %s131, 0
      %s133 = ssub.s32 0, %s131
      %s134 = scalar_select %p132, %s133, %s131
      %s135 = sand.u32 %s134, 1
      %s136 = ssub.s32 0, %s135
      %s137 = scalar_select %p132, %s136, %s135
      %p138 = scmp.ne.s32.totalorder %s137, 0
      %p139 = scmp.lt.s32.totalorder %s137, 0
      %p140 = pnand %p139, %p138
      %p141 = pneg %p140
      %s142 = sadd.s32 %s137, 2
      %s143 = scalar_select %p141, %s142, %s137
      %s144 = ssub.s32 %s23, %s35
      %s145 = ssub.s32 %s130, %s143
      %s146 = sor.u32 %s144, %s145
      %p147 = scmp.eq.s32.totalorder %s146, 0
      %s149 = sadd.s32 %s148, 1
      %s150 = scalar_select %p147, %s148, %s149
      %p153 = pneg %p147
      %p154 = scmp.eq.s32.totalorder %s16, 3
      %p155 = por %p153, %p154
      %p156 = scmp.ne.s32.totalorder %s148, %s151
      %p157 = scmp.eq.s32.totalorder %s16, 0
      %p158 = por %p156, %p157
      %p159 = scmp.ne.s32.totalorder %s148, %s151
      %p160 = scmp.eq.s32.totalorder %s21, 3
      %p161 = por %p159, %p160
      %p162 = scmp.ne.s32.totalorder %s151, %s152
      %p163 = scmp.eq.s32.totalorder %s21, 0
      %p164 = por %p162, %p163
      %p165 = scmp.ne.s32.totalorder %s151, %s152
      %p166 = scmp.eq.s32.totalorder %s22, 3
      %p167 = por %p165, %p166
      %p169 = scmp.ne.s32.totalorder %s152, %s168
      %p170 = scmp.eq.s32.totalorder %s22, 0
      %p171 = por %p169, %p170
      %s173 = sadd.s32 %s172, 1
      %p176 = scmp.eq.s32.totalorder %s16, 3
      %p177 = scmp.ne.s32.totalorder %s172, %s174
      %p178 = scmp.eq.s32.totalorder %s16, 0
      %p179 = por %p177, %p178
      %p180 = scmp.ne.s32.totalorder %s172, %s174
      %p181 = scmp.eq.s32.totalorder %s21, 3
      %p182 = por %p180, %p181
      %p183 = scmp.ne.s32.totalorder %s174, %s175
      %p184 = scmp.eq.s32.totalorder %s21, 0
      %p185 = por %p183, %p184
      %p186 = scmp.ne.s32.totalorder %s174, %s175
      %p187 = scmp.eq.s32.totalorder %s22, 3
      %p188 = por %p186, %p187
      %p190 = scmp.ne.s32.totalorder %s175, %s189
      %p191 = scmp.eq.s32.totalorder %s22, 0
      %p192 = por %p190, %p191
      %s194 = sadd.s32 %s193, 1
      %p197 = scmp.eq.s32.totalorder %s16, 3
      %p198 = scmp.ne.s32.totalorder %s193, %s195
      %p199 = scmp.eq.s32.totalorder %s16, 0
      %p200 = por %p198, %p199
      %p201 = scmp.ne.s32.totalorder %s193, %s195
      %p202 = scmp.eq.s32.totalorder %s21, 3
      %p203 = por %p201, %p202
      %p204 = scmp.ne.s32.totalorder %s195, %s196
      %p205 = scmp.eq.s32.totalorder %s21, 0
      %p206 = por %p204, %p205
      %p207 = scmp.ne.s32.totalorder %s195, %s196
      %p208 = scmp.eq.s32.totalorder %s22, 3
      %p209 = por %p207, %p208
      %p211 = scmp.ne.s32.totalorder %s196, %s210
      %p212 = scmp.eq.s32.totalorder %s22, 0
      %p213 = por %p211, %p212
      %s215 = sadd.s32 %s214, 1
      %p218 = scmp.eq.s32.totalorder %s16, 3
      %p219 = scmp.ne.s32.totalorder %s214, %s216
      %p220 = scmp.eq.s32.totalorder %s16, 0
      %p221 = por %p219, %p220
      %p222 = scmp.ne.s32.totalorder %s214, %s216
      %p223 = scmp.eq.s32.totalorder %s21, 3
      %p224 = por %p222, %p223
      %p225 = scmp.ne.s32.totalorder %s216, %s217
      %p226 = scmp.eq.s32.totalorder %s21, 0
      %p227 = por %p225, %p226
      %p228 = scmp.ne.s32.totalorder %s216, %s217
      %p229 = scmp.eq.s32.totalorder %s22, 3
      %p230 = por %p228, %p229
      %p232 = scmp.ne.s32.totalorder %s217, %s231
      %p233 = scmp.eq.s32.totalorder %s22, 0
      %p234 = por %p232, %p233
      %s235 = ssub.s32 %s23, %s35
      %s236 = ssub.s32 %s24, %s31
      %s237 = sor.u32 %s235, %s236
      %p238 = scmp.eq.s32.totalorder %s237, 0
      %s240 = sadd.s32 %s239, 1
      %s241 = scalar_select %p238, %s239, %s240
      %p244 = pneg %p238
      %p245 = scmp.eq.s32.totalorder %s16, 3
      %p246 = por %p244, %p245
      %p247 = scmp.ne.s32.totalorder %s239, %s242
      %p248 = scmp.eq.s32.totalorder %s16, 0
      %p249 = por %p247, %p248
      %p250 = scmp.ne.s32.totalorder %s239, %s242
      %p251 = scmp.eq.s32.totalorder %s21, 3
      %p252 = por %p250, %p251
      %p253 = scmp.ne.s32.totalorder %s242, %s243
      %p254 = scmp.eq.s32.totalorder %s21, 0
      %p255 = por %p253, %p254
      %p256 = scmp.ne.s32.totalorder %s242, %s243
      %p257 = scmp.eq.s32.totalorder %s22, 3
      %p258 = por %p256, %p257
      %p260 = scmp.ne.s32.totalorder %s243, %s259
      %p261 = scmp.eq.s32.totalorder %s22, 0
      %p262 = por %p260, %p261
      %s263 = ssub.s32 %s23, %s35
      %s264 = ssub.s32 %s24, %s31
      %s265 = sor.u32 %s263, %s264
      %p266 = scmp.eq.s32.totalorder %s265, 0
      %s268 = sadd.s32 %s267, 1
      %s269 = scalar_select %p266, %s267, %s268
      %p272 = pneg %p266
      %p273 = scmp.eq.s32.totalorder %s16, 3
      %p274 = por %p272, %p273
      %p275 = scmp.ne.s32.totalorder %s267, %s270
      %p276 = scmp.eq.s32.totalorder %s16, 0
      %p277 = por %p275, %p276
      %p278 = scmp.ne.s32.totalorder %s267, %s270
      %p279 = scmp.eq.s32.totalorder %s21, 3
      %p280 = por %p278, %p279
      %p281 = scmp.ne.s32.totalorder %s270, %s271
      %p282 = scmp.eq.s32.totalorder %s21, 0
      %p283 = por %p281, %p282
      %p284 = scmp.ne.s32.totalorder %s270, %s271
      %p285 = scmp.eq.s32.totalorder %s22, 3
      %p286 = por %p284, %p285
      %p288 = scmp.ne.s32.totalorder %s271, %s287
      %p289 = scmp.eq.s32.totalorder %s22, 0
      %p290 = por %p288, %p289
      %p291 = scmp.le.s32.totalorder 1, %s16
      %p292 = scmp.lt.s32.totalorder %s16, 5
      %p293 = pnand %p291, %p292
      %p294 = pneg %p293
      // Predicated region
      $region9: #{dilated_parallel_conv_block.2} parent=5 // pred_check
        _
      $region10: #{dilated_parallel_conv_block.2} parent=5 // pred_check_branch
        %296 = sbr.rel (%p293) target = $region12
      $region11: #{dilated_parallel_conv_block.2} parent=5 // pred_region
        %s297 = ssub.s32 %s16, 1
        // Predicated region
        $region13: #{dilated_parallel_conv_block.2} parent=11 // pred_check
          %p298 = pneg %p185
        $region14: #{dilated_parallel_conv_block.2} parent=11 // pred_check_branch
          %300 = sbr.rel (%p298) target = $region16
        $region15: #{dilated_parallel_conv_block.2} parent=11 // pred_region
          %s302 = ssub.s32 16, 16
          %303 = vsyncadd [#allocation7], %s302
          %s305 = sshll.u32 %s3, 4
          %s306 = int_to_ptr.vmem [resolvable:$true] %s305
          %308 = dma.vmem_to_smem %s306, 16, [#allocation6], [#allocation7]
        $region16: #{dilated_parallel_conv_block.2} parent=11 // pred_fallthru
          _
        // Predicated region
        $region17: #{dilated_parallel_conv_block.2} parent=11 // pred_check
          %p309 = pneg %p206
        $region18: #{dilated_parallel_conv_block.2} parent=11 // pred_check_branch
          %311 = sbr.rel (%p309) target = $region20
        $region19: #{dilated_parallel_conv_block.2} parent=11 // pred_region
          %s313 = ssub.s32 16, 16
          %314 = vsyncadd [#allocation9], %s313
          %s316 = sshll.u32 %s4, 4
          %s317 = int_to_ptr.vmem [resolvable:$true] %s316
          %319 = dma.vmem_to_smem %s317, 16, [#allocation8], [#allocation9]
        $region20: #{dilated_parallel_conv_block.2} parent=11 // pred_fallthru
          _
        // Predicated region
        $region21: #{dilated_parallel_conv_block.2} parent=11 // pred_check
          %p320 = pneg %p227
        $region22: #{dilated_parallel_conv_block.2} parent=11 // pred_check_branch
          %322 = sbr.rel (%p320) target = $region24
        $region23: #{dilated_parallel_conv_block.2} parent=11 // pred_region
          %s324 = ssub.s32 16, 16
          %325 = vsyncadd [#allocation9], %s324
          %s327 = sshll.u32 %s5, 4
          %s328 = int_to_ptr.vmem [resolvable:$true] %s327
          %330 = dma.vmem_to_smem %s328, 16, [#allocation10], [#allocation9]
        $region24: #{dilated_parallel_conv_block.2} parent=11 // pred_fallthru
          _
      $region12: #{dilated_parallel_conv_block.2} parent=5 // pred_fallthru
        _
      %p331 = scmp.lt.s32.totalorder %s16, 4
      // Predicated region
      $region25: #{dilated_parallel_conv_block.2} parent=5 // pred_check
        %p332 = pneg %p331
      $region26: #{dilated_parallel_conv_block.2} parent=5 // pred_check_branch
        %334 = sbr.rel (%p332) target = $region28
      $region27: #{dilated_parallel_conv_block.2} parent=5 // pred_region
        // Predicated region
        $region29: #{dilated_parallel_conv_block.2} parent=27 // pred_check
          %p335 = pneg %p76
        $region30: #{dilated_parallel_conv_block.2} parent=27 // pred_check_branch
          %337 = sbr.rel (%p335) target = $region32
        $region31: #{dilated_parallel_conv_block.2} parent=27 // pred_region
          %s338 = sand.u32 %s66, 1
          %s339 = sand.u32 %s66, 1
          %s340 = smul.addr %s339, 32
          %s341 = scalar_lea.vmem [#allocation3], %s340
          %s342 = sadd.s32 %s24, 1
          %p343 = scmp.lt.s32.totalorder %s342, 0
          %s344 = ssub.s32 0, %s342
          %s345 = scalar_select %p343, %s344, %s342
          %s346 = sand.u32 %s345, 1
          %s347 = ssub.s32 0, %s346
          %s348 = scalar_select %p343, %s347, %s346
          %p349 = scmp.ne.s32.totalorder %s348, 0
          %p350 = scmp.lt.s32.totalorder %s348, 0
          %p351 = pnand %p350, %p349
          %p352 = pneg %p351
          %s353 = sadd.s32 %s348, 2
          %s354 = scalar_select %p352, %s353, %s348
          %s355 = smul.addr %s23, 8
          %s356 = sadd.s32 %s354, %s355
          %s357 = smul.addr %s356, 8
          %s358 = scalar_lea.vmem %s0, %s357
          // Predicated region
          $region33: #{dilated_parallel_conv_block.2} parent=31 // pred_check
            _
          $region34: #{dilated_parallel_conv_block.2} parent=31 // pred_check_branch
            %360 = sbr.rel (0) target = $region36
          $region35: #{dilated_parallel_conv_block.2} parent=31 // pred_region
            // Predicated region
            $region37: #{dilated_parallel_conv_block.2} parent=35 // pred_check
              _
            $region38: #{dilated_parallel_conv_block.2} parent=35 // pred_check_branch
              %362 = sbr.rel (0) target = $region40
            $region39: #{dilated_parallel_conv_block.2} parent=35 // pred_region
              // Predicated region
              $region52: #{dilated_parallel_conv_block.2} parent=39 // pred_check
                _
              $region53: #{dilated_parallel_conv_block.2} parent=39 // pred_check_branch
                %384 = sbr.rel (0) target = $region55
              $region54: #{dilated_parallel_conv_block.2} parent=39 // pred_region
                loop: start=0, step=1, limit=1
                $region56: #{dilated_parallel_conv_block.2} parent=54 // loop_pre_header
                  _
                $region57: #{dilated_parallel_conv_block.2} parent=54 // loop_header
                  %s386 = sphi 0, %s390
                  %p387 = scmp.ge.s32.totalorder %s386, 1
                  %s391 = sphi %s358, %s358
                  %s392 = sphi %s341, %s341
                $region58: #{dilated_parallel_conv_block.2} parent=54 // loop_header_branch
                  %389 = sbr.rel (%p387) target = $region62
                $region59: #{dilated_parallel_conv_block.2} parent=54 // loop_body
                  %v393 = vld [vmem:[%s391] sm:$0xff]
                  %394 = vst [vmem:[%s392] sm:$0xff] %v393
                  %v395 = vld [vmem:[%s391 + $0x10] sm:$0xff]
                  %396 = vst [vmem:[%s392 + $0x8] sm:$0xff] %v395
                  %v397 = vld [vmem:[%s391 + $0x20] sm:$0xff]
                  %398 = vst [vmem:[%s392 + $0x10] sm:$0xff] %v397
                  %v399 = vld [vmem:[%s391 + $0x30] sm:$0xff]
                  %400 = vst [vmem:[%s392 + $0x18] sm:$0xff] %v399
                $region60: #{dilated_parallel_conv_block.2} parent=54 // loop_footer
                  %s390 = sadd.s32 1, %s386
                $region61: #{dilated_parallel_conv_block.2} parent=54 // loop_footer_branch
                  %385 = sbr.rel target = $region57
                $region62: #{dilated_parallel_conv_block.2} parent=54 // loop_exit
                  _
              $region55: #{dilated_parallel_conv_block.2} parent=39 // pred_fallthru
                _
              // Predicated region
              $region63: #{dilated_parallel_conv_block.2} parent=39 // pred_check
                _
              $region64: #{dilated_parallel_conv_block.2} parent=39 // pred_check_branch
                %402 = sbr.rel target = $region66
              $region65: #{dilated_parallel_conv_block.2} parent=39 // pred_region
                _
              $region66: #{dilated_parallel_conv_block.2} parent=39 // pred_fallthru
                _
            $region40: #{dilated_parallel_conv_block.2} parent=35 // pred_fallthru
              _
            // Predicated region
            $region41: #{dilated_parallel_conv_block.2} parent=35 // pred_check
              _
            $region42: #{dilated_parallel_conv_block.2} parent=35 // pred_check_branch
              %364 = sbr.rel target = $region44
            $region43: #{dilated_parallel_conv_block.2} parent=35 // pred_region
              %s366 = ssub.s32 256, 1
              loop: start=0, step=1, limit=1
              $region45: #{dilated_parallel_conv_block.2} parent=43 // loop_pre_header
                _
              $region46: #{dilated_parallel_conv_block.2} parent=43 // loop_header
                %s368 = sphi 0, %s372
                %p369 = scmp.ge.s32.totalorder %s368, 1
                %s373 = sphi %s358, %s358
                %s374 = sphi %s341, %s341
              $region47: #{dilated_parallel_conv_block.2} parent=43 // loop_header_branch
                %371 = sbr.rel (%p369) target = $region51
              $region48: #{dilated_parallel_conv_block.2} parent=43 // loop_body
                %v375 = vld [vmem:[%s373] sm:%s366]
                %376 = vst [vmem:[%s374] sm:%s366] %v375
                %v377 = vld [vmem:[%s373 + $0x10] sm:%s366]
                %378 = vst [vmem:[%s374 + $0x8] sm:%s366] %v377
                %v379 = vld [vmem:[%s373 + $0x20] sm:%s366]
                %380 = vst [vmem:[%s374 + $0x10] sm:%s366] %v379
                %v381 = vld [vmem:[%s373 + $0x30] sm:%s366]
                %382 = vst [vmem:[%s374 + $0x18] sm:%s366] %v381
              $region49: #{dilated_parallel_conv_block.2} parent=43 // loop_footer
                %s372 = sadd.s32 1, %s368
              $region50: #{dilated_parallel_conv_block.2} parent=43 // loop_footer_branch
                %367 = sbr.rel target = $region46
              $region51: #{dilated_parallel_conv_block.2} parent=43 // loop_exit
                _
            $region44: #{dilated_parallel_conv_block.2} parent=35 // pred_fallthru
              _
          $region36: #{dilated_parallel_conv_block.2} parent=31 // pred_fallthru
            _
          %403 = vnop
        $region32: #{dilated_parallel_conv_block.2} parent=27 // pred_fallthru
          _
        // Predicated region
        $region67: #{dilated_parallel_conv_block.2} parent=27 // pred_check
          %p404 = pneg %p104
        $region68: #{dilated_parallel_conv_block.2} parent=27 // pred_check_branch
          %406 = sbr.rel (%p404) target = $region70
        $region69: #{dilated_parallel_conv_block.2} parent=27 // pred_region
          %s407 = sand.u32 %s94, 1
          %s408 = sand.u32 %s94, 1
          %s409 = smul.addr %s408, 32
          %s410 = scalar_lea.vmem [#allocation4], %s409
          %s411 = smul.addr %s23, 8
          %s412 = sadd.s32 %s24, %s411
          %s413 = smul.addr %s412, 8
          %s414 = scalar_lea.vmem %s1, %s413
          // Predicated region
          $region71: #{dilated_parallel_conv_block.2} parent=69 // pred_check
            _
          $region72: #{dilated_parallel_conv_block.2} parent=69 // pred_check_branch
            %416 = sbr.rel (0) target = $region74
          $region73: #{dilated_parallel_conv_block.2} parent=69 // pred_region
            // Predicated region
            $region75: #{dilated_parallel_conv_block.2} parent=73 // pred_check
              _
            $region76: #{dilated_parallel_conv_block.2} parent=73 // pred_check_branch
              %418 = sbr.rel (0) target = $region78
            $region77: #{dilated_parallel_conv_block.2} parent=73 // pred_region
              // Predicated region
              $region90: #{dilated_parallel_conv_block.2} parent=77 // pred_check
                _
              $region91: #{dilated_parallel_conv_block.2} parent=77 // pred_check_branch
                %440 = sbr.rel (0) target = $region93
              $region92: #{dilated_parallel_conv_block.2} parent=77 // pred_region
                loop: start=0, step=1, limit=1
                $region94: #{dilated_parallel_conv_block.2} parent=92 // loop_pre_header
                  _
                $region95: #{dilated_parallel_conv_block.2} parent=92 // loop_header
                  %s442 = sphi 0, %s446
                  %p443 = scmp.ge.s32.totalorder %s442, 1
                  %s447 = sphi %s414, %s414
                  %s448 = sphi %s410, %s410
                $region96: #{dilated_parallel_conv_block.2} parent=92 // loop_header_branch
                  %445 = sbr.rel (%p443) target = $region100
                $region97: #{dilated_parallel_conv_block.2} parent=92 // loop_body
                  %v449 = vld [vmem:[%s447] sm:$0xff]
                  %450 = vst [vmem:[%s448] sm:$0xff] %v449
                  %v451 = vld [vmem:[%s447 + $0x10] sm:$0xff]
                  %452 = vst [vmem:[%s448 + $0x8] sm:$0xff] %v451
                  %v453 = vld [vmem:[%s447 + $0x20] sm:$0xff]
                  %454 = vst [vmem:[%s448 + $0x10] sm:$0xff] %v453
                  %v455 = vld [vmem:[%s447 + $0x30] sm:$0xff]
                  %456 = vst [vmem:[%s448 + $0x18] sm:$0xff] %v455
                $region98: #{dilated_parallel_conv_block.2} parent=92 // loop_footer
                  %s446 = sadd.s32 1, %s442
                $region99: #{dilated_parallel_conv_block.2} parent=92 // loop_footer_branch
                  %441 = sbr.rel target = $region95
                $region100: #{dilated_parallel_conv_block.2} parent=92 // loop_exit
                  _
              $region93: #{dilated_parallel_conv_block.2} parent=77 // pred_fallthru
                _
              // Predicated region
              $region101: #{dilated_parallel_conv_block.2} parent=77 // pred_check
                _
              $region102: #{dilated_parallel_conv_block.2} parent=77 // pred_check_branch
                %458 = sbr.rel target = $region104
              $region103: #{dilated_parallel_conv_block.2} parent=77 // pred_region
                _
              $region104: #{dilated_parallel_conv_block.2} parent=77 // pred_fallthru
                _
            $region78: #{dilated_parallel_conv_block.2} parent=73 // pred_fallthru
              _
            // Predicated region
            $region79: #{dilated_parallel_conv_block.2} parent=73 // pred_check
              _
            $region80: #{dilated_parallel_conv_block.2} parent=73 // pred_check_branch
              %420 = sbr.rel target = $region82
            $region81: #{dilated_parallel_conv_block.2} parent=73 // pred_region
              %s422 = ssub.s32 256, 1
              loop: start=0, step=1, limit=1
              $region83: #{dilated_parallel_conv_block.2} parent=81 // loop_pre_header
                _
              $region84: #{dilated_parallel_conv_block.2} parent=81 // loop_header
                %s424 = sphi 0, %s428
                %p425 = scmp.ge.s32.totalorder %s424, 1
                %s429 = sphi %s414, %s414
                %s430 = sphi %s410, %s410
              $region85: #{dilated_parallel_conv_block.2} parent=81 // loop_header_branch
                %427 = sbr.rel (%p425) target = $region89
              $region86: #{dilated_parallel_conv_block.2} parent=81 // loop_body
                %v431 = vld [vmem:[%s429] sm:%s422]
                %432 = vst [vmem:[%s430] sm:%s422] %v431
                %v433 = vld [vmem:[%s429 + $0x10] sm:%s422]
                %434 = vst [vmem:[%s430 + $0x8] sm:%s422] %v433
                %v435 = vld [vmem:[%s429 + $0x20] sm:%s422]
                %436 = vst [vmem:[%s430 + $0x10] sm:%s422] %v435
                %v437 = vld [vmem:[%s429 + $0x30] sm:%s422]
                %438 = vst [vmem:[%s430 + $0x18] sm:%s422] %v437
              $region87: #{dilated_parallel_conv_block.2} parent=81 // loop_footer
                %s428 = sadd.s32 1, %s424
              $region88: #{dilated_parallel_conv_block.2} parent=81 // loop_footer_branch
                %423 = sbr.rel target = $region84
              $region89: #{dilated_parallel_conv_block.2} parent=81 // loop_exit
                _
            $region82: #{dilated_parallel_conv_block.2} parent=73 // pred_fallthru
              _
          $region74: #{dilated_parallel_conv_block.2} parent=69 // pred_fallthru
            _
          %459 = vnop
        $region70: #{dilated_parallel_conv_block.2} parent=27 // pred_fallthru
          _
        // Predicated region
        $region105: #{dilated_parallel_conv_block.2} parent=27 // pred_check
          %p460 = pneg %p158
        $region106: #{dilated_parallel_conv_block.2} parent=27 // pred_check_branch
          %462 = sbr.rel (%p460) target = $region108
        $region107: #{dilated_parallel_conv_block.2} parent=27 // pred_region
          %s463 = sand.u32 %s148, 1
          %s464 = sand.u32 %s148, 1
          %s465 = smul.addr %s464, 32
          %s466 = scalar_lea.vmem [#allocation5], %s465
          %s467 = sadd.s32 %s24, 1
          %p468 = scmp.lt.s32.totalorder %s467, 0
          %s469 = ssub.s32 0, %s467
          %s470 = scalar_select %p468, %s469, %s467
          %s471 = sand.u32 %s470, 1
          %s472 = ssub.s32 0, %s471
          %s473 = scalar_select %p468, %s472, %s471
          %p474 = scmp.ne.s32.totalorder %s473, 0
          %p475 = scmp.lt.s32.totalorder %s473, 0
          %p476 = pnand %p475, %p474
          %p477 = pneg %p476
          %s478 = sadd.s32 %s473, 2
          %s479 = scalar_select %p477, %s478, %s473
          %s480 = smul.addr %s23, 8
          %s481 = sadd.s32 %s479, %s480
          %s482 = smul.addr %s481, 8
          %s483 = scalar_lea.vmem %s2, %s482
          // Predicated region
          $region109: #{dilated_parallel_conv_block.2} parent=107 // pred_check
            _
          $region110: #{dilated_parallel_conv_block.2} parent=107 // pred_check_branch
            %485 = sbr.rel (0) target = $region112
          $region111: #{dilated_parallel_conv_block.2} parent=107 // pred_region
            // Predicated region
            $region113: #{dilated_parallel_conv_block.2} parent=111 // pred_check
              _
            $region114: #{dilated_parallel_conv_block.2} parent=111 // pred_check_branch
              %487 = sbr.rel (0) target = $region116
            $region115: #{dilated_parallel_conv_block.2} parent=111 // pred_region
              // Predicated region
              $region128: #{dilated_parallel_conv_block.2} parent=115 // pred_check
                _
              $region129: #{dilated_parallel_conv_block.2} parent=115 // pred_check_branch
                %509 = sbr.rel (0) target = $region131
              $region130: #{dilated_parallel_conv_block.2} parent=115 // pred_region
                loop: start=0, step=1, limit=1
                $region132: #{dilated_parallel_conv_block.2} parent=130 // loop_pre_header
                  _
                $region133: #{dilated_parallel_conv_block.2} parent=130 // loop_header
                  %s511 = sphi 0, %s515
                  %p512 = scmp.ge.s32.totalorder %s511, 1
                  %s516 = sphi %s483, %s483
                  %s517 = sphi %s466, %s466
                $region134: #{dilated_parallel_conv_block.2} parent=130 // loop_header_branch
                  %514 = sbr.rel (%p512) target = $region138
                $region135: #{dilated_parallel_conv_block.2} parent=130 // loop_body
                  %v518 = vld [vmem:[%s516] sm:$0xff]
                  %519 = vst [vmem:[%s517] sm:$0xff] %v518
                  %v520 = vld [vmem:[%s516 + $0x10] sm:$0xff]
                  %521 = vst [vmem:[%s517 + $0x8] sm:$0xff] %v520
                  %v522 = vld [vmem:[%s516 + $0x20] sm:$0xff]
                  %523 = vst [vmem:[%s517 + $0x10] sm:$0xff] %v522
                  %v524 = vld [vmem:[%s516 + $0x30] sm:$0xff]
                  %525 = vst [vmem:[%s517 + $0x18] sm:$0xff] %v524
                $region136: #{dilated_parallel_conv_block.2} parent=130 // loop_footer
                  %s515 = sadd.s32 1, %s511
                $region137: #{dilated_parallel_conv_block.2} parent=130 // loop_footer_branch
                  %510 = sbr.rel target = $region133
                $region138: #{dilated_parallel_conv_block.2} parent=130 // loop_exit
                  _
              $region131: #{dilated_parallel_conv_block.2} parent=115 // pred_fallthru
                _
              // Predicated region
              $region139: #{dilated_parallel_conv_block.2} parent=115 // pred_check
                _
              $region140: #{dilated_parallel_conv_block.2} parent=115 // pred_check_branch
                %527 = sbr.rel target = $region142
              $region141: #{dilated_parallel_conv_block.2} parent=115 // pred_region
                _
              $region142: #{dilated_parallel_conv_block.2} parent=115 // pred_fallthru
                _
            $region116: #{dilated_parallel_conv_block.2} parent=111 // pred_fallthru
              _
            // Predicated region
            $region117: #{dilated_parallel_conv_block.2} parent=111 // pred_check
              _
            $region118: #{dilated_parallel_conv_block.2} parent=111 // pred_check_branch
              %489 = sbr.rel target = $region120
            $region119: #{dilated_parallel_conv_block.2} parent=111 // pred_region
              %s491 = ssub.s32 256, 1
              loop: start=0, step=1, limit=1
              $region121: #{dilated_parallel_conv_block.2} parent=119 // loop_pre_header
                _
              $region122: #{dilated_parallel_conv_block.2} parent=119 // loop_header
                %s493 = sphi 0, %s497
                %p494 = scmp.ge.s32.totalorder %s493, 1
                %s498 = sphi %s483, %s483
                %s499 = sphi %s466, %s466
              $region123: #{dilated_parallel_conv_block.2} parent=119 // loop_header_branch
                %496 = sbr.rel (%p494) target = $region127
              $region124: #{dilated_parallel_conv_block.2} parent=119 // loop_body
                %v500 = vld [vmem:[%s498] sm:%s491]
                %501 = vst [vmem:[%s499] sm:%s491] %v500
                %v502 = vld [vmem:[%s498 + $0x10] sm:%s491]
                %503 = vst [vmem:[%s499 + $0x8] sm:%s491] %v502
                %v504 = vld [vmem:[%s498 + $0x20] sm:%s491]
                %505 = vst [vmem:[%s499 + $0x10] sm:%s491] %v504
                %v506 = vld [vmem:[%s498 + $0x30] sm:%s491]
                %507 = vst [vmem:[%s499 + $0x18] sm:%s491] %v506
              $region125: #{dilated_parallel_conv_block.2} parent=119 // loop_footer
                %s497 = sadd.s32 1, %s493
              $region126: #{dilated_parallel_conv_block.2} parent=119 // loop_footer_branch
                %492 = sbr.rel target = $region122
              $region127: #{dilated_parallel_conv_block.2} parent=119 // loop_exit
                _
            $region120: #{dilated_parallel_conv_block.2} parent=111 // pred_fallthru
              _
          $region112: #{dilated_parallel_conv_block.2} parent=107 // pred_fallthru
            _
          %528 = vnop
        $region108: #{dilated_parallel_conv_block.2} parent=27 // pred_fallthru
          _
      $region28: #{dilated_parallel_conv_block.2} parent=5 // pred_fallthru
        _
      %p529 = scmp.le.s32.totalorder 1, %s16
      %p530 = scmp.lt.s32.totalorder %s16, 5
      %p531 = pnand %p529, %p530
      %p532 = pneg %p531
      // Predicated region
      $region143: #{dilated_parallel_conv_block.2} parent=5 // pred_check
        _
      $region144: #{dilated_parallel_conv_block.2} parent=5 // pred_check_branch
        %534 = sbr.rel (%p531) target = $region146
      $region145: #{dilated_parallel_conv_block.2} parent=5 // pred_region
        %s535 = ssub.s32 %s16, 1
        %s536 = sand.u32 %s69, 1
        %s537 = sand.u32 %s69, 1
        %s538 = smul.addr %s537, 32
        %s539 = scalar_lea.vmem [#allocation3], %s538
        // Predicated region
        $region147: #{dilated_parallel_conv_block.2} parent=145 // pred_check
          %p540 = pneg %p82
        $region148: #{dilated_parallel_conv_block.2} parent=145 // pred_check_branch
          %542 = sbr.rel (%p540) target = $region150
        $region149: #{dilated_parallel_conv_block.2} parent=145 // pred_region
          _
        $region150: #{dilated_parallel_conv_block.2} parent=145 // pred_fallthru
          _
        %s543 = sand.u32 %s97, 1
        %s544 = sand.u32 %s97, 1
        %s545 = smul.addr %s544, 32
        %s546 = scalar_lea.vmem [#allocation4], %s545
        // Predicated region
        $region151: #{dilated_parallel_conv_block.2} parent=145 // pred_check
          %p547 = pneg %p110
        $region152: #{dilated_parallel_conv_block.2} parent=145 // pred_check_branch
          %549 = sbr.rel (%p547) target = $region154
        $region153: #{dilated_parallel_conv_block.2} parent=145 // pred_region
          _
        $region154: #{dilated_parallel_conv_block.2} parent=145 // pred_fallthru
          _
        %s550 = sand.u32 %s151, 1
        %s551 = sand.u32 %s151, 1
        %s552 = smul.addr %s551, 32
        %s553 = scalar_lea.vmem [#allocation5], %s552
        // Predicated region
        $region155: #{dilated_parallel_conv_block.2} parent=145 // pred_check
          %p554 = pneg %p164
        $region156: #{dilated_parallel_conv_block.2} parent=145 // pred_check_branch
          %556 = sbr.rel (%p554) target = $region158
        $region157: #{dilated_parallel_conv_block.2} parent=145 // pred_region
          _
        $region158: #{dilated_parallel_conv_block.2} parent=145 // pred_fallthru
          _
        // Predicated region
        $region159: #{dilated_parallel_conv_block.2} parent=145 // pred_check
          %p557 = pneg %p185
        $region160: #{dilated_parallel_conv_block.2} parent=145 // pred_check_branch
          %559 = sbr.rel (%p557) target = $region162
        $region161: #{dilated_parallel_conv_block.2} parent=145 // pred_region
          %560 = dma.done [#allocation7], 16
        $region162: #{dilated_parallel_conv_block.2} parent=145 // pred_fallthru
          _
        // Predicated region
        $region163: #{dilated_parallel_conv_block.2} parent=145 // pred_check
          %p561 = pneg %p206
        $region164: #{dilated_parallel_conv_block.2} parent=145 // pred_check_branch
          %563 = sbr.rel (%p561) target = $region166
        $region165: #{dilated_parallel_conv_block.2} parent=145 // pred_region
          %564 = dma.done [#allocation9], 16
        $region166: #{dilated_parallel_conv_block.2} parent=145 // pred_fallthru
          _
        // Predicated region
        $region167: #{dilated_parallel_conv_block.2} parent=145 // pred_check
          %p565 = pneg %p227
        $region168: #{dilated_parallel_conv_block.2} parent=145 // pred_check_branch
          %567 = sbr.rel (%p565) target = $region170
        $region169: #{dilated_parallel_conv_block.2} parent=145 // pred_region
          %568 = dma.done [#allocation9], 16
        $region170: #{dilated_parallel_conv_block.2} parent=145 // pred_fallthru
          _
        %569 = sfence
        %s570 = sand.u32 %s69, 1
        %s571 = sand.u32 %s69, 1
        %s572 = smul.addr %s571, 32
        %s573 = scalar_lea.vmem [#allocation3], %s572
        %p574 = pneg %p82
        %p575 = pneg %p79
        %s576 = sand.u32 %s97, 1
        %s577 = sand.u32 %s97, 1
        %s578 = smul.addr %s577, 32
        %s579 = scalar_lea.vmem [#allocation4], %s578
        %p580 = pneg %p110
        %p581 = pneg %p107
        %s582 = sand.u32 %s151, 1
        %s583 = sand.u32 %s151, 1
        %s584 = smul.addr %s583, 32
        %s585 = scalar_lea.vmem [#allocation5], %s584
        %p586 = pneg %p164
        %p587 = pneg %p161
        %p588 = pneg %p185
        %p589 = pneg %p182
        %p590 = pneg %p206
        %p591 = pneg %p203
        %p592 = pneg %p227
        %p593 = pneg %p224
        %p594 = pneg %p255
        %p595 = pneg %p252
        %s596 = sand.u32 %s242, 1
        %s597 = sand.u32 %s242, 1
        %s598 = smul.addr %s597, 64
        %s599 = scalar_lea.vmem [#allocation11], %s598
        %p600 = pneg %p283
        %p601 = pneg %p280
        %p602 = scmp.lt.s32.totalorder %s25, 1
        %s603 = scalar_select %p602, %s25, 1
        %p604 = scmp.lt.s32.totalorder %s26, 1
        %s605 = scalar_select %p604, %s26, 1
        %s606 = smul.addr %s603, 2
        %s607 = sadd.s32 %s605, %s606
        %s608 = smul.addr %s607, 2
        %s609 = scalar_lea.vmem %s7, %s608
        %s610 = sadd.s32 %s26, 1
        %p611 = scmp.lt.s32.totalorder %s610, 0
        %s612 = ssub.s32 0, %s610
        %s613 = scalar_select %p611, %s612, %s610
        %s614 = sand.u32 %s613, 1
        %s615 = ssub.s32 0, %s614
        %s616 = scalar_select %p611, %s615, %s614
        %p617 = scmp.ne.s32.totalorder %s616, 0
        %p618 = scmp.lt.s32.totalorder %s616, 0
        %p619 = pnand %p618, %p617
        %p620 = pneg %p619
        %s621 = sadd.s32 %s616, 2
        %s622 = scalar_select %p620, %s621, %s616
        %s623 = sadd.s32 %s26, 1
        %p624 = scmp.lt.s32.totalorder %s623, 0
        %s625 = ssub.s32 0, %s623
        %s626 = scalar_select %p624, %s625, %s623
        %s627 = sand.u32 %s626, 1
        %s628 = ssub.s32 0, %s627
        %s629 = scalar_select %p624, %s628, %s627
        %p630 = scmp.ne.s32.totalorder %s629, 0
        %p631 = scmp.lt.s32.totalorder %s629, 0
        %p632 = pnand %p631, %p630
        %p633 = pneg %p632
        %s634 = sadd.s32 %s629, 2
        %s635 = scalar_select %p633, %s634, %s629
        %p636 = scmp.lt.s32.totalorder %s25, 1
        %s637 = scalar_select %p636, %s25, 1
        %p638 = scmp.lt.s32.totalorder %s26, 1
        %s639 = scalar_select %p638, %s26, 1
        %s640 = smul.addr %s637, 2
        %s641 = sadd.s32 %s639, %s640
        %s642 = smul.addr %s641, 2
        %s643 = scalar_lea.vmem %s7, %s642
        %s644 = sld [smem:[#allocation6]]
        %v645 = vld [vmem:[%s546] sm:$0xff]
        %v646 = vstv %s644
        %v647 = vmul.f32 %v646, %v645
        %v648 = vadd.f32 %v647, 0.0
        %s649 = sld [smem:[#allocation6 + $0x1]]
        %s650 = scalar_lea.vmem %s546, 8 [#allocation4]
        %v651 = vld [vmem:[%s650] sm:$0xff]
        %v652 = vstv %s649
        %v653 = vmul.f32 %v652, %v651
        %v654 = vadd.f32 %v648, %v653
        %s655 = sld [smem:[#allocation6 + $0x2]]
        %s656 = scalar_lea.vmem %s546, 16 [#allocation4]
        %v657 = vld [vmem:[%s656] sm:$0xff]
        %v658 = vstv %s655
        %v659 = vmul.f32 %v658, %v657
        %v660 = vadd.f32 %v654, %v659
        %s661 = sld [smem:[#allocation6 + $0x3]]
        %s662 = scalar_lea.vmem %s546, 24 [#allocation4]
        %v663 = vld [vmem:[%s662] sm:$0xff]
        %v664 = vstv %s661
        %v665 = vmul.f32 %v664, %v663
        %v666 = vadd.f32 %v660, %v665
        %667 = vst [vmem:[#allocation2 + $0x8] sm:$0xff] %v666
        %s668 = sld [smem:[#allocation6 + $0x4]]
        %v669 = vld [vmem:[%s546] sm:$0xff]
        %v670 = vstv %s668
        %v671 = vmul.f32 %v670, %v669
        %v672 = vadd.f32 %v671, 0.0
        %s673 = sld [smem:[#allocation6 + $0x5]]
        %v674 = vld [vmem:[%s650] sm:$0xff]
        %v675 = vstv %s673
        %v676 = vmul.f32 %v675, %v674
        %v677 = vadd.f32 %v672, %v676
        %s678 = sld [smem:[#allocation6 + $0x6]]
        %v679 = vld [vmem:[%s656] sm:$0xff]
        %v680 = vstv %s678
        %v681 = vmul.f32 %v680, %v679
        %v682 = vadd.f32 %v677, %v681
        %s683 = sld [smem:[#allocation6 + $0x7]]
        %v684 = vld [vmem:[%s662] sm:$0xff]
        %v685 = vstv %s683
        %v686 = vmul.f32 %v685, %v684
        %v687 = vadd.f32 %v682, %v686
        %s688 = scalar_lea.vmem [#allocation2], 24
        %689 = vst [vmem:[%s688 + $0x8] sm:$0xff] %v687
        %p690 = scmp.eq.s32.totalorder %s26, 0
        // Predicated region
        $region171: #{dilated_parallel_conv_block.2} parent=145 // pred_check
          %p691 = pneg %p690
        $region172: #{dilated_parallel_conv_block.2} parent=145 // pred_check_branch
          %693 = sbr.rel (%p691) target = $region174
        $region173: #{dilated_parallel_conv_block.2} parent=145 // pred_region
          %694 = vst [vmem:[#allocation2] sm:$0xff] 0.0
          %695 = vst [vmem:[#allocation2 + $0x18] sm:$0xff] 0.0
        $region174: #{dilated_parallel_conv_block.2} parent=145 // pred_fallthru
          _
        %p696 = scmp.gt.s32.totalorder %s26, 0
        // Predicated region
        $region175: #{dilated_parallel_conv_block.2} parent=145 // pred_check
          %p697 = pneg %p696
        $region176: #{dilated_parallel_conv_block.2} parent=145 // pred_check_branch
          %699 = sbr.rel (%p697) target = $region178
        $region177: #{dilated_parallel_conv_block.2} parent=145 // pred_region
          %s700 = sld [smem:[#allocation6]]
          %v701 = vld [vmem:[%s539] sm:$0xff]
          %v702 = vstv %s700
          %v703 = vmul.f32 %v702, %v701
          %v704 = vadd.f32 %v703, 0.0
          %s705 = sld [smem:[#allocation6 + $0x1]]
          %s706 = scalar_lea.vmem %s539, 8 [#allocation3]
          %v707 = vld [vmem:[%s706] sm:$0xff]
          %v708 = vstv %s705
          %v709 = vmul.f32 %v708, %v707
          %v710 = vadd.f32 %v704, %v709
          %s711 = sld [smem:[#allocation6 + $0x2]]
          %s712 = scalar_lea.vmem %s539, 16 [#allocation3]
          %v713 = vld [vmem:[%s712] sm:$0xff]
          %v714 = vstv %s711
          %v715 = vmul.f32 %v714, %v713
          %v716 = vadd.f32 %v710, %v715
          %s717 = sld [smem:[#allocation6 + $0x3]]
          %s718 = scalar_lea.vmem %s539, 24 [#allocation3]
          %v719 = vld [vmem:[%s718] sm:$0xff]
          %v720 = vstv %s717
          %v721 = vmul.f32 %v720, %v719
          %v722 = vadd.f32 %v716, %v721
          %723 = vst [vmem:[#allocation2] sm:$0xff] %v722
          %s724 = sld [smem:[#allocation6 + $0x4]]
          %v725 = vld [vmem:[%s539] sm:$0xff]
          %v726 = vstv %s724
          %v727 = vmul.f32 %v726, %v725
          %v728 = vadd.f32 %v727, 0.0
          %s729 = sld [smem:[#allocation6 + $0x5]]
          %v730 = vld [vmem:[%s706] sm:$0xff]
          %v731 = vstv %s729
          %v732 = vmul.f32 %v731, %v730
          %v733 = vadd.f32 %v728, %v732
          %s734 = sld [smem:[#allocation6 + $0x6]]
          %v735 = vld [vmem:[%s712] sm:$0xff]
          %v736 = vstv %s734
          %v737 = vmul.f32 %v736, %v735
          %v738 = vadd.f32 %v733, %v737
          %s739 = sld [smem:[#allocation6 + $0x7]]
          %v740 = vld [vmem:[%s718] sm:$0xff]
          %v741 = vstv %s739
          %v742 = vmul.f32 %v741, %v740
          %v743 = vadd.f32 %v738, %v742
          %744 = vst [vmem:[%s688] sm:$0xff] %v743
        $region178: #{dilated_parallel_conv_block.2} parent=145 // pred_fallthru
          _
        %p745 = scmp.eq.s32.totalorder %s26, 1
        // Predicated region
        $region179: #{dilated_parallel_conv_block.2} parent=145 // pred_check
          %p746 = pneg %p745
        $region180: #{dilated_parallel_conv_block.2} parent=145 // pred_check_branch
          %748 = sbr.rel (%p746) target = $region182
        $region181: #{dilated_parallel_conv_block.2} parent=145 // pred_region
          %749 = vst [vmem:[#allocation2 + $0x10] sm:$0xff] 0.0
          %750 = vst [vmem:[#allocation2 + $0x28] sm:$0xff] 0.0
        $region182: #{dilated_parallel_conv_block.2} parent=145 // pred_fallthru
          _
        %p751 = scmp.lt.s32.totalorder %s26, 1
        // Predicated region
        $region183: #{dilated_parallel_conv_block.2} parent=145 // pred_check
          %p752 = pneg %p751
        $region184: #{dilated_parallel_conv_block.2} parent=145 // pred_check_branch
          %754 = sbr.rel (%p752) target = $region186
        $region185: #{dilated_parallel_conv_block.2} parent=145 // pred_region
          %s755 = sld [smem:[#allocation6]]
          %v756 = vld [vmem:[%s553] sm:$0xff]
          %v757 = vstv %s755
          %v758 = vmul.f32 %v757, %v756
          %v759 = vadd.f32 %v758, 0.0
          %s760 = sld [smem:[#allocation6 + $0x1]]
          %s761 = scalar_lea.vmem %s553, 8 [#allocation5]
          %v762 = vld [vmem:[%s761] sm:$0xff]
          %v763 = vstv %s760
          %v764 = vmul.f32 %v763, %v762
          %v765 = vadd.f32 %v759, %v764
          %s766 = sld [smem:[#allocation6 + $0x2]]
          %s767 = scalar_lea.vmem %s553, 16 [#allocation5]
          %v768 = vld [vmem:[%s767] sm:$0xff]
          %v769 = vstv %s766
          %v770 = vmul.f32 %v769, %v768
          %v771 = vadd.f32 %v765, %v770
          %s772 = sld [smem:[#allocation6 + $0x3]]
          %s773 = scalar_lea.vmem %s553, 24 [#allocation5]
          %v774 = vld [vmem:[%s773] sm:$0xff]
          %v775 = vstv %s772
          %v776 = vmul.f32 %v775, %v774
          %v777 = vadd.f32 %v771, %v776
          %778 = vst [vmem:[#allocation2 + $0x10] sm:$0xff] %v777
          %s779 = sld [smem:[#allocation6 + $0x4]]
          %v780 = vld [vmem:[%s553] sm:$0xff]
          %v781 = vstv %s779
          %v782 = vmul.f32 %v781, %v780
          %v783 = vadd.f32 %v782, 0.0
          %s784 = sld [smem:[#allocation6 + $0x5]]
          %v785 = vld [vmem:[%s761] sm:$0xff]
          %v786 = vstv %s784
          %v787 = vmul.f32 %v786, %v785
          %v788 = vadd.f32 %v783, %v787
          %s789 = sld [smem:[#allocation6 + $0x6]]
          %v790 = vld [vmem:[%s767] sm:$0xff]
          %v791 = vstv %s789
          %v792 = vmul.f32 %v791, %v790
          %v793 = vadd.f32 %v788, %v792
          %s794 = sld [smem:[#allocation6 + $0x7]]
          %v795 = vld [vmem:[%s773] sm:$0xff]
          %v796 = vstv %s794
          %v797 = vmul.f32 %v796, %v795
          %v798 = vadd.f32 %v793, %v797
          %799 = vst [vmem:[%s688 + $0x10] sm:$0xff] %v798
        $region186: #{dilated_parallel_conv_block.2} parent=145 // pred_fallthru
          _
        %v800 = vlaneseq
        %v801 = vand.u32 %v800, 127
        %vm802 = vcmp.ge.s32.totalorder %v801, 1
        %vm803 = vcmp.lt.s32.totalorder %v801, 127
        %v804 = vld [vmem:[#allocation2 + $0x7] sm:$0xff]
        %s805 = sld [smem:[#allocation8]]
        %s806 = sld [smem:[#allocation8 + $0x2]]
        %s807 = sld [smem:[#allocation8 + $0x4]]
        %808 = vrot.lane.b32.xlu0 %v804, 1
        %v809 = vpop.permute.xlu0 %808
        %v810 = vsel %vm802, %v809, 0.0
        %811 = vrot.lane.b32.xlu0 %v804, 127
        %v812 = vpop.permute.xlu0 %811
        %v813 = vsel %vm803, %v812, 0.0
        %v814 = vstv %s805
        %v815 = vmul.f32 %v814, %v810
        %v816 = vadd.f32 %v815, 0.0
        %v817 = vstv %s806
        %v818 = vmul.f32 %v817, %v804
        %v819 = vadd.f32 %v816, %v818
        %v820 = vstv %s807
        %v821 = vmul.f32 %v820, %v813
        %v822 = vadd.f32 %v819, %v821
        %v823 = vld [vmem:[#allocation2 + $0x8] sm:$0xff]
        %s824 = sld [smem:[#allocation8 + $0x6]]
        %s825 = sld [smem:[#allocation8 + $0x8]]
        %s826 = sld [smem:[#allocation8 + $0xa]]
        %827 = vrot.lane.b32.xlu0 %v823, 1
        %v828 = vpop.permute.xlu0 %827
        %v829 = vsel %vm802, %v828, 0.0
        %830 = vrot.lane.b32.xlu0 %v823, 127
        %v831 = vpop.permute.xlu0 %830
        %v832 = vsel %vm803, %v831, 0.0
        %v833 = vstv %s824
        %v834 = vmul.f32 %v833, %v829
        %v835 = vadd.f32 %v822, %v834
        %v836 = vstv %s825
        %v837 = vmul.f32 %v836, %v823
        %v838 = vadd.f32 %v835, %v837
        %v839 = vstv %s826
        %v840 = vmul.f32 %v839, %v832
        %v841 = vadd.f32 %v838, %v840
        %v842 = vld [vmem:[#allocation2 + $0x9] sm:$0xff]
        %s843 = sld [smem:[#allocation8 + $0xc]]
        %s844 = sld [smem:[#allocation8 + $0xe]]
        %s845 = sld [smem:[#allocation8 + $0x10]]
        %846 = vrot.lane.b32.xlu0 %v842, 1
        %v847 = vpop.permute.xlu0 %846
        %v848 = vsel %vm802, %v847, 0.0
        %849 = vrot.lane.b32.xlu0 %v842, 127
        %v850 = vpop.permute.xlu0 %849
        %v851 = vsel %vm803, %v850, 0.0
        %v852 = vstv %s843
        %v853 = vmul.f32 %v852, %v848
        %v854 = vadd.f32 %v841, %v853
        %v855 = vstv %s844
        %v856 = vmul.f32 %v855, %v842
        %v857 = vadd.f32 %v854, %v856
        %v858 = vstv %s845
        %v859 = vmul.f32 %v858, %v851
        %v860 = vadd.f32 %v857, %v859
        %s861 = sld [smem:[#allocation10]]
        %v862 = vstv %s861
        %v863 = vmul.f32 %v862, %v860
        %864 = vst [vmem:[%s599] sm:$0xff] %v863
        %s865 = sld [smem:[#allocation10 + $0x2]]
        %v866 = vstv %s865
        %v867 = vmul.f32 %v866, %v860
        %s868 = scalar_lea.vmem %s599, 8 [#allocation11]
        %869 = vst [vmem:[%s868] sm:$0xff] %v867
        %v870 = vld [vmem:[%s688 + $0x7] sm:$0xff]
        %s871 = sld [smem:[#allocation8 + $0x1]]
        %s872 = sld [smem:[#allocation8 + $0x3]]
        %s873 = sld [smem:[#allocation8 + $0x5]]
        %874 = vrot.lane.b32.xlu0 %v870, 1
        %v875 = vpop.permute.xlu0 %874
        %v876 = vsel %vm802, %v875, 0.0
        %877 = vrot.lane.b32.xlu0 %v870, 127
        %v878 = vpop.permute.xlu0 %877
        %v879 = vsel %vm803, %v878, 0.0
        %v880 = vstv %s871
        %v881 = vmul.f32 %v880, %v876
        %v882 = vadd.f32 %v881, 0.0
        %v883 = vstv %s872
        %v884 = vmul.f32 %v883, %v870
        %v885 = vadd.f32 %v882, %v884
        %v886 = vstv %s873
        %v887 = vmul.f32 %v886, %v879
        %v888 = vadd.f32 %v885, %v887
        %v889 = vld [vmem:[%s688 + $0x8] sm:$0xff]
        %s890 = sld [smem:[#allocation8 + $0x7]]
        %s891 = sld [smem:[#allocation8 + $0x9]]
        %s892 = sld [smem:[#allocation8 + $0xb]]
        %893 = vrot.lane.b32.xlu0 %v889, 1
        %v894 = vpop.permute.xlu0 %893
        %v895 = vsel %vm802, %v894, 0.0
        %896 = vrot.lane.b32.xlu0 %v889, 127
        %v897 = vpop.permute.xlu0 %896
        %v898 = vsel %vm803, %v897, 0.0
        %v899 = vstv %s890
        %v900 = vmul.f32 %v899, %v895
        %v901 = vadd.f32 %v888, %v900
        %v902 = vstv %s891
        %v903 = vmul.f32 %v902, %v889
        %v904 = vadd.f32 %v901, %v903
        %v905 = vstv %s892
        %v906 = vmul.f32 %v905, %v898
        %v907 = vadd.f32 %v904, %v906
        %v908 = vld [vmem:[%s688 + $0x9] sm:$0xff]
        %s909 = sld [smem:[#allocation8 + $0xd]]
        %s910 = sld [smem:[#allocation8 + $0xf]]
        %s911 = sld [smem:[#allocation8 + $0x11]]
        %912 = vrot.lane.b32.xlu0 %v908, 1
        %v913 = vpop.permute.xlu0 %912
        %v914 = vsel %vm802, %v913, 0.0
        %915 = vrot.lane.b32.xlu0 %v908, 127
        %v916 = vpop.permute.xlu0 %915
        %v917 = vsel %vm803, %v916, 0.0
        %v918 = vstv %s909
        %v919 = vmul.f32 %v918, %v914
        %v920 = vadd.f32 %v907, %v919
        %v921 = vstv %s910
        %v922 = vmul.f32 %v921, %v908
        %v923 = vadd.f32 %v920, %v922
        %v924 = vstv %s911
        %v925 = vmul.f32 %v924, %v917
        %v926 = vadd.f32 %v923, %v925
        %s927 = sld [smem:[#allocation10 + $0x1]]
        %v928 = vstv %s927
        %v929 = vmul.f32 %v928, %v926
        %v930 = vld [vmem:[%s599] sm:$0xff]
        %v931 = vadd.f32 %v930, %v929
        %932 = vst [vmem:[%s599] sm:$0xff] %v931
        %s933 = sld [smem:[#allocation10 + $0x3]]
        %v934 = vstv %s933
        %v935 = vmul.f32 %v934, %v926
        %v936 = vld [vmem:[%s868] sm:$0xff]
        %v937 = vadd.f32 %v936, %v935
        %938 = vst [vmem:[%s868] sm:$0xff] %v937
        %vm939 = vcmp.ge.s32.totalorder %v801, 2
        %vm940 = vcmp.lt.s32.totalorder %v801, 126
        %v941 = vld [vmem:[#allocation2 + $0x6] sm:$0xff]
        %s942 = sld [smem:[#allocation8 + $0x12]]
        %s943 = sld [smem:[#allocation8 + $0x14]]
        %s944 = sld [smem:[#allocation8 + $0x16]]
        %945 = vrot.lane.b32.xlu0 %v941, 2
        %v946 = vpop.permute.xlu0 %945
        %v947 = vsel %vm939, %v946, 0.0
        %948 = vrot.lane.b32.xlu0 %v941, 126
        %v949 = vpop.permute.xlu0 %948
        %v950 = vsel %vm940, %v949, 0.0
        %v951 = vstv %s942
        %v952 = vmul.f32 %v951, %v947
        %v953 = vadd.f32 %v952, 0.0
        %v954 = vstv %s943
        %v955 = vmul.f32 %v954, %v941
        %v956 = vadd.f32 %v953, %v955
        %v957 = vstv %s944
        %v958 = vmul.f32 %v957, %v950
        %v959 = vadd.f32 %v956, %v958
        %v960 = vld [vmem:[#allocation2 + $0x8] sm:$0xff]
        %s961 = sld [smem:[#allocation8 + $0x18]]
        %s962 = sld [smem:[#allocation8 + $0x1a]]
        %s963 = sld [smem:[#allocation8 + $0x1c]]
        %964 = vrot.lane.b32.xlu0 %v960, 2
        %v965 = vpop.permute.xlu0 %964
        %v966 = vsel %vm939, %v965, 0.0
        %967 = vrot.lane.b32.xlu0 %v960, 126
        %v968 = vpop.permute.xlu0 %967
        %v969 = vsel %vm940, %v968, 0.0
        %v970 = vstv %s961
        %v971 = vmul.f32 %v970, %v966
        %v972 = vadd.f32 %v959, %v971
        %v973 = vstv %s962
        %v974 = vmul.f32 %v973, %v960
        %v975 = vadd.f32 %v972, %v974
        %v976 = vstv %s963
        %v977 = vmul.f32 %v976, %v969
        %v978 = vadd.f32 %v975, %v977
        %v979 = vld [vmem:[#allocation2 + $0xa] sm:$0xff]
        %s980 = sld [smem:[#allocation8 + $0x1e]]
        %s981 = sld [smem:[#allocation8 + $0x20]]
        %s982 = sld [smem:[#allocation8 + $0x22]]
        %983 = vrot.lane.b32.xlu0 %v979, 2
        %v984 = vpop.permute.xlu0 %983
        %v985 = vsel %vm939, %v984, 0.0
        %986 = vrot.lane.b32.xlu0 %v979, 126
        %v987 = vpop.permute.xlu0 %986
        %v988 = vsel %vm940, %v987, 0.0
        %v989 = vstv %s980
        %v990 = vmul.f32 %v989, %v985
        %v991 = vadd.f32 %v978, %v990
        %v992 = vstv %s981
        %v993 = vmul.f32 %v992, %v979
        %v994 = vadd.f32 %v991, %v993
        %v995 = vstv %s982
        %v996 = vmul.f32 %v995, %v988
        %v997 = vadd.f32 %v994, %v996
        %s998 = sld [smem:[#allocation10 + $0x4]]
        %v999 = vstv %s998
        %v1000 = vmul.f32 %v999, %v997
        %s1001 = scalar_lea.vmem %s599, 16 [#allocation11]
        %1002 = vst [vmem:[%s1001] sm:$0xff] %v1000
        %s1003 = sld [smem:[#allocation10 + $0x6]]
        %v1004 = vstv %s1003
        %v1005 = vmul.f32 %v1004, %v997
        %s1006 = scalar_lea.vmem %s599, 24 [#allocation11]
        %1007 = vst [vmem:[%s1006] sm:$0xff] %v1005
        %v1008 = vld [vmem:[%s688 + $0x6] sm:$0xff]
        %s1009 = sld [smem:[#allocation8 + $0x13]]
        %s1010 = sld [smem:[#allocation8 + $0x15]]
        %s1011 = sld [smem:[#allocation8 + $0x17]]
        %1012 = vrot.lane.b32.xlu0 %v1008, 2
        %v1013 = vpop.permute.xlu0 %1012
        %v1014 = vsel %vm939, %v1013, 0.0
        %1015 = vrot.lane.b32.xlu0 %v1008, 126
        %v1016 = vpop.permute.xlu0 %1015
        %v1017 = vsel %vm940, %v1016, 0.0
        %v1018 = vstv %s1009
        %v1019 = vmul.f32 %v1018, %v1014
        %v1020 = vadd.f32 %v1019, 0.0
        %v1021 = vstv %s1010
        %v1022 = vmul.f32 %v1021, %v1008
        %v1023 = vadd.f32 %v1020, %v1022
        %v1024 = vstv %s1011
        %v1025 = vmul.f32 %v1024, %v1017
        %v1026 = vadd.f32 %v1023, %v1025
        %v1027 = vld [vmem:[%s688 + $0x8] sm:$0xff]
        %s1028 = sld [smem:[#allocation8 + $0x19]]
        %s1029 = sld [smem:[#allocation8 + $0x1b]]
        %s1030 = sld [smem:[#allocation8 + $0x1d]]
        %1031 = vrot.lane.b32.xlu0 %v1027, 2
        %v1032 = vpop.permute.xlu0 %1031
        %v1033 = vsel %vm939, %v1032, 0.0
        %1034 = vrot.lane.b32.xlu0 %v1027, 126
        %v1035 = vpop.permute.xlu0 %1034
        %v1036 = vsel %vm940, %v1035, 0.0
        %v1037 = vstv %s1028
        %v1038 = vmul.f32 %v1037, %v1033
        %v1039 = vadd.f32 %v1026, %v1038
        %v1040 = vstv %s1029
        %v1041 = vmul.f32 %v1040, %v1027
        %v1042 = vadd.f32 %v1039, %v1041
        %v1043 = vstv %s1030
        %v1044 = vmul.f32 %v1043, %v1036
        %v1045 = vadd.f32 %v1042, %v1044
        %v1046 = vld [vmem:[%s688 + $0xa] sm:$0xff]
        %s1047 = sld [smem:[#allocation8 + $0x1f]]
        %s1048 = sld [smem:[#allocation8 + $0x21]]
        %s1049 = sld [smem:[#allocation8 + $0x23]]
        %1050 = vrot.lane.b32.xlu0 %v1046, 2
        %v1051 = vpop.permute.xlu0 %1050
        %v1052 = vsel %vm939, %v1051, 0.0
        %1053 = vrot.lane.b32.xlu0 %v1046, 126
        %v1054 = vpop.permute.xlu0 %1053
        %v1055 = vsel %vm940, %v1054, 0.0
        %v1056 = vstv %s1047
        %v1057 = vmul.f32 %v1056, %v1052
        %v1058 = vadd.f32 %v1045, %v1057
        %v1059 = vstv %s1048
        %v1060 = vmul.f32 %v1059, %v1046
        %v1061 = vadd.f32 %v1058, %v1060
        %v1062 = vstv %s1049
        %v1063 = vmul.f32 %v1062, %v1055
        %v1064 = vadd.f32 %v1061, %v1063
        %s1065 = sld [smem:[#allocation10 + $0x5]]
        %v1066 = vstv %s1065
        %v1067 = vmul.f32 %v1066, %v1064
        %v1068 = vld [vmem:[%s1001] sm:$0xff]
        %v1069 = vadd.f32 %v1068, %v1067
        %1070 = vst [vmem:[%s1001] sm:$0xff] %v1069
        %s1071 = sld [smem:[#allocation10 + $0x7]]
        %v1072 = vstv %s1071
        %v1073 = vmul.f32 %v1072, %v1064
        %v1074 = vld [vmem:[%s1006] sm:$0xff]
        %v1075 = vadd.f32 %v1074, %v1073
        %1076 = vst [vmem:[%s1006] sm:$0xff] %v1075
        %vm1077 = vcmp.ge.s32.totalorder %v801, 4
        %vm1078 = vcmp.lt.s32.totalorder %v801, 124
        %v1079 = vld [vmem:[#allocation2 + $0x4] sm:$0xff]
        %s1080 = sld [smem:[#allocation8 + $0x24]]
        %s1081 = sld [smem:[#allocation8 + $0x26]]
        %s1082 = sld [smem:[#allocation8 + $0x28]]
        %1083 = vrot.lane.b32.xlu0 %v1079, 4
        %v1084 = vpop.permute.xlu0 %1083
        %v1085 = vsel %vm1077, %v1084, 0.0
        %1086 = vrot.lane.b32.xlu0 %v1079, 124
        %v1087 = vpop.permute.xlu0 %1086
        %v1088 = vsel %vm1078, %v1087, 0.0
        %v1089 = vstv %s1080
        %v1090 = vmul.f32 %v1089, %v1085
        %v1091 = vadd.f32 %v1090, 0.0
        %v1092 = vstv %s1081
        %v1093 = vmul.f32 %v1092, %v1079
        %v1094 = vadd.f32 %v1091, %v1093
        %v1095 = vstv %s1082
        %v1096 = vmul.f32 %v1095, %v1088
        %v1097 = vadd.f32 %v1094, %v1096
        %v1098 = vld [vmem:[#allocation2 + $0x8] sm:$0xff]
        %s1099 = sld [smem:[#allocation8 + $0x2a]]
        %s1100 = sld [smem:[#allocation8 + $0x2c]]
        %s1101 = sld [smem:[#allocation8 + $0x2e]]
        %1102 = vrot.lane.b32.xlu0 %v1098, 4
        %v1103 = vpop.permute.xlu0 %1102
        %v1104 = vsel %vm1077, %v1103, 0.0
        %1105 = vrot.lane.b32.xlu0 %v1098, 124
        %v1106 = vpop.permute.xlu0 %1105
        %v1107 = vsel %vm1078, %v1106, 0.0
        %v1108 = vstv %s1099
        %v1109 = vmul.f32 %v1108, %v1104
        %v1110 = vadd.f32 %v1097, %v1109
        %v1111 = vstv %s1100
        %v1112 = vmul.f32 %v1111, %v1098
        %v1113 = vadd.f32 %v1110, %v1112
        %v1114 = vstv %s1101
        %v1115 = vmul.f32 %v1114, %v1107
        %v1116 = vadd.f32 %v1113, %v1115
        %v1117 = vld [vmem:[#allocation2 + $0xc] sm:$0xff]
        %s1118 = sld [smem:[#allocation8 + $0x30]]
        %s1119 = sld [smem:[#allocation8 + $0x32]]
        %s1120 = sld [smem:[#allocation8 + $0x34]]
        %1121 = vrot.lane.b32.xlu0 %v1117, 4
        %v1122 = vpop.permute.xlu0 %1121
        %v1123 = vsel %vm1077, %v1122, 0.0
        %1124 = vrot.lane.b32.xlu0 %v1117, 124
        %v1125 = vpop.permute.xlu0 %1124
        %v1126 = vsel %vm1078, %v1125, 0.0
        %v1127 = vstv %s1118
        %v1128 = vmul.f32 %v1127, %v1123
        %v1129 = vadd.f32 %v1116, %v1128
        %v1130 = vstv %s1119
        %v1131 = vmul.f32 %v1130, %v1117
        %v1132 = vadd.f32 %v1129, %v1131
        %v1133 = vstv %s1120
        %v1134 = vmul.f32 %v1133, %v1126
        %v1135 = vadd.f32 %v1132, %v1134
        %s1136 = sld [smem:[#allocation10 + $0x8]]
        %v1137 = vstv %s1136
        %v1138 = vmul.f32 %v1137, %v1135
        %s1139 = scalar_lea.vmem %s599, 32 [#allocation11]
        %1140 = vst [vmem:[%s1139] sm:$0xff] %v1138
        %s1141 = sld [smem:[#allocation10 + $0xa]]
        %v1142 = vstv %s1141
        %v1143 = vmul.f32 %v1142, %v1135
        %s1144 = scalar_lea.vmem %s599, 40 [#allocation11]
        %1145 = vst [vmem:[%s1144] sm:$0xff] %v1143
        %v1146 = vld [vmem:[%s688 + $0x4] sm:$0xff]
        %s1147 = sld [smem:[#allocation8 + $0x25]]
        %s1148 = sld [smem:[#allocation8 + $0x27]]
        %s1149 = sld [smem:[#allocation8 + $0x29]]
        %1150 = vrot.lane.b32.xlu0 %v1146, 4
        %v1151 = vpop.permute.xlu0 %1150
        %v1152 = vsel %vm1077, %v1151, 0.0
        %1153 = vrot.lane.b32.xlu0 %v1146, 124
        %v1154 = vpop.permute.xlu0 %1153
        %v1155 = vsel %vm1078, %v1154, 0.0
        %v1156 = vstv %s1147
        %v1157 = vmul.f32 %v1156, %v1152
        %v1158 = vadd.f32 %v1157, 0.0
        %v1159 = vstv %s1148
        %v1160 = vmul.f32 %v1159, %v1146
        %v1161 = vadd.f32 %v1158, %v1160
        %v1162 = vstv %s1149
        %v1163 = vmul.f32 %v1162, %v1155
        %v1164 = vadd.f32 %v1161, %v1163
        %v1165 = vld [vmem:[%s688 + $0x8] sm:$0xff]
        %s1166 = sld [smem:[#allocation8 + $0x2b]]
        %s1167 = sld [smem:[#allocation8 + $0x2d]]
        %s1168 = sld [smem:[#allocation8 + $0x2f]]
        %1169 = vrot.lane.b32.xlu0 %v1165, 4
        %v1170 = vpop.permute.xlu0 %1169
        %v1171 = vsel %vm1077, %v1170, 0.0
        %1172 = vrot.lane.b32.xlu0 %v1165, 124
        %v1173 = vpop.permute.xlu0 %1172
        %v1174 = vsel %vm1078, %v1173, 0.0
        %v1175 = vstv %s1166
        %v1176 = vmul.f32 %v1175, %v1171
        %v1177 = vadd.f32 %v1164, %v1176
        %v1178 = vstv %s1167
        %v1179 = vmul.f32 %v1178, %v1165
        %v1180 = vadd.f32 %v1177, %v1179
        %v1181 = vstv %s1168
        %v1182 = vmul.f32 %v1181, %v1174
        %v1183 = vadd.f32 %v1180, %v1182
        %v1184 = vld [vmem:[%s688 + $0xc] sm:$0xff]
        %s1185 = sld [smem:[#allocation8 + $0x31]]
        %s1186 = sld [smem:[#allocation8 + $0x33]]
        %s1187 = sld [smem:[#allocation8 + $0x35]]
        %1188 = vrot.lane.b32.xlu0 %v1184, 4
        %v1189 = vpop.permute.xlu0 %1188
        %v1190 = vsel %vm1077, %v1189, 0.0
        %1191 = vrot.lane.b32.xlu0 %v1184, 124
        %v1192 = vpop.permute.xlu0 %1191
        %v1193 = vsel %vm1078, %v1192, 0.0
        %v1194 = vstv %s1185
        %v1195 = vmul.f32 %v1194, %v1190
        %v1196 = vadd.f32 %v1183, %v1195
        %v1197 = vstv %s1186
        %v1198 = vmul.f32 %v1197, %v1184
        %v1199 = vadd.f32 %v1196, %v1198
        %v1200 = vstv %s1187
        %v1201 = vmul.f32 %v1200, %v1193
        %v1202 = vadd.f32 %v1199, %v1201
        %s1203 = sld [smem:[#allocation10 + $0x9]]
        %v1204 = vstv %s1203
        %v1205 = vmul.f32 %v1204, %v1202
        %v1206 = vld [vmem:[%s1139] sm:$0xff]
        %v1207 = vadd.f32 %v1206, %v1205
        %1208 = vst [vmem:[%s1139] sm:$0xff] %v1207
        %s1209 = sld [smem:[#allocation10 + $0xb]]
        %v1210 = vstv %s1209
        %v1211 = vmul.f32 %v1210, %v1202
        %v1212 = vld [vmem:[%s1144] sm:$0xff]
        %v1213 = vadd.f32 %v1212, %v1211
        %1214 = vst [vmem:[%s1144] sm:$0xff] %v1213
        %vm1215 = vcmp.ge.s32.totalorder %v801, 8
        %vm1216 = vcmp.lt.s32.totalorder %v801, 120
        %v1217 = vld [vmem:[#allocation2] sm:$0xff]
        %s1218 = sld [smem:[#allocation8 + $0x36]]
        %s1219 = sld [smem:[#allocation8 + $0x38]]
        %s1220 = sld [smem:[#allocation8 + $0x3a]]
        %1221 = vrot.lane.b32.xlu0 %v1217, 8
        %v1222 = vpop.permute.xlu0 %1221
        %v1223 = vsel %vm1215, %v1222, 0.0
        %1224 = vrot.lane.b32.xlu0 %v1217, 120
        %v1225 = vpop.permute.xlu0 %1224
        %v1226 = vsel %vm1216, %v1225, 0.0
        %v1227 = vstv %s1218
        %v1228 = vmul.f32 %v1227, %v1223
        %v1229 = vadd.f32 %v1228, 0.0
        %v1230 = vstv %s1219
        %v1231 = vmul.f32 %v1230, %v1217
        %v1232 = vadd.f32 %v1229, %v1231
        %v1233 = vstv %s1220
        %v1234 = vmul.f32 %v1233, %v1226
        %v1235 = vadd.f32 %v1232, %v1234
        %v1236 = vld [vmem:[#allocation2 + $0x8] sm:$0xff]
        %s1237 = sld [smem:[#allocation8 + $0x3c]]
        %s1238 = sld [smem:[#allocation8 + $0x3e]]
        %s1239 = sld [smem:[#allocation8 + $0x40]]
        %1240 = vrot.lane.b32.xlu0 %v1236, 8
        %v1241 = vpop.permute.xlu0 %1240
        %v1242 = vsel %vm1215, %v1241, 0.0
        %1243 = vrot.lane.b32.xlu0 %v1236, 120
        %v1244 = vpop.permute.xlu0 %1243
        %v1245 = vsel %vm1216, %v1244, 0.0
        %v1246 = vstv %s1237
        %v1247 = vmul.f32 %v1246, %v1242
        %v1248 = vadd.f32 %v1235, %v1247
        %v1249 = vstv %s1238
        %v1250 = vmul.f32 %v1249, %v1236
        %v1251 = vadd.f32 %v1248, %v1250
        %v1252 = vstv %s1239
        %v1253 = vmul.f32 %v1252, %v1245
        %v1254 = vadd.f32 %v1251, %v1253
        %v1255 = vld [vmem:[#allocation2 + $0x10] sm:$0xff]
        %s1256 = sld [smem:[#allocation8 + $0x42]]
        %s1257 = sld [smem:[#allocation8 + $0x44]]
        %s1258 = sld [smem:[#allocation8 + $0x46]]
        %1259 = vrot.lane.b32.xlu0 %v1255, 8
        %v1260 = vpop.permute.xlu0 %1259
        %v1261 = vsel %vm1215, %v1260, 0.0
        %1262 = vrot.lane.b32.xlu0 %v1255, 120
        %v1263 = vpop.permute.xlu0 %1262
        %v1264 = vsel %vm1216, %v1263, 0.0
        %v1265 = vstv %s1256
        %v1266 = vmul.f32 %v1265, %v1261
        %v1267 = vadd.f32 %v1254, %v1266
        %v1268 = vstv %s1257
        %v1269 = vmul.f32 %v1268, %v1255
        %v1270 = vadd.f32 %v1267, %v1269
        %v1271 = vstv %s1258
        %v1272 = vmul.f32 %v1271, %v1264
        %v1273 = vadd.f32 %v1270, %v1272
        %s1274 = sld [smem:[#allocation10 + $0xc]]
        %v1275 = vstv %s1274
        %v1276 = vmul.f32 %v1275, %v1273
        %s1277 = scalar_lea.vmem %s599, 48 [#allocation11]
        %1278 = vst [vmem:[%s1277] sm:$0xff] %v1276
        %s1279 = sld [smem:[#allocation10 + $0xe]]
        %v1280 = vstv %s1279
        %v1281 = vmul.f32 %v1280, %v1273
        %s1282 = scalar_lea.vmem %s599, 56 [#allocation11]
        %1283 = vst [vmem:[%s1282] sm:$0xff] %v1281
        %v1284 = vld [vmem:[%s688] sm:$0xff]
        %s1285 = sld [smem:[#allocation8 + $0x37]]
        %s1286 = sld [smem:[#allocation8 + $0x39]]
        %s1287 = sld [smem:[#allocation8 + $0x3b]]
        %1288 = vrot.lane.b32.xlu0 %v1284, 8
        %v1289 = vpop.permute.xlu0 %1288
        %v1290 = vsel %vm1215, %v1289, 0.0
        %1291 = vrot.lane.b32.xlu0 %v1284, 120
        %v1292 = vpop.permute.xlu0 %1291
        %v1293 = vsel %vm1216, %v1292, 0.0
        %v1294 = vstv %s1285
        %v1295 = vmul.f32 %v1294, %v1290
        %v1296 = vadd.f32 %v1295, 0.0
        %v1297 = vstv %s1286
        %v1298 = vmul.f32 %v1297, %v1284
        %v1299 = vadd.f32 %v1296, %v1298
        %v1300 = vstv %s1287
        %v1301 = vmul.f32 %v1300, %v1293
        %v1302 = vadd.f32 %v1299, %v1301
        %v1303 = vld [vmem:[%s688 + $0x8] sm:$0xff]
        %s1304 = sld [smem:[#allocation8 + $0x3d]]
        %s1305 = sld [smem:[#allocation8 + $0x3f]]
        %s1306 = sld [smem:[#allocation8 + $0x41]]
        %1307 = vrot.lane.b32.xlu0 %v1303, 8
        %v1308 = vpop.permute.xlu0 %1307
        %v1309 = vsel %vm1215, %v1308, 0.0
        %1310 = vrot.lane.b32.xlu0 %v1303, 120
        %v1311 = vpop.permute.xlu0 %1310
        %v1312 = vsel %vm1216, %v1311, 0.0
        %v1313 = vstv %s1304
        %v1314 = vmul.f32 %v1313, %v1309
        %v1315 = vadd.f32 %v1302, %v1314
        %v1316 = vstv %s1305
        %v1317 = vmul.f32 %v1316, %v1303
        %v1318 = vadd.f32 %v1315, %v1317
        %v1319 = vstv %s1306
        %v1320 = vmul.f32 %v1319, %v1312
        %v1321 = vadd.f32 %v1318, %v1320
        %v1322 = vld [vmem:[%s688 + $0x10] sm:$0xff]
        %s1323 = sld [smem:[#allocation8 + $0x43]]
        %s1324 = sld [smem:[#allocation8 + $0x45]]
        %s1325 = sld [smem:[#allocation8 + $0x47]]
        %1326 = vrot.lane.b32.xlu0 %v1322, 8
        %v1327 = vpop.permute.xlu0 %1326
        %v1328 = vsel %vm1215, %v1327, 0.0
        %1329 = vrot.lane.b32.xlu0 %v1322, 120
        %v1330 = vpop.permute.xlu0 %1329
        %v1331 = vsel %vm1216, %v1330, 0.0
        %v1332 = vstv %s1323
        %v1333 = vmul.f32 %v1332, %v1328
        %v1334 = vadd.f32 %v1321, %v1333
        %v1335 = vstv %s1324
        %v1336 = vmul.f32 %v1335, %v1322
        %v1337 = vadd.f32 %v1334, %v1336
        %v1338 = vstv %s1325
        %v1339 = vmul.f32 %v1338, %v1331
        %v1340 = vadd.f32 %v1337, %v1339
        %s1341 = sld [smem:[#allocation10 + $0xd]]
        %v1342 = vstv %s1341
        %v1343 = vmul.f32 %v1342, %v1340
        %v1344 = vld [vmem:[%s1277] sm:$0xff]
        %v1345 = vadd.f32 %v1344, %v1343
        %1346 = vst [vmem:[%s1277] sm:$0xff] %v1345
        %s1347 = sld [smem:[#allocation10 + $0xf]]
        %v1348 = vstv %s1347
        %v1349 = vmul.f32 %v1348, %v1340
        %v1350 = vld [vmem:[%s1282] sm:$0xff]
        %v1351 = vadd.f32 %v1350, %v1349
        %1352 = vst [vmem:[%s1282] sm:$0xff] %v1351
        %v1353 = vld [vmem:[%s599] sm:$0xff]
        %v1354 = vld [vmem:[%s599 + $0x8] sm:$0xff]
        %v1355 = vld [vmem:[%s599 + $0x10] sm:$0xff]
        %v1356 = vld [vmem:[%s599 + $0x18] sm:$0xff]
        %v1357 = vld [vmem:[%s599 + $0x20] sm:$0xff]
        %v1358 = vld [vmem:[%s599 + $0x28] sm:$0xff]
        %v1359 = vld [vmem:[%s599 + $0x30] sm:$0xff]
        %v1360 = vld [vmem:[%s599 + $0x38] sm:$0xff]
        %1361 = vadd.xlane.f32.xlu0 %v1353
        %v1362 = vpop.xlane.xlu0 %1361
        %1363 = vadd.xlane.f32.xlu0 %v1354
        %v1364 = vpop.xlane.xlu0 %1363
        %1365 = vadd.xlane.f32.xlu0 %v1355
        %v1366 = vpop.xlane.xlu0 %1365
        %1367 = vadd.xlane.f32.xlu0 %v1356
        %v1368 = vpop.xlane.xlu0 %1367
        %1369 = vadd.xlane.f32.xlu0 %v1357
        %v1370 = vpop.xlane.xlu0 %1369
        %1371 = vadd.xlane.f32.xlu0 %v1358
        %v1372 = vpop.xlane.xlu0 %1371
        %1373 = vadd.xlane.f32.xlu0 %v1359
        %v1374 = vpop.xlane.xlu0 %1373
        %1375 = vadd.xlane.f32.xlu0 %v1360
        %v1376 = vpop.xlane.xlu0 %1375
        %v1385 = vlaneseq
        %v1386 = vshrl.u32 %v1385, 7
        %v1387 = vsub.s32 %v801, %v1386
        %v1388 = vrot.slane %v1362, %v1387
        %v1389 = vlaneseq
        %v1390 = vshrl.u32 %v1389, 7
        %v1391 = vsub.s32 %v801, %v1390
        %v1392 = vrot.slane %v1364, %v1391
        %v1393 = vlaneseq
        %v1394 = vshrl.u32 %v1393, 7
        %v1395 = vsub.s32 %v801, %v1394
        %v1396 = vrot.slane %v1366, %v1395
        %v1397 = vlaneseq
        %v1398 = vshrl.u32 %v1397, 7
        %v1399 = vsub.s32 %v801, %v1398
        %v1400 = vrot.slane %v1368, %v1399
        %v1401 = vlaneseq
        %v1402 = vshrl.u32 %v1401, 7
        %v1403 = vsub.s32 %v801, %v1402
        %v1404 = vrot.slane %v1370, %v1403
        %v1405 = vlaneseq
        %v1406 = vshrl.u32 %v1405, 7
        %v1407 = vsub.s32 %v801, %v1406
        %v1408 = vrot.slane %v1372, %v1407
        %v1409 = vlaneseq
        %v1410 = vshrl.u32 %v1409, 7
        %v1411 = vsub.s32 %v801, %v1410
        %v1412 = vrot.slane %v1374, %v1411
        %v1413 = vlaneseq
        %v1414 = vshrl.u32 %v1413, 7
        %v1415 = vsub.s32 %v801, %v1414
        %v1416 = vrot.slane %v1376, %v1415
        %vm1417 = vcmask 1041409
        %v1418 = vsel %vm1417, %v1392, %v1388
        %vm1419 = vcmask 1042434
        %v1420 = vsel %vm1419, %v1396, %v1418
        %vm1421 = vcmask 1043459
        %v1422 = vsel %vm1421, %v1400, %v1420
        %vm1423 = vcmask 1044484
        %v1424 = vsel %vm1423, %v1404, %v1422
        %vm1425 = vcmask 1045509
        %v1426 = vsel %vm1425, %v1408, %v1424
        %vm1427 = vcmask 1046534
        %v1428 = vsel %vm1427, %v1412, %v1426
        %vm1429 = vcmask 1047559
        %v1430 = vsel %vm1429, %v1416, %v1428
        %vm1432 = vcmask 64512
        %v1433 = vsel %vm1432, %v1430, 0.0
        %1434 = vadd.xlane.f32.xlu0 %v1433
        %v1435 = vpop.xlane.xlu0 %1434
        %v1436 = vmul.f32 %v1353, %v1353
        %v1437 = vmul.f32 %v1354, %v1354
        %v1438 = vmul.f32 %v1355, %v1355
        %v1439 = vmul.f32 %v1356, %v1356
        %v1440 = vmul.f32 %v1357, %v1357
        %v1441 = vmul.f32 %v1358, %v1358
        %v1442 = vmul.f32 %v1359, %v1359
        %v1443 = vmul.f32 %v1360, %v1360
        %1444 = vadd.xlane.f32.xlu0 %v1436
        %v1445 = vpop.xlane.xlu0 %1444
        %1446 = vadd.xlane.f32.xlu0 %v1437
        %v1447 = vpop.xlane.xlu0 %1446
        %1448 = vadd.xlane.f32.xlu0 %v1438
        %v1449 = vpop.xlane.xlu0 %1448
        %1450 = vadd.xlane.f32.xlu0 %v1439
        %v1451 = vpop.xlane.xlu0 %1450
        %1452 = vadd.xlane.f32.xlu0 %v1440
        %v1453 = vpop.xlane.xlu0 %1452
        %1454 = vadd.xlane.f32.xlu0 %v1441
        %v1455 = vpop.xlane.xlu0 %1454
        %1456 = vadd.xlane.f32.xlu0 %v1442
        %v1457 = vpop.xlane.xlu0 %1456
        %1458 = vadd.xlane.f32.xlu0 %v1443
        %v1459 = vpop.xlane.xlu0 %1458
        %v1468 = vlaneseq
        %v1469 = vshrl.u32 %v1468, 7
        %v1470 = vsub.s32 %v801, %v1469
        %v1471 = vrot.slane %v1445, %v1470
        %v1472 = vlaneseq
        %v1473 = vshrl.u32 %v1472, 7
        %v1474 = vsub.s32 %v801, %v1473
        %v1475 = vrot.slane %v1447, %v1474
        %v1476 = vlaneseq
        %v1477 = vshrl.u32 %v1476, 7
        %v1478 = vsub.s32 %v801, %v1477
        %v1479 = vrot.slane %v1449, %v1478
        %v1480 = vlaneseq
        %v1481 = vshrl.u32 %v1480, 7
        %v1482 = vsub.s32 %v801, %v1481
        %v1483 = vrot.slane %v1451, %v1482
        %v1484 = vlaneseq
        %v1485 = vshrl.u32 %v1484, 7
        %v1486 = vsub.s32 %v801, %v1485
        %v1487 = vrot.slane %v1453, %v1486
        %v1488 = vlaneseq
        %v1489 = vshrl.u32 %v1488, 7
        %v1490 = vsub.s32 %v801, %v1489
        %v1491 = vrot.slane %v1455, %v1490
        %v1492 = vlaneseq
        %v1493 = vshrl.u32 %v1492, 7
        %v1494 = vsub.s32 %v801, %v1493
        %v1495 = vrot.slane %v1457, %v1494
        %v1496 = vlaneseq
        %v1497 = vshrl.u32 %v1496, 7
        %v1498 = vsub.s32 %v801, %v1497
        %v1499 = vrot.slane %v1459, %v1498
        %v1500 = vsel %vm1417, %v1475, %v1471
        %v1501 = vsel %vm1419, %v1479, %v1500
        %v1502 = vsel %vm1421, %v1483, %v1501
        %v1503 = vsel %vm1423, %v1487, %v1502
        %v1504 = vsel %vm1425, %v1491, %v1503
        %v1505 = vsel %vm1427, %v1495, %v1504
        %v1506 = vsel %vm1429, %v1499, %v1505
        %v1508 = vsel %vm1432, %v1506, 0.0
        %1509 = vadd.xlane.f32.xlu0 %v1508
        %v1510 = vpop.xlane.xlu0 %1509
        %v1512 = vlaneseq
        %v1513 = vshrl.u32 %v1512, 7
        %v1514 = vsub.s32 %v801, %v1513
        %v1515 = vrot.slane %v1435, %v1514
        %vm1517 = vcmask 57344
        %1518 = vst.msk [vmem:[%s643] sm:$0x1] %vm1517, %v1515
        %v1520 = vlaneseq
        %v1521 = vshrl.u32 %v1520, 7
        %v1522 = vsub.s32 %v801, %v1521
        %v1523 = vrot.slane %v1510, %v1522
        %1525 = vst.msk [vmem:[%s643 + $0x1] sm:$0x1] %vm1517, %v1523
        %s1526 = sand.u32 %s242, 1
        %s1527 = sand.u32 %s242, 1
        %s1528 = smul.addr %s1527, 64
        %s1529 = scalar_lea.vmem [#allocation11], %s1528
        %p1530 = scmp.lt.s32.totalorder %s25, 1
        %s1531 = scalar_select %p1530, %s25, 1
        %p1532 = scmp.lt.s32.totalorder %s26, 1
        %s1533 = scalar_select %p1532, %s26, 1
        %s1534 = smul.addr %s1531, 2
        %s1535 = sadd.s32 %s1533, %s1534
        %s1536 = smul.addr %s1535, 2
        %s1537 = scalar_lea.vmem %s7, %s1536
        // Predicated region
        $region187: #{dilated_parallel_conv_block.2} parent=145 // pred_check
          %p1538 = pneg %p252
        $region188: #{dilated_parallel_conv_block.2} parent=145 // pred_check_branch
          %1540 = sbr.rel (%p1538) target = $region190
        $region189: #{dilated_parallel_conv_block.2} parent=145 // pred_region
          %s1541 = smul.addr %s25, 16
          %s1542 = sadd.s32 %s26, %s1541
          %s1543 = smul.addr %s1542, 8
          %s1544 = scalar_lea.vmem %s6, %s1543
          // Predicated region
          $region191: #{dilated_parallel_conv_block.2} parent=189 // pred_check
            _
          $region192: #{dilated_parallel_conv_block.2} parent=189 // pred_check_branch
            %1546 = sbr.rel (0) target = $region194
          $region193: #{dilated_parallel_conv_block.2} parent=189 // pred_region
            // Predicated region
            $region195: #{dilated_parallel_conv_block.2} parent=193 // pred_check
              _
            $region196: #{dilated_parallel_conv_block.2} parent=193 // pred_check_branch
              %1548 = sbr.rel (0) target = $region198
            $region197: #{dilated_parallel_conv_block.2} parent=193 // pred_region
              // Predicated region
              $region210: #{dilated_parallel_conv_block.2} parent=197 // pred_check
                _
              $region211: #{dilated_parallel_conv_block.2} parent=197 // pred_check_branch
                %1578 = sbr.rel (0) target = $region213
              $region212: #{dilated_parallel_conv_block.2} parent=197 // pred_region
                loop: start=0, step=1, limit=1
                $region214: #{dilated_parallel_conv_block.2} parent=212 // loop_pre_header
                  _
                $region215: #{dilated_parallel_conv_block.2} parent=212 // loop_header
                  %s1580 = sphi 0, %s1584
                  %p1581 = scmp.ge.s32.totalorder %s1580, 1
                  %s1585 = sphi %s1529, %s1529
                  %s1586 = sphi %s1544, %s1544
                $region216: #{dilated_parallel_conv_block.2} parent=212 // loop_header_branch
                  %1583 = sbr.rel (%p1581) target = $region220
                $region217: #{dilated_parallel_conv_block.2} parent=212 // loop_body
                  %v1587 = vld [vmem:[%s1585] sm:$0xff]
                  %1588 = vst [vmem:[%s1586] sm:$0xff] %v1587
                  %v1589 = vld [vmem:[%s1585 + $0x8] sm:$0xff]
                  %1590 = vst [vmem:[%s1586 + $0x10] sm:$0xff] %v1589
                  %v1591 = vld [vmem:[%s1585 + $0x10] sm:$0xff]
                  %1592 = vst [vmem:[%s1586 + $0x20] sm:$0xff] %v1591
                  %v1593 = vld [vmem:[%s1585 + $0x18] sm:$0xff]
                  %1594 = vst [vmem:[%s1586 + $0x30] sm:$0xff] %v1593
                  %v1595 = vld [vmem:[%s1585 + $0x20] sm:$0xff]
                  %1596 = vst [vmem:[%s1586 + $0x40] sm:$0xff] %v1595
                  %v1597 = vld [vmem:[%s1585 + $0x28] sm:$0xff]
                  %1598 = vst [vmem:[%s1586 + $0x50] sm:$0xff] %v1597
                  %v1599 = vld [vmem:[%s1585 + $0x30] sm:$0xff]
                  %1600 = vst [vmem:[%s1586 + $0x60] sm:$0xff] %v1599
                  %v1601 = vld [vmem:[%s1585 + $0x38] sm:$0xff]
                  %1602 = vst [vmem:[%s1586 + $0x70] sm:$0xff] %v1601
                $region218: #{dilated_parallel_conv_block.2} parent=212 // loop_footer
                  %s1584 = sadd.s32 1, %s1580
                $region219: #{dilated_parallel_conv_block.2} parent=212 // loop_footer_branch
                  %1579 = sbr.rel target = $region215
                $region220: #{dilated_parallel_conv_block.2} parent=212 // loop_exit
                  _
              $region213: #{dilated_parallel_conv_block.2} parent=197 // pred_fallthru
                _
              // Predicated region
              $region221: #{dilated_parallel_conv_block.2} parent=197 // pred_check
                _
              $region222: #{dilated_parallel_conv_block.2} parent=197 // pred_check_branch
                %1604 = sbr.rel target = $region224
              $region223: #{dilated_parallel_conv_block.2} parent=197 // pred_region
                _
              $region224: #{dilated_parallel_conv_block.2} parent=197 // pred_fallthru
                _
            $region198: #{dilated_parallel_conv_block.2} parent=193 // pred_fallthru
              _
            // Predicated region
            $region199: #{dilated_parallel_conv_block.2} parent=193 // pred_check
              _
            $region200: #{dilated_parallel_conv_block.2} parent=193 // pred_check_branch
              %1550 = sbr.rel target = $region202
            $region201: #{dilated_parallel_conv_block.2} parent=193 // pred_region
              %s1552 = ssub.s32 256, 1
              loop: start=0, step=1, limit=1
              $region203: #{dilated_parallel_conv_block.2} parent=201 // loop_pre_header
                _
              $region204: #{dilated_parallel_conv_block.2} parent=201 // loop_header
                %s1554 = sphi 0, %s1558
                %p1555 = scmp.ge.s32.totalorder %s1554, 1
                %s1559 = sphi %s1529, %s1529
                %s1560 = sphi %s1544, %s1544
              $region205: #{dilated_parallel_conv_block.2} parent=201 // loop_header_branch
                %1557 = sbr.rel (%p1555) target = $region209
              $region206: #{dilated_parallel_conv_block.2} parent=201 // loop_body
                %v1561 = vld [vmem:[%s1559] sm:%s1552]
                %1562 = vst [vmem:[%s1560] sm:%s1552] %v1561
                %v1563 = vld [vmem:[%s1559 + $0x8] sm:%s1552]
                %1564 = vst [vmem:[%s1560 + $0x10] sm:%s1552] %v1563
                %v1565 = vld [vmem:[%s1559 + $0x10] sm:%s1552]
                %1566 = vst [vmem:[%s1560 + $0x20] sm:%s1552] %v1565
                %v1567 = vld [vmem:[%s1559 + $0x18] sm:%s1552]
                %1568 = vst [vmem:[%s1560 + $0x30] sm:%s1552] %v1567
                %v1569 = vld [vmem:[%s1559 + $0x20] sm:%s1552]
                %1570 = vst [vmem:[%s1560 + $0x40] sm:%s1552] %v1569
                %v1571 = vld [vmem:[%s1559 + $0x28] sm:%s1552]
                %1572 = vst [vmem:[%s1560 + $0x50] sm:%s1552] %v1571
                %v1573 = vld [vmem:[%s1559 + $0x30] sm:%s1552]
                %1574 = vst [vmem:[%s1560 + $0x60] sm:%s1552] %v1573
                %v1575 = vld [vmem:[%s1559 + $0x38] sm:%s1552]
                %1576 = vst [vmem:[%s1560 + $0x70] sm:%s1552] %v1575
              $region207: #{dilated_parallel_conv_block.2} parent=201 // loop_footer
                %s1558 = sadd.s32 1, %s1554
              $region208: #{dilated_parallel_conv_block.2} parent=201 // loop_footer_branch
                %1553 = sbr.rel target = $region204
              $region209: #{dilated_parallel_conv_block.2} parent=201 // loop_exit
                _
            $region202: #{dilated_parallel_conv_block.2} parent=193 // pred_fallthru
              _
          $region194: #{dilated_parallel_conv_block.2} parent=189 // pred_fallthru
            _
          %1605 = vnop
        $region190: #{dilated_parallel_conv_block.2} parent=145 // pred_fallthru
          _
        // Predicated region
        $region225: #{dilated_parallel_conv_block.2} parent=145 // pred_check
          %p1606 = pneg %p280
        $region226: #{dilated_parallel_conv_block.2} parent=145 // pred_check_branch
          %1608 = sbr.rel (%p1606) target = $region228
        $region227: #{dilated_parallel_conv_block.2} parent=145 // pred_region
          _
        $region228: #{dilated_parallel_conv_block.2} parent=145 // pred_fallthru
          _
      $region146: #{dilated_parallel_conv_block.2} parent=5 // pred_fallthru
        _
      %p1609 = scmp.le.s32.totalorder 2, %s16
      // Predicated region
      $region229: #{dilated_parallel_conv_block.2} parent=5 // pred_check
        %p1610 = pneg %p1609
      $region230: #{dilated_parallel_conv_block.2} parent=5 // pred_check_branch
        %1612 = sbr.rel (%p1610) target = $region232
      $region231: #{dilated_parallel_conv_block.2} parent=5 // pred_region
        %s1613 = ssub.s32 %s16, 2
        // Predicated region
        $region233: #{dilated_parallel_conv_block.2} parent=231 // pred_check
          %p1614 = pneg %p258
        $region234: #{dilated_parallel_conv_block.2} parent=231 // pred_check_branch
          %1616 = sbr.rel (%p1614) target = $region236
        $region235: #{dilated_parallel_conv_block.2} parent=231 // pred_region
          %s1617 = sand.u32 %s243, 1
          %s1618 = sand.u32 %s243, 1
          %s1619 = smul.addr %s1618, 64
          %s1620 = scalar_lea.vmem [#allocation11], %s1619
        $region236: #{dilated_parallel_conv_block.2} parent=231 // pred_fallthru
          _
        // Predicated region
        $region237: #{dilated_parallel_conv_block.2} parent=231 // pred_check
          %p1621 = pneg %p286
        $region238: #{dilated_parallel_conv_block.2} parent=231 // pred_check_branch
          %1623 = sbr.rel (%p1621) target = $region240
        $region239: #{dilated_parallel_conv_block.2} parent=231 // pred_region
          %p1624 = scmp.lt.s32.totalorder %s27, 1
          %s1625 = scalar_select %p1624, %s27, 1
          %p1626 = scmp.lt.s32.totalorder %s28, 1
          %s1627 = scalar_select %p1626, %s28, 1
          %s1628 = smul.addr %s1625, 2
          %s1629 = sadd.s32 %s1627, %s1628
          %s1630 = smul.addr %s1629, 2
          %s1631 = scalar_lea.vmem %s7, %s1630
        $region240: #{dilated_parallel_conv_block.2} parent=231 // pred_fallthru
          _
      $region232: #{dilated_parallel_conv_block.2} parent=5 // pred_fallthru
        _
    $region6: #{dilated_parallel_conv_block.2} parent=1 // loop_footer
      %s20 = sadd.s32 1, %s16
    $region7: #{dilated_parallel_conv_block.2} parent=1 // loop_footer_branch
      %15 = sbr.rel target = $region3
    $region8: #{dilated_parallel_conv_block.2} parent=1 // loop_exit
      _
    %1632 = vsyncpa [#allocation7], 1
    %s1633 = scalar_lea.sflag [#allocation7], 1
    %1634 = vsyncpa %s1633, 1
    %1635 = vsyncpa [#allocation9], 1

</llo_original>
